<compile_context>
chip_gen: v6e
topology: v6e:2x2x1
jax: 0.10.0
libtpu: 0.0.40
codegen_flags: <defaults>
</compile_context>

<pallas_src>
import functools

import jax
import jax.numpy as jnp
from jax import lax
from jax.experimental import pallas as pl
from jax.experimental.pallas import tpu as pltpu


# ----------------------------------------------------------------------------
# Fused kernel: per grid step (batch tile, time chunk):
#   pre_x = x_chunk @ Wx + b           (one MXU matmul, into VMEM scratch)
#   for t in chunk:  pre = pre_x[t] + h @ Wh ; gates ; c,h update ; store h_seq[t]
# ----------------------------------------------------------------------------
def lstm_fused_kernel(x_ref, wx_ref, wh_ref, b_ref, h0_ref, c0_ref,
                      hseq_ref, hlast_ref, clast_ref,
                      prex_sc, h_sc, c_sc,
                      *, seq_len, unroll, mask_tail):
    chunk = pl.program_id(1)            # trailing ("arbitrary") time axis
    n_chunks = pl.num_programs(1)
    tc = hseq_ref.shape[0]
    bt = h_sc.shape[0]
    hp = h_sc.shape[1]

    # Initialize the recurrent state from (h0, c0) on the first time chunk of
    # each batch tile only.
    @pl.when(chunk == 0)
    def _init():
        h_sc[...] = h0_ref[0]
        c_sc[...] = c0_ref[0]

    # ---- fused input projection for the whole chunk (no HBM round trip) ----
    wx = wx_ref[...]                                   # (I, 4*Hp)
    x2 = x_ref[...].reshape(tc * bt, x_ref.shape[-1]).astype(wx.dtype)
    pre_x = jnp.dot(x2, wx, preferred_element_type=jnp.float32) + b_ref[...]
    prex_sc[...] = pre_x.reshape(tc, bt, 4 * hp)

    wh = wh_ref[...]                                   # (Hp, 4*Hp), hoisted

    def step(i, carry):
        h, c = carry
        # Single fused MXU matmul for all 4 gates.
        pre = prex_sc[i] + jnp.dot(h.astype(wh.dtype), wh,
                                   preferred_element_type=jnp.float32)
        f_t = jax.nn.sigmoid(pre[:, 0 * hp:1 * hp])    # forget gate
        i_t = jax.nn.sigmoid(pre[:, 1 * hp:2 * hp])    # input gate
        g_t = jnp.tanh(pre[:, 2 * hp:3 * hp])          # candidate cell
        o_t = jax.nn.sigmoid(pre[:, 3 * hp:4 * hp])    # output gate
        c_new = c * f_t + i_t * g_t
        h_new = o_t * jnp.tanh(c_new)
        if mask_tail:
            # Padded tail timesteps must not advance the recurrent state.
            valid = (chunk * tc + i) < seq_len
            h_new = jnp.where(valid, h_new, h)
            c_new = jnp.where(valid, c_new, c)
        hseq_ref[i] = h_new                            # dense (bt, Hp) store
        return h_new, c_new

    h_fin, c_fin = lax.fori_loop(0, tc, step, (h_sc[...], c_sc[...]),
                                 unroll=unroll)
    h_sc[...] = h_fin
    c_sc[...] = c_fin

    # Final (h, c): written only on the last time chunk of this batch tile.
    @pl.when(chunk == n_chunks - 1)
    def _finalize():
        hlast_ref[0] = h_fin
        clast_ref[0] = c_fin


# ----------------------------------------------------------------------------
# Wrapper
# ----------------------------------------------------------------------------
def _round_up(n, m):
    return ((n + m - 1) // m) * m


def _cdiv(a, b):
    return (a + b - 1) // b


def lstm_forward(x, wx, wh, b, h0=None, c0=None, *, t_chunk=32,
                 weight_dtype=jnp.float32):
    """x: (seq_len, B, I) f32; wx: (I, 4H); wh: (H, 4H); b: (1, 4H).

    Gate order in the fused weights: forget / input / cell(tanh) / output.
    Returns (h_seq, (h, c)) exactly like the PyTorch module.
    """
    seq_len, B, I = x.shape
    H = wh.shape[0]
    f32 = jnp.float32

    Hp = max(128, _round_up(H, 128))        # lane-dense hidden dim
    Bp = _round_up(B, 8)                    # sublane-dense batch dim
    if Bp > 256:                            # batch tiling for MXU fill / megacore
        bt = 256
        Bp = _round_up(Bp, bt)
    else:
        bt = Bp
    n_btiles = Bp // bt

    # Time chunking: no divisibility requirement on seq_len. Pick tc so the
    # padded (masked) tail is as small as possible.
    t_chunk = max(1, t_chunk)
    n_chunks = max(1, _cdiv(seq_len, t_chunk))
    tc = _cdiv(seq_len, n_chunks)
    n_chunks = _cdiv(seq_len, tc)
    seq_pad = tc * n_chunks
    mask_tail = seq_pad != seq_len
    unroll = max(1, min(8, tc))             # capped unroll (vreg pressure)

    # --- pack weights into the lane-aligned fused layout
    #     (gate g -> lanes [g*Hp, g*Hp+H)); padded rows/lanes are zero).
    wx_p = jnp.zeros((I, 4 * Hp), f32)
    wh_p = jnp.zeros((Hp, 4 * Hp), f32)
    b_p = jnp.zeros((1, 4 * Hp), f32)
    for g in range(4):
        wx_p = wx_p.at[:, g * Hp:g * Hp + H].set(wx[:, g * H:(g + 1) * H])
        wh_p = wh_p.at[:H, g * Hp:g * Hp + H].set(wh[:, g * H:(g + 1) * H])
        b_p = b_p.at[:, g * Hp:g * Hp + H].set(b[:, g * H:(g + 1) * H])
    wx_p = wx_p.astype(weight_dtype)        # bf16 weights -> bf16 MXU, f32 acc
    wh_p = wh_p.astype(weight_dtype)

    # --- pad activations / initial state with zeros (padded lanes/rows inert).
    x_p = jnp.zeros((seq_pad, Bp, I), f32).at[:seq_len, :B, :].set(x)
    h0_p = jnp.zeros((1, Bp, Hp), f32)
    c0_p = jnp.zeros((1, Bp, Hp), f32)
    if h0 is not None:
        h0_p = h0_p.at[:, :B, :H].set(h0)
    if c0 is not None:
        c0_p = c0_p.at[:, :B, :H].set(c0)

    # --- explicit VMEM budget (weights assumed worst-case double buffered).
    wbytes = jnp.dtype(weight_dtype).itemsize
    est = 2 * (I * 4 * Hp * wbytes + Hp * 4 * Hp * wbytes + 4 * Hp * 4)
    est += 2 * tc * bt * I * 4                          # x blocks
    est += 2 * 2 * bt * Hp * 4                          # h0 / c0 blocks
    est += 2 * tc * bt * Hp * 4 + 2 * 2 * bt * Hp * 4   # outputs
    est += tc * bt * 4 * Hp * 4 + 2 * bt * Hp * 4       # scratch
    vmem_limit = int(min(max(est + (8 << 20), 32 << 20), 100 << 20))

    kernel = functools.partial(lstm_fused_kernel, seq_len=seq_len,
                               unroll=unroll, mask_tail=mask_tail)

    def _run(single_buffer_weights):
        def const_spec(shape, index_map):
            # Constant-index operands: single-buffer them to halve their VMEM.
            if single_buffer_weights:
                try:
                    return pl.BlockSpec(shape, index_map,
                                        pipeline_mode=pl.Buffered(1))
                except (TypeError, AttributeError):
                    pass
            return pl.BlockSpec(shape, index_map)

        in_specs = [
            pl.BlockSpec((tc, bt, I), lambda bi, ti: (ti, bi, 0)),    # x chunk
            const_spec((I, 4 * Hp), lambda bi, ti: (0, 0)),           # Wx
            const_spec((Hp, 4 * Hp), lambda bi, ti: (0, 0)),          # Wh
            const_spec((1, 4 * Hp), lambda bi, ti: (0, 0)),           # b
            pl.BlockSpec((1, bt, Hp), lambda bi, ti: (0, bi, 0)),     # h0
            pl.BlockSpec((1, bt, Hp), lambda bi, ti: (0, bi, 0)),     # c0
        ]
        out_specs = [
            pl.BlockSpec((tc, bt, Hp), lambda bi, ti: (ti, bi, 0)),   # h_seq
            pl.BlockSpec((1, bt, Hp), lambda bi, ti: (0, bi, 0)),     # final h
            pl.BlockSpec((1, bt, Hp), lambda bi, ti: (0, bi, 0)),     # final c
        ]
        out_shapes = (
            jax.ShapeDtypeStruct((seq_pad, Bp, Hp), f32),
            jax.ShapeDtypeStruct((1, Bp, Hp), f32),
            jax.ShapeDtypeStruct((1, Bp, Hp), f32),
        )
        scratch_shapes = [
            pltpu.VMEM((tc, bt, 4 * Hp), f32),   # pre-activations for the chunk
            pltpu.VMEM((bt, Hp), f32),           # h carry
            pltpu.VMEM((bt, Hp), f32),           # c carry
        ]
        call = pl.pallas_call(
            kernel,
            out_shape=out_shapes,
            grid_spec=pltpu.PrefetchScalarGridSpec(
                num_scalar_prefetch=0,
                grid=(n_btiles, n_chunks),
                in_specs=in_specs,
                out_specs=out_specs,
                scratch_shapes=scratch_shapes,
            ),
            compiler_params=pltpu.CompilerParams(
                # batch tiles independent -> parallel; time recurrence -> arbitrary
                dimension_semantics=("parallel", "arbitrary"),
                vmem_limit_bytes=vmem_limit,
            ),
        )
        return call(x_p, wx_p, wh_p, b_p, h0_p, c0_p)

    try:
        h_seq_p, h_last_p, c_last_p = _run(True)
    except Exception:
        # Fallback if this JAX build rejects single-buffered pipeline_mode.
        h_seq_p, h_last_p, c_last_p = _run(False)

    # Un-pad back to the module's shapes.
    h_seq = h_seq_p[:seq_len, :B, :H]
    h_last = h_last_p[:, :B, :H]
    c_last = c_last_p[:, :B, :H]
    return h_seq, (h_last, c_last)


# ----------------------------------------------------------------------------
# Parameter init (mimics nn.Linear U(-1/sqrt(fan_in), 1/sqrt(fan_in))) and a
# pure-JAX reference matching the PyTorch loop semantics.
# ----------------------------------------------------------------------------
def init_params(key, input_size, hidden_size):
    keys = jax.random.split(key, 16)
    kx = 1.0 / jnp.sqrt(jnp.float32(input_size))
    kh = 1.0 / jnp.sqrt(jnp.float32(hidden_size))
    wx_cols, wh_cols, b_cols = [], [], []
    # gate order: forget, input, cell(tanh), output
    for g in range(4):
        w1 = jax.random.uniform(keys[4 * g + 0], (hidden_size, input_size),
                                jnp.float32, -kx, kx)
        b1 = jax.random.uniform(keys[4 * g + 1], (hidden_size,),
                                jnp.float32, -kx, kx)
        w2 = jax.random.uniform(keys[4 * g + 2], (hidden_size, hidden_size),
                                jnp.float32, -kh, kh)
        b2 = jax.random.uniform(keys[4 * g + 3], (hidden_size,),
                                jnp.float32, -kh, kh)
        wx_cols.append(w1.T)            # (I, H)
        wh_cols.append(w2.T)            # (H, H)
        b_cols.append(b1 + b2)          # (H,)
    wx = jnp.concatenate(wx_cols, axis=1)          # (I, 4H)
    wh = jnp.concatenate(wh_cols, axis=1)          # (H, 4H)
    b = jnp.concatenate(b_cols)[None, :]           # (1, 4H)
    return wx, wh, b


def lstm_reference(x, wx, wh, b):
    seq_len, B, _ = x.shape
    H = wh.shape[0]
    h = jnp.zeros((B, H), jnp.float32)
    c = jnp.zeros((B, H), jnp.float32)
    hs = []
    for t in range(seq_len):
        pre = x[t] @ wx + h @ wh + b
        f_t = jax.nn.sigmoid(pre[:, 0 * H:1 * H])
        i_t = jax.nn.sigmoid(pre[:, 1 * H:2 * H])
        g_t = jnp.tanh(pre[:, 2 * H:3 * H])
        o_t = jax.nn.sigmoid(pre[:, 3 * H:4 * H])
        c = c * f_t + i_t * g_t
        h = o_t * jnp.tanh(c)
        hs.append(h)
    return jnp.stack(hs), h[None], c[None]


def _check(seq_len, batch, input_size, hidden_size, t_chunk, weight_dtype,
           atol, rtol, seed=0):
    key = jax.random.PRNGKey(seed)
    kx_key, kp_key = jax.random.split(key)
    x = jax.random.normal(kx_key, (seq_len, batch, input_size), jnp.float32)
    wx, wh, b = init_params(kp_key, input_size, hidden_size)

    h_seq, (h_last, c_last) = lstm_forward(x, wx, wh, b, t_chunk=t_chunk,
                                           weight_dtype=weight_dtype)
    jax.block_until_ready((h_seq, h_last, c_last))

    h_seq_ref, h_ref, c_ref = lstm_reference(x, wx, wh, b)
    assert h_seq.shape == (seq_len, batch, hidden_size)
    assert h_last.shape == (1, batch, hidden_size)
    assert c_last.shape == (1, batch, hidden_size)
    assert jnp.allclose(h_seq, h_seq_ref, atol=atol, rtol=rtol)
    assert jnp.allclose(h_last, h_ref, atol=atol, rtol=rtol)
    assert jnp.allclose(c_last, c_ref, atol=atol, rtol=rtol)


if __name__ == "__main__":
    # 1) Base config (matches the module's small shapes), f32, single time chunk.
    _check(seq_len=8, batch=2, input_size=4, hidden_size=20,
           t_chunk=32, weight_dtype=jnp.float32, atol=1e-5, rtol=1e-5)

    # 2) Ragged sequence: multi-chunk recurrence + masked tail timesteps.
    _check(seq_len=13, batch=3, input_size=4, hidden_size=20,
           t_chunk=5, weight_dtype=jnp.float32, atol=1e-5, rtol=1e-5)

    # 3) bf16 weights on the MXU (f32 accumulation, f32 h/c carry).
    _check(seq_len=8, batch=2, input_size=4, hidden_size=20,
           t_chunk=32, weight_dtype=jnp.bfloat16, atol=5e-2, rtol=5e-2)

    print("KERNEL_OK")
</pallas_src>

<mosaic_0001>
module attributes {stable_mosaic.version = 11 : i64} {
  func.func @lstm_fused_kernel(%arg0: i32, %arg1: i32, %arg2: memref<8x8x4xf32, #tpu.memory_space<vmem>>, %arg3: memref<4x512xf32, #tpu.memory_space<vmem>>, %arg4: memref<128x512xf32, #tpu.memory_space<vmem>>, %arg5: memref<1x512xf32, #tpu.memory_space<vmem>>, %arg6: memref<1x8x128xf32, #tpu.memory_space<vmem>>, %arg7: memref<1x8x128xf32, #tpu.memory_space<vmem>>, %arg8: memref<8x8x128xf32, #tpu.memory_space<vmem>>, %arg9: memref<1x8x128xf32, #tpu.memory_space<vmem>>, %arg10: memref<1x8x128xf32, #tpu.memory_space<vmem>>, %arg11: memref<8x8x512xf32, #tpu.memory_space<vmem>>, %arg12: memref<8x128xf32, #tpu.memory_space<vmem>>, %arg13: memref<8x128xf32, #tpu.memory_space<vmem>>) attributes {dimension_semantics = [#tpu.dimension_semantics<parallel>, #tpu.dimension_semantics<arbitrary>], iteration_bounds = array<i64: 1, 1>, scalar_prefetch = 0 : i64, scratch_operands = 3 : i64, tpu.core_type = #tpu.core_type<tc>, window_params = [{transform_indices = @transform_0, window_bounds = array<i64: 8, 8, 4>}, {pipeline_mode = #tpu.pipeline_mode<synchronous>, transform_indices = @transform_1, window_bounds = array<i64: 4, 512>}, {pipeline_mode = #tpu.pipeline_mode<synchronous>, transform_indices = @transform_2, window_bounds = array<i64: 128, 512>}, {pipeline_mode = #tpu.pipeline_mode<synchronous>, transform_indices = @transform_3, window_bounds = array<i64: 1, 512>}, {transform_indices = @transform_4, window_bounds = array<i64: 1, 8, 128>}, {transform_indices = @transform_5, window_bounds = array<i64: 1, 8, 128>}, {transform_indices = @transform_6, window_bounds = array<i64: 8, 8, 128>}, {transform_indices = @transform_7, window_bounds = array<i64: 1, 8, 128>}, {transform_indices = @transform_8, window_bounds = array<i64: 1, 8, 128>}]} {
    %c0_i32 = arith.constant 0 : i32
    %0 = arith.cmpi eq, %arg1, %c0_i32 : i32
    %1 = arith.extui %0 : i1 to i32
    %c0_i32_0 = arith.constant 0 : i32
    %2 = arith.cmpi ne, %1, %c0_i32_0 : i32
    scf.if %2 {
      %c0_87 = arith.constant 0 : index
      %c0_88 = arith.constant 0 : index
      %c0_89 = arith.constant 0 : index
      %292 = vector.load %arg6[%c0_87, %c0_88, %c0_89] : memref<1x8x128xf32, #tpu.memory_space<vmem>>, vector<1x8x128xf32>
      %293 = vector.shape_cast %292 : vector<1x8x128xf32> to vector<8x128xf32>
      %c0_90 = arith.constant 0 : index
      %c0_91 = arith.constant 0 : index
      %294 = vector.load %arg12[%c0_90, %c0_91] : memref<8x128xf32, #tpu.memory_space<vmem>>, vector<8x128xf32>
      tpu.vector_store %arg12[%c0_90, %c0_91], %293 {strides = array<i32>} : memref<8x128xf32, #tpu.memory_space<vmem>>, vector<8x128xf32>,
      %c0_92 = arith.constant 0 : index
      %c0_93 = arith.constant 0 : index
      %c0_94 = arith.constant 0 : index
      %295 = vector.load %arg7[%c0_92, %c0_93, %c0_94] : memref<1x8x128xf32, #tpu.memory_space<vmem>>, vector<1x8x128xf32>
      %296 = vector.shape_cast %295 : vector<1x8x128xf32> to vector<8x128xf32>
      %c0_95 = arith.constant 0 : index
      %c0_96 = arith.constant 0 : index
      %297 = vector.load %arg13[%c0_95, %c0_96] : memref<8x128xf32, #tpu.memory_space<vmem>>, vector<8x128xf32>
      tpu.vector_store %arg13[%c0_95, %c0_96], %296 {strides = array<i32>} : memref<8x128xf32, #tpu.memory_space<vmem>>, vector<8x128xf32>,
    } else {
    }
    %c0 = arith.constant 0 : index
    %c0_1 = arith.constant 0 : index
    %3 = vector.load %arg3[%c0, %c0_1] : memref<4x512xf32, #tpu.memory_space<vmem>>, vector<4x512xf32>
    %c0_2 = arith.constant 0 : index
    %c0_3 = arith.constant 0 : index
    %c0_4 = arith.constant 0 : index
    %4 = vector.load %arg2[%c0_2, %c0_3, %c0_4] : memref<8x8x4xf32, #tpu.memory_space<vmem>>, vector<8x8x4xf32>
    %5 = vector.shape_cast %4 : vector<8x8x4xf32> to vector<64x4xf32>
    %cst = arith.constant dense<0.000000e+00> : vector<64x512xf32>
    %6 = tpu.matmul %5, %3, %cst {dimension_numbers = #tpu.dot_dimension_numbers<[1], [0], [0], [1], [0, 0, 1, 1], [], []>} : vector<64x4xf32>, vector<4x512xf32>, vector<64x512xf32> -> vector<64x512xf32>
    %c0_5 = arith.constant 0 : index
    %c0_6 = arith.constant 0 : index
    %7 = vector.load %arg5[%c0_5, %c0_6] : memref<1x512xf32, #tpu.memory_space<vmem>>, vector<1x512xf32>
    %8 = vector.broadcast %7 : vector<1x512xf32> to vector<64x512xf32>
    %9 = arith.addf %6, %8 : vector<64x512xf32>
    %10 = vector.shape_cast %9 : vector<64x512xf32> to vector<8x8x512xf32>
    %c0_7 = arith.constant 0 : index
    %c0_8 = arith.constant 0 : index
    %c0_9 = arith.constant 0 : index
    %11 = vector.load %arg11[%c0_7, %c0_8, %c0_9] : memref<8x8x512xf32, #tpu.memory_space<vmem>>, vector<8x8x512xf32>
    tpu.vector_store %arg11[%c0_7, %c0_8, %c0_9], %10 {strides = array<i32>} : memref<8x8x512xf32, #tpu.memory_space<vmem>>, vector<8x8x512xf32>,
    %c0_10 = arith.constant 0 : index
    %c0_11 = arith.constant 0 : index
    %12 = vector.load %arg4[%c0_10, %c0_11] : memref<128x512xf32, #tpu.memory_space<vmem>>, vector<128x512xf32>
    %c0_12 = arith.constant 0 : index
    %c0_13 = arith.constant 0 : index
    %13 = vector.load %arg12[%c0_12, %c0_13] : memref<8x128xf32, #tpu.memory_space<vmem>>, vector<8x128xf32>
    %c0_14 = arith.constant 0 : index
    %c0_15 = arith.constant 0 : index
    %14 = vector.load %arg13[%c0_14, %c0_15] : memref<8x128xf32, #tpu.memory_space<vmem>>, vector<8x128xf32>
    %c0_i32_16 = arith.constant 0 : i32
    %15 = arith.index_cast %c0_i32_16 : i32 to index
    %c0_17 = arith.constant 0 : index
    %c0_18 = arith.constant 0 : index
    %16 = vector.load %arg11[%15, %c0_17, %c0_18] : memref<8x8x512xf32, #tpu.memory_space<vmem>>, vector<1x8x512xf32>
    %17 = vector.shape_cast %16 : vector<1x8x512xf32> to vector<8x512xf32>
    %cst_19 = arith.constant dense<0.000000e+00> : vector<8x512xf32>
    %18 = tpu.matmul %13, %12, %cst_19 {dimension_numbers = #tpu.dot_dimension_numbers<[1], [0], [0], [1], [0, 0, 1, 1], [], []>} : vector<8x128xf32>, vector<128x512xf32>, vector<8x512xf32> -> vector<8x512xf32>
    %19 = arith.addf %17, %18 : vector<8x512xf32>
    %20 = vector.extract_strided_slice %19 {offsets = [0, 0], sizes = [8, 128], strides = [1, 1]} : vector<8x512xf32> to vector<8x128xf32>
    %21 = arith.negf %20 : vector<8x128xf32>
    %22 = math.exp %21 : vector<8x128xf32>
    %cst_20 = arith.constant 1.000000e+00 : f32
    %23 = vector.broadcast %cst_20 : f32 to vector<8x128xf32>
    %24 = arith.addf %23, %22 : vector<8x128xf32>
    %25 = arith.divf %23, %24 : vector<8x128xf32>
    %26 = vector.extract_strided_slice %19 {offsets = [0, 128], sizes = [8, 128], strides = [1, 1]} : vector<8x512xf32> to vector<8x128xf32>
    %27 = arith.negf %26 : vector<8x128xf32>
    %28 = math.exp %27 : vector<8x128xf32>
    %cst_21 = arith.constant 1.000000e+00 : f32
    %29 = vector.broadcast %cst_21 : f32 to vector<8x128xf32>
    %30 = arith.addf %29, %28 : vector<8x128xf32>
    %31 = arith.divf %29, %30 : vector<8x128xf32>
    %32 = vector.extract_strided_slice %19 {offsets = [0, 256], sizes = [8, 128], strides = [1, 1]} : vector<8x512xf32> to vector<8x128xf32>
    %33 = math.tanh %32 : vector<8x128xf32>
    %34 = vector.extract_strided_slice %19 {offsets = [0, 384], sizes = [8, 128], strides = [1, 1]} : vector<8x512xf32> to vector<8x128xf32>
    %35 = arith.negf %34 : vector<8x128xf32>
    %36 = math.exp %35 : vector<8x128xf32>
    %cst_22 = arith.constant 1.000000e+00 : f32
    %37 = vector.broadcast %cst_22 : f32 to vector<8x128xf32>
    %38 = arith.addf %37, %36 : vector<8x128xf32>
    %39 = arith.divf %37, %38 : vector<8x128xf32>
    %40 = arith.mulf %14, %25 : vector<8x128xf32>
    %41 = arith.mulf %31, %33 : vector<8x128xf32>
    %42 = arith.addf %40, %41 : vector<8x128xf32>
    %43 = math.tanh %42 : vector<8x128xf32>
    %44 = arith.mulf %39, %43 : vector<8x128xf32>
    %45 = arith.index_cast %c0_i32_16 : i32 to index
    %c0_23 = arith.constant 0 : index
    %c0_24 = arith.constant 0 : index
    %46 = vector.load %arg8[%45, %c0_23, %c0_24] : memref<8x8x128xf32, #tpu.memory_space<vmem>>, vector<1x8x128xf32>
    %47 = vector.shape_cast %46 : vector<1x8x128xf32> to vector<8x128xf32>
    %48 = vector.shape_cast %44 : vector<8x128xf32> to vector<1x8x128xf32>
    tpu.vector_store %arg8[%45, %c0_23, %c0_24], %48 {strides = array<i32>} : memref<8x8x128xf32, #tpu.memory_space<vmem>>, vector<1x8x128xf32>,
    %c1_i32 = arith.constant 1 : i32
    %49 = arith.index_cast %c1_i32 : i32 to index
    %c0_25 = arith.constant 0 : index
    %c0_26 = arith.constant 0 : index
    %50 = vector.load %arg11[%49, %c0_25, %c0_26] : memref<8x8x512xf32, #tpu.memory_space<vmem>>, vector<1x8x512xf32>
    %51 = vector.shape_cast %50 : vector<1x8x512xf32> to vector<8x512xf32>
    %cst_27 = arith.constant dense<0.000000e+00> : vector<8x512xf32>
    %52 = tpu.matmul %44, %12, %cst_27 {dimension_numbers = #tpu.dot_dimension_numbers<[1], [0], [0], [1], [0, 0, 1, 1], [], []>} : vector<8x128xf32>, vector<128x512xf32>, vector<8x512xf32> -> vector<8x512xf32>
    %53 = arith.addf %51, %52 : vector<8x512xf32>
    %54 = vector.extract_strided_slice %53 {offsets = [0, 0], sizes = [8, 128], strides = [1, 1]} : vector<8x512xf32> to vector<8x128xf32>
    %55 = arith.negf %54 : vector<8x128xf32>
    %56 = math.exp %55 : vector<8x128xf32>
    %cst_28 = arith.constant 1.000000e+00 : f32
    %57 = vector.broadcast %cst_28 : f32 to vector<8x128xf32>
    %58 = arith.addf %57, %56 : vector<8x128xf32>
    %59 = arith.divf %57, %58 : vector<8x128xf32>
    %60 = vector.extract_strided_slice %53 {offsets = [0, 128], sizes = [8, 128], strides = [1, 1]} : vector<8x512xf32> to vector<8x128xf32>
    %61 = arith.negf %60 : vector<8x128xf32>
    %62 = math.exp %61 : vector<8x128xf32>
    %cst_29 = arith.constant 1.000000e+00 : f32
    %63 = vector.broadcast %cst_29 : f32 to vector<8x128xf32>
    %64 = arith.addf %63, %62 : vector<8x128xf32>
    %65 = arith.divf %63, %64 : vector<8x128xf32>
    %66 = vector.extract_strided_slice %53 {offsets = [0, 256], sizes = [8, 128], strides = [1, 1]} : vector<8x512xf32> to vector<8x128xf32>
    %67 = math.tanh %66 : vector<8x128xf32>
    %68 = vector.extract_strided_slice %53 {offsets = [0, 384], sizes = [8, 128], strides = [1, 1]} : vector<8x512xf32> to vector<8x128xf32>
    %69 = arith.negf %68 : vector<8x128xf32>
    %70 = math.exp %69 : vector<8x128xf32>
    %cst_30 = arith.constant 1.000000e+00 : f32
    %71 = vector.broadcast %cst_30 : f32 to vector<8x128xf32>
    %72 = arith.addf %71, %70 : vector<8x128xf32>
    %73 = arith.divf %71, %72 : vector<8x128xf32>
    %74 = arith.mulf %42, %59 : vector<8x128xf32>
    %75 = arith.mulf %65, %67 : vector<8x128xf32>
    %76 = arith.addf %74, %75 : vector<8x128xf32>
    %77 = math.tanh %76 : vector<8x128xf32>
    %78 = arith.mulf %73, %77 : vector<8x128xf32>
    %79 = arith.index_cast %c1_i32 : i32 to index
    %c0_31 = arith.constant 0 : index
    %c0_32 = arith.constant 0 : index
    %80 = vector.load %arg8[%79, %c0_31, %c0_32] : memref<8x8x128xf32, #tpu.memory_space<vmem>>, vector<1x8x128xf32>
    %81 = vector.shape_cast %80 : vector<1x8x128xf32> to vector<8x128xf32>
    %82 = vector.shape_cast %78 : vector<8x128xf32> to vector<1x8x128xf32>
    tpu.vector_store %arg8[%79, %c0_31, %c0_32], %82 {strides = array<i32>} : memref<8x8x128xf32, #tpu.memory_space<vmem>>, vector<1x8x128xf32>,
    %c2_i32 = arith.constant 2 : i32
    %83 = arith.index_cast %c2_i32 : i32 to index
    %c0_33 = arith.constant 0 : index
    %c0_34 = arith.constant 0 : index
    %84 = vector.load %arg11[%83, %c0_33, %c0_34] : memref<8x8x512xf32, #tpu.memory_space<vmem>>, vector<1x8x512xf32>
    %85 = vector.shape_cast %84 : vector<1x8x512xf32> to vector<8x512xf32>
    %cst_35 = arith.constant dense<0.000000e+00> : vector<8x512xf32>
    %86 = tpu.matmul %78, %12, %cst_35 {dimension_numbers = #tpu.dot_dimension_numbers<[1], [0], [0], [1], [0, 0, 1, 1], [], []>} : vector<8x128xf32>, vector<128x512xf32>, vector<8x512xf32> -> vector<8x512xf32>
    %87 = arith.addf %85, %86 : vector<8x512xf32>
    %88 = vector.extract_strided_slice %87 {offsets = [0, 0], sizes = [8, 128], strides = [1, 1]} : vector<8x512xf32> to vector<8x128xf32>
    %89 = arith.negf %88 : vector<8x128xf32>
    %90 = math.exp %89 : vector<8x128xf32>
    %cst_36 = arith.constant 1.000000e+00 : f32
    %91 = vector.broadcast %cst_36 : f32 to vector<8x128xf32>
    %92 = arith.addf %91, %90 : vector<8x128xf32>
    %93 = arith.divf %91, %92 : vector<8x128xf32>
    %94 = vector.extract_strided_slice %87 {offsets = [0, 128], sizes = [8, 128], strides = [1, 1]} : vector<8x512xf32> to vector<8x128xf32>
    %95 = arith.negf %94 : vector<8x128xf32>
    %96 = math.exp %95 : vector<8x128xf32>
    %cst_37 = arith.constant 1.000000e+00 : f32
    %97 = vector.broadcast %cst_37 : f32 to vector<8x128xf32>
    %98 = arith.addf %97, %96 : vector<8x128xf32>
    %99 = arith.divf %97, %98 : vector<8x128xf32>
    %100 = vector.extract_strided_slice %87 {offsets = [0, 256], sizes = [8, 128], strides = [1, 1]} : vector<8x512xf32> to vector<8x128xf32>
    %101 = math.tanh %100 : vector<8x128xf32>
    %102 = vector.extract_strided_slice %87 {offsets = [0, 384], sizes = [8, 128], strides = [1, 1]} : vector<8x512xf32> to vector<8x128xf32>
    %103 = arith.negf %102 : vector<8x128xf32>
    %104 = math.exp %103 : vector<8x128xf32>
    %cst_38 = arith.constant 1.000000e+00 : f32
    %105 = vector.broadcast %cst_38 : f32 to vector<8x128xf32>
    %106 = arith.addf %105, %104 : vector<8x128xf32>
    %107 = arith.divf %105, %106 : vector<8x128xf32>
    %108 = arith.mulf %76, %93 : vector<8x128xf32>
    %109 = arith.mulf %99, %101 : vector<8x128xf32>
    %110 = arith.addf %108, %109 : vector<8x128xf32>
    %111 = math.tanh %110 : vector<8x128xf32>
    %112 = arith.mulf %107, %111 : vector<8x128xf32>
    %113 = arith.index_cast %c2_i32 : i32 to index
    %c0_39 = arith.constant 0 : index
    %c0_40 = arith.constant 0 : index
    %114 = vector.load %arg8[%113, %c0_39, %c0_40] : memref<8x8x128xf32, #tpu.memory_space<vmem>>, vector<1x8x128xf32>
    %115 = vector.shape_cast %114 : vector<1x8x128xf32> to vector<8x128xf32>
    %116 = vector.shape_cast %112 : vector<8x128xf32> to vector<1x8x128xf32>
    tpu.vector_store %arg8[%113, %c0_39, %c0_40], %116 {strides = array<i32>} : memref<8x8x128xf32, #tpu.memory_space<vmem>>, vector<1x8x128xf32>,
    %c3_i32 = arith.constant 3 : i32
    %117 = arith.index_cast %c3_i32 : i32 to index
    %c0_41 = arith.constant 0 : index
    %c0_42 = arith.constant 0 : index
    %118 = vector.load %arg11[%117, %c0_41, %c0_42] : memref<8x8x512xf32, #tpu.memory_space<vmem>>, vector<1x8x512xf32>
    %119 = vector.shape_cast %118 : vector<1x8x512xf32> to vector<8x512xf32>
    %cst_43 = arith.constant dense<0.000000e+00> : vector<8x512xf32>
    %120 = tpu.matmul %112, %12, %cst_43 {dimension_numbers = #tpu.dot_dimension_numbers<[1], [0], [0], [1], [0, 0, 1, 1], [], []>} : vector<8x128xf32>, vector<128x512xf32>, vector<8x512xf32> -> vector<8x512xf32>
    %121 = arith.addf %119, %120 : vector<8x512xf32>
    %122 = vector.extract_strided_slice %121 {offsets = [0, 0], sizes = [8, 128], strides = [1, 1]} : vector<8x512xf32> to vector<8x128xf32>
    %123 = arith.negf %122 : vector<8x128xf32>
    %124 = math.exp %123 : vector<8x128xf32>
    %cst_44 = arith.constant 1.000000e+00 : f32
    %125 = vector.broadcast %cst_44 : f32 to vector<8x128xf32>
    %126 = arith.addf %125, %124 : vector<8x128xf32>
    %127 = arith.divf %125, %126 : vector<8x128xf32>
    %128 = vector.extract_strided_slice %121 {offsets = [0, 128], sizes = [8, 128], strides = [1, 1]} : vector<8x512xf32> to vector<8x128xf32>
    %129 = arith.negf %128 : vector<8x128xf32>
    %130 = math.exp %129 : vector<8x128xf32>
    %cst_45 = arith.constant 1.000000e+00 : f32
    %131 = vector.broadcast %cst_45 : f32 to vector<8x128xf32>
    %132 = arith.addf %131, %130 : vector<8x128xf32>
    %133 = arith.divf %131, %132 : vector<8x128xf32>
    %134 = vector.extract_strided_slice %121 {offsets = [0, 256], sizes = [8, 128], strides = [1, 1]} : vector<8x512xf32> to vector<8x128xf32>
    %135 = math.tanh %134 : vector<8x128xf32>
    %136 = vector.extract_strided_slice %121 {offsets = [0, 384], sizes = [8, 128], strides = [1, 1]} : vector<8x512xf32> to vector<8x128xf32>
    %137 = arith.negf %136 : vector<8x128xf32>
    %138 = math.exp %137 : vector<8x128xf32>
    %cst_46 = arith.constant 1.000000e+00 : f32
    %139 = vector.broadcast %cst_46 : f32 to vector<8x128xf32>
    %140 = arith.addf %139, %138 : vector<8x128xf32>
    %141 = arith.divf %139, %140 : vector<8x128xf32>
    %142 = arith.mulf %110, %127 : vector<8x128xf32>
    %143 = arith.mulf %133, %135 : vector<8x128xf32>
    %144 = arith.addf %142, %143 : vector<8x128xf32>
    %145 = math.tanh %144 : vector<8x128xf32>
    %146 = arith.mulf %141, %145 : vector<8x128xf32>
    %147 = arith.index_cast %c3_i32 : i32 to index
    %c0_47 = arith.constant 0 : index
    %c0_48 = arith.constant 0 : index
    %148 = vector.load %arg8[%147, %c0_47, %c0_48] : memref<8x8x128xf32, #tpu.memory_space<vmem>>, vector<1x8x128xf32>
    %149 = vector.shape_cast %148 : vector<1x8x128xf32> to vector<8x128xf32>
    %150 = vector.shape_cast %146 : vector<8x128xf32> to vector<1x8x128xf32>
    tpu.vector_store %arg8[%147, %c0_47, %c0_48], %150 {strides = array<i32>} : memref<8x8x128xf32, #tpu.memory_space<vmem>>, vector<1x8x128xf32>,
    %c4_i32 = arith.constant 4 : i32
    %151 = arith.index_cast %c4_i32 : i32 to index
    %c0_49 = arith.constant 0 : index
    %c0_50 = arith.constant 0 : index
    %152 = vector.load %arg11[%151, %c0_49, %c0_50] : memref<8x8x512xf32, #tpu.memory_space<vmem>>, vector<1x8x512xf32>
    %153 = vector.shape_cast %152 : vector<1x8x512xf32> to vector<8x512xf32>
    %cst_51 = arith.constant dense<0.000000e+00> : vector<8x512xf32>
    %154 = tpu.matmul %146, %12, %cst_51 {dimension_numbers = #tpu.dot_dimension_numbers<[1], [0], [0], [1], [0, 0, 1, 1], [], []>} : vector<8x128xf32>, vector<128x512xf32>, vector<8x512xf32> -> vector<8x512xf32>
    %155 = arith.addf %153, %154 : vector<8x512xf32>
    %156 = vector.extract_strided_slice %155 {offsets = [0, 0], sizes = [8, 128], strides = [1, 1]} : vector<8x512xf32> to vector<8x128xf32>
    %157 = arith.negf %156 : vector<8x128xf32>
    %158 = math.exp %157 : vector<8x128xf32>
    %cst_52 = arith.constant 1.000000e+00 : f32
    %159 = vector.broadcast %cst_52 : f32 to vector<8x128xf32>
    %160 = arith.addf %159, %158 : vector<8x128xf32>
    %161 = arith.divf %159, %160 : vector<8x128xf32>
    %162 = vector.extract_strided_slice %155 {offsets = [0, 128], sizes = [8, 128], strides = [1, 1]} : vector<8x512xf32> to vector<8x128xf32>
    %163 = arith.negf %162 : vector<8x128xf32>
    %164 = math.exp %163 : vector<8x128xf32>
    %cst_53 = arith.constant 1.000000e+00 : f32
    %165 = vector.broadcast %cst_53 : f32 to vector<8x128xf32>
    %166 = arith.addf %165, %164 : vector<8x128xf32>
    %167 = arith.divf %165, %166 : vector<8x128xf32>
    %168 = vector.extract_strided_slice %155 {offsets = [0, 256], sizes = [8, 128], strides = [1, 1]} : vector<8x512xf32> to vector<8x128xf32>
    %169 = math.tanh %168 : vector<8x128xf32>
    %170 = vector.extract_strided_slice %155 {offsets = [0, 384], sizes = [8, 128], strides = [1, 1]} : vector<8x512xf32> to vector<8x128xf32>
    %171 = arith.negf %170 : vector<8x128xf32>
    %172 = math.exp %171 : vector<8x128xf32>
    %cst_54 = arith.constant 1.000000e+00 : f32
    %173 = vector.broadcast %cst_54 : f32 to vector<8x128xf32>
    %174 = arith.addf %173, %172 : vector<8x128xf32>
    %175 = arith.divf %173, %174 : vector<8x128xf32>
    %176 = arith.mulf %144, %161 : vector<8x128xf32>
    %177 = arith.mulf %167, %169 : vector<8x128xf32>
    %178 = arith.addf %176, %177 : vector<8x128xf32>
    %179 = math.tanh %178 : vector<8x128xf32>
    %180 = arith.mulf %175, %179 : vector<8x128xf32>
    %181 = arith.index_cast %c4_i32 : i32 to index
    %c0_55 = arith.constant 0 : index
    %c0_56 = arith.constant 0 : index
    %182 = vector.load %arg8[%181, %c0_55, %c0_56] : memref<8x8x128xf32, #tpu.memory_space<vmem>>, vector<1x8x128xf32>
    %183 = vector.shape_cast %182 : vector<1x8x128xf32> to vector<8x128xf32>
    %184 = vector.shape_cast %180 : vector<8x128xf32> to vector<1x8x128xf32>
    tpu.vector_store %arg8[%181, %c0_55, %c0_56], %184 {strides = array<i32>} : memref<8x8x128xf32, #tpu.memory_space<vmem>>, vector<1x8x128xf32>,
    %c5_i32 = arith.constant 5 : i32
    %185 = arith.index_cast %c5_i32 : i32 to index
    %c0_57 = arith.constant 0 : index
    %c0_58 = arith.constant 0 : index
    %186 = vector.load %arg11[%185, %c0_57, %c0_58] : memref<8x8x512xf32, #tpu.memory_space<vmem>>, vector<1x8x512xf32>
    %187 = vector.shape_cast %186 : vector<1x8x512xf32> to vector<8x512xf32>
    %cst_59 = arith.constant dense<0.000000e+00> : vector<8x512xf32>
    %188 = tpu.matmul %180, %12, %cst_59 {dimension_numbers = #tpu.dot_dimension_numbers<[1], [0], [0], [1], [0, 0, 1, 1], [], []>} : vector<8x128xf32>, vector<128x512xf32>, vector<8x512xf32> -> vector<8x512xf32>
    %189 = arith.addf %187, %188 : vector<8x512xf32>
    %190 = vector.extract_strided_slice %189 {offsets = [0, 0], sizes = [8, 128], strides = [1, 1]} : vector<8x512xf32> to vector<8x128xf32>
    %191 = arith.negf %190 : vector<8x128xf32>
    %192 = math.exp %191 : vector<8x128xf32>
    %cst_60 = arith.constant 1.000000e+00 : f32
    %193 = vector.broadcast %cst_60 : f32 to vector<8x128xf32>
    %194 = arith.addf %193, %192 : vector<8x128xf32>
    %195 = arith.divf %193, %194 : vector<8x128xf32>
    %196 = vector.extract_strided_slice %189 {offsets = [0, 128], sizes = [8, 128], strides = [1, 1]} : vector<8x512xf32> to vector<8x128xf32>
    %197 = arith.negf %196 : vector<8x128xf32>
    %198 = math.exp %197 : vector<8x128xf32>
    %cst_61 = arith.constant 1.000000e+00 : f32
    %199 = vector.broadcast %cst_61 : f32 to vector<8x128xf32>
    %200 = arith.addf %199, %198 : vector<8x128xf32>
    %201 = arith.divf %199, %200 : vector<8x128xf32>
    %202 = vector.extract_strided_slice %189 {offsets = [0, 256], sizes = [8, 128], strides = [1, 1]} : vector<8x512xf32> to vector<8x128xf32>
    %203 = math.tanh %202 : vector<8x128xf32>
    %204 = vector.extract_strided_slice %189 {offsets = [0, 384], sizes = [8, 128], strides = [1, 1]} : vector<8x512xf32> to vector<8x128xf32>
    %205 = arith.negf %204 : vector<8x128xf32>
    %206 = math.exp %205 : vector<8x128xf32>
    %cst_62 = arith.constant 1.000000e+00 : f32
    %207 = vector.broadcast %cst_62 : f32 to vector<8x128xf32>
    %208 = arith.addf %207, %206 : vector<8x128xf32>
    %209 = arith.divf %207, %208 : vector<8x128xf32>
    %210 = arith.mulf %178, %195 : vector<8x128xf32>
    %211 = arith.mulf %201, %203 : vector<8x128xf32>
    %212 = arith.addf %210, %211 : vector<8x128xf32>
    %213 = math.tanh %212 : vector<8x128xf32>
    %214 = arith.mulf %209, %213 : vector<8x128xf32>
    %215 = arith.index_cast %c5_i32 : i32 to index
    %c0_63 = arith.constant 0 : index
    %c0_64 = arith.constant 0 : index
    %216 = vector.load %arg8[%215, %c0_63, %c0_64] : memref<8x8x128xf32, #tpu.memory_space<vmem>>, vector<1x8x128xf32>
    %217 = vector.shape_cast %216 : vector<1x8x128xf32> to vector<8x128xf32>
    %218 = vector.shape_cast %214 : vector<8x128xf32> to vector<1x8x128xf32>
    tpu.vector_store %arg8[%215, %c0_63, %c0_64], %218 {strides = array<i32>} : memref<8x8x128xf32, #tpu.memory_space<vmem>>, vector<1x8x128xf32>,
    %c6_i32 = arith.constant 6 : i32
    %219 = arith.index_cast %c6_i32 : i32 to index
    %c0_65 = arith.constant 0 : index
    %c0_66 = arith.constant 0 : index
    %220 = vector.load %arg11[%219, %c0_65, %c0_66] : memref<8x8x512xf32, #tpu.memory_space<vmem>>, vector<1x8x512xf32>
    %221 = vector.shape_cast %220 : vector<1x8x512xf32> to vector<8x512xf32>
    %cst_67 = arith.constant dense<0.000000e+00> : vector<8x512xf32>
    %222 = tpu.matmul %214, %12, %cst_67 {dimension_numbers = #tpu.dot_dimension_numbers<[1], [0], [0], [1], [0, 0, 1, 1], [], []>} : vector<8x128xf32>, vector<128x512xf32>, vector<8x512xf32> -> vector<8x512xf32>
    %223 = arith.addf %221, %222 : vector<8x512xf32>
    %224 = vector.extract_strided_slice %223 {offsets = [0, 0], sizes = [8, 128], strides = [1, 1]} : vector<8x512xf32> to vector<8x128xf32>
    %225 = arith.negf %224 : vector<8x128xf32>
    %226 = math.exp %225 : vector<8x128xf32>
    %cst_68 = arith.constant 1.000000e+00 : f32
    %227 = vector.broadcast %cst_68 : f32 to vector<8x128xf32>
    %228 = arith.addf %227, %226 : vector<8x128xf32>
    %229 = arith.divf %227, %228 : vector<8x128xf32>
    %230 = vector.extract_strided_slice %223 {offsets = [0, 128], sizes = [8, 128], strides = [1, 1]} : vector<8x512xf32> to vector<8x128xf32>
    %231 = arith.negf %230 : vector<8x128xf32>
    %232 = math.exp %231 : vector<8x128xf32>
    %cst_69 = arith.constant 1.000000e+00 : f32
    %233 = vector.broadcast %cst_69 : f32 to vector<8x128xf32>
    %234 = arith.addf %233, %232 : vector<8x128xf32>
    %235 = arith.divf %233, %234 : vector<8x128xf32>
    %236 = vector.extract_strided_slice %223 {offsets = [0, 256], sizes = [8, 128], strides = [1, 1]} : vector<8x512xf32> to vector<8x128xf32>
    %237 = math.tanh %236 : vector<8x128xf32>
    %238 = vector.extract_strided_slice %223 {offsets = [0, 384], sizes = [8, 128], strides = [1, 1]} : vector<8x512xf32> to vector<8x128xf32>
    %239 = arith.negf %238 : vector<8x128xf32>
    %240 = math.exp %239 : vector<8x128xf32>
    %cst_70 = arith.constant 1.000000e+00 : f32
    %241 = vector.broadcast %cst_70 : f32 to vector<8x128xf32>
    %242 = arith.addf %241, %240 : vector<8x128xf32>
    %243 = arith.divf %241, %242 : vector<8x128xf32>
    %244 = arith.mulf %212, %229 : vector<8x128xf32>
    %245 = arith.mulf %235, %237 : vector<8x128xf32>
    %246 = arith.addf %244, %245 : vector<8x128xf32>
    %247 = math.tanh %246 : vector<8x128xf32>
    %248 = arith.mulf %243, %247 : vector<8x128xf32>
    %249 = arith.index_cast %c6_i32 : i32 to index
    %c0_71 = arith.constant 0 : index
    %c0_72 = arith.constant 0 : index
    %250 = vector.load %arg8[%249, %c0_71, %c0_72] : memref<8x8x128xf32, #tpu.memory_space<vmem>>, vector<1x8x128xf32>
    %251 = vector.shape_cast %250 : vector<1x8x128xf32> to vector<8x128xf32>
    %252 = vector.shape_cast %248 : vector<8x128xf32> to vector<1x8x128xf32>
    tpu.vector_store %arg8[%249, %c0_71, %c0_72], %252 {strides = array<i32>} : memref<8x8x128xf32, #tpu.memory_space<vmem>>, vector<1x8x128xf32>,
    %c7_i32 = arith.constant 7 : i32
    %253 = arith.index_cast %c7_i32 : i32 to index
    %c0_73 = arith.constant 0 : index
    %c0_74 = arith.constant 0 : index
    %254 = vector.load %arg11[%253, %c0_73, %c0_74] : memref<8x8x512xf32, #tpu.memory_space<vmem>>, vector<1x8x512xf32>
    %255 = vector.shape_cast %254 : vector<1x8x512xf32> to vector<8x512xf32>
    %cst_75 = arith.constant dense<0.000000e+00> : vector<8x512xf32>
    %256 = tpu.matmul %248, %12, %cst_75 {dimension_numbers = #tpu.dot_dimension_numbers<[1], [0], [0], [1], [0, 0, 1, 1], [], []>} : vector<8x128xf32>, vector<128x512xf32>, vector<8x512xf32> -> vector<8x512xf32>
    %257 = arith.addf %255, %256 : vector<8x512xf32>
    %258 = vector.extract_strided_slice %257 {offsets = [0, 0], sizes = [8, 128], strides = [1, 1]} : vector<8x512xf32> to vector<8x128xf32>
    %259 = arith.negf %258 : vector<8x128xf32>
    %260 = math.exp %259 : vector<8x128xf32>
    %cst_76 = arith.constant 1.000000e+00 : f32
    %261 = vector.broadcast %cst_76 : f32 to vector<8x128xf32>
    %262 = arith.addf %261, %260 : vector<8x128xf32>
    %263 = arith.divf %261, %262 : vector<8x128xf32>
    %264 = vector.extract_strided_slice %257 {offsets = [0, 128], sizes = [8, 128], strides = [1, 1]} : vector<8x512xf32> to vector<8x128xf32>
    %265 = arith.negf %264 : vector<8x128xf32>
    %266 = math.exp %265 : vector<8x128xf32>
    %cst_77 = arith.constant 1.000000e+00 : f32
    %267 = vector.broadcast %cst_77 : f32 to vector<8x128xf32>
    %268 = arith.addf %267, %266 : vector<8x128xf32>
    %269 = arith.divf %267, %268 : vector<8x128xf32>
    %270 = vector.extract_strided_slice %257 {offsets = [0, 256], sizes = [8, 128], strides = [1, 1]} : vector<8x512xf32> to vector<8x128xf32>
    %271 = math.tanh %270 : vector<8x128xf32>
    %272 = vector.extract_strided_slice %257 {offsets = [0, 384], sizes = [8, 128], strides = [1, 1]} : vector<8x512xf32> to vector<8x128xf32>
    %273 = arith.negf %272 : vector<8x128xf32>
    %274 = math.exp %273 : vector<8x128xf32>
    %cst_78 = arith.constant 1.000000e+00 : f32
    %275 = vector.broadcast %cst_78 : f32 to vector<8x128xf32>
    %276 = arith.addf %275, %274 : vector<8x128xf32>
    %277 = arith.divf %275, %276 : vector<8x128xf32>
    %278 = arith.mulf %246, %263 : vector<8x128xf32>
    %279 = arith.mulf %269, %271 : vector<8x128xf32>
    %280 = arith.addf %278, %279 : vector<8x128xf32>
    %281 = math.tanh %280 : vector<8x128xf32>
    %282 = arith.mulf %277, %281 : vector<8x128xf32>
    %283 = arith.index_cast %c7_i32 : i32 to index
    %c0_79 = arith.constant 0 : index
    %c0_80 = arith.constant 0 : index
    %284 = vector.load %arg8[%283, %c0_79, %c0_80] : memref<8x8x128xf32, #tpu.memory_space<vmem>>, vector<1x8x128xf32>
    %285 = vector.shape_cast %284 : vector<1x8x128xf32> to vector<8x128xf32>
    %286 = vector.shape_cast %282 : vector<8x128xf32> to vector<1x8x128xf32>
    tpu.vector_store %arg8[%283, %c0_79, %c0_80], %286 {strides = array<i32>} : memref<8x8x128xf32, #tpu.memory_space<vmem>>, vector<1x8x128xf32>,
    %c8_i32 = arith.constant 8 : i32
    %c0_81 = arith.constant 0 : index
    %c0_82 = arith.constant 0 : index
    %287 = vector.load %arg12[%c0_81, %c0_82] : memref<8x128xf32, #tpu.memory_space<vmem>>, vector<8x128xf32>
    tpu.vector_store %arg12[%c0_81, %c0_82], %282 {strides = array<i32>} : memref<8x128xf32, #tpu.memory_space<vmem>>, vector<8x128xf32>,
    %c0_83 = arith.constant 0 : index
    %c0_84 = arith.constant 0 : index
    %288 = vector.load %arg13[%c0_83, %c0_84] : memref<8x128xf32, #tpu.memory_space<vmem>>, vector<8x128xf32>
    tpu.vector_store %arg13[%c0_83, %c0_84], %280 {strides = array<i32>} : memref<8x128xf32, #tpu.memory_space<vmem>>, vector<8x128xf32>,
    %c0_i32_85 = arith.constant 0 : i32
    %289 = arith.cmpi eq, %arg1, %c0_i32_85 : i32
    %290 = arith.extui %289 : i1 to i32
    %c0_i32_86 = arith.constant 0 : i32
    %291 = arith.cmpi ne, %290, %c0_i32_86 : i32
    scf.if %291 {
      %c0_87 = arith.constant 0 : index
      %c0_88 = arith.constant 0 : index
      %c0_89 = arith.constant 0 : index
      %292 = vector.load %arg9[%c0_87, %c0_88, %c0_89] : memref<1x8x128xf32, #tpu.memory_space<vmem>>, vector<1x8x128xf32>
      %293 = vector.shape_cast %292 : vector<1x8x128xf32> to vector<8x128xf32>
      %294 = vector.shape_cast %282 : vector<8x128xf32> to vector<1x8x128xf32>
      tpu.vector_store %arg9[%c0_87, %c0_88, %c0_89], %294 {strides = array<i32>} : memref<1x8x128xf32, #tpu.memory_space<vmem>>, vector<1x8x128xf32>,
      %c0_90 = arith.constant 0 : index
      %c0_91 = arith.constant 0 : index
      %c0_92 = arith.constant 0 : index
      %295 = vector.load %arg10[%c0_90, %c0_91, %c0_92] : memref<1x8x128xf32, #tpu.memory_space<vmem>>, vector<1x8x128xf32>
      %296 = vector.shape_cast %295 : vector<1x8x128xf32> to vector<8x128xf32>
      %297 = vector.shape_cast %280 : vector<8x128xf32> to vector<1x8x128xf32>
      tpu.vector_store %arg10[%c0_90, %c0_91, %c0_92], %297 {strides = array<i32>} : memref<1x8x128xf32, #tpu.memory_space<vmem>>, vector<1x8x128xf32>,
    } else {
    }
    return
  }
  func.func @transform_0(%arg0: i32, %arg1: i32) -> (i32, i32, i32) {
    %c0_i32 = arith.constant 0 : i32
    %c0_i32_0 = arith.constant 0 : i32
    return %arg1, %arg0, %c0_i32 : i32, i32, i32
  }
  func.func @transform_1(%arg0: i32, %arg1: i32) -> (i32, i32) {
    %c0_i32 = arith.constant 0 : i32
    %c0_i32_0 = arith.constant 0 : i32
    %c0_i32_1 = arith.constant 0 : i32
    return %c0_i32, %c0_i32_0 : i32, i32
  }
  func.func @transform_2(%arg0: i32, %arg1: i32) -> (i32, i32) {
    %c0_i32 = arith.constant 0 : i32
    %c0_i32_0 = arith.constant 0 : i32
    %c0_i32_1 = arith.constant 0 : i32
    return %c0_i32, %c0_i32_0 : i32, i32
  }
  func.func @transform_3(%arg0: i32, %arg1: i32) -> (i32, i32) {
    %c0_i32 = arith.constant 0 : i32
    %c0_i32_0 = arith.constant 0 : i32
    %c0_i32_1 = arith.constant 0 : i32
    return %c0_i32, %c0_i32_0 : i32, i32
  }
  func.func @transform_4(%arg0: i32, %arg1: i32) -> (i32, i32, i32) {
    %c0_i32 = arith.constant 0 : i32
    %c0_i32_0 = arith.constant 0 : i32
    %c0_i32_1 = arith.constant 0 : i32
    return %c0_i32, %arg0, %c0_i32_0 : i32, i32, i32
  }
  func.func @transform_5(%arg0: i32, %arg1: i32) -> (i32, i32, i32) {
    %c0_i32 = arith.constant 0 : i32
    %c0_i32_0 = arith.constant 0 : i32
    %c0_i32_1 = arith.constant 0 : i32
    return %c0_i32, %arg0, %c0_i32_0 : i32, i32, i32
  }
  func.func @transform_6(%arg0: i32, %arg1: i32) -> (i32, i32, i32) {
    %c0_i32 = arith.constant 0 : i32
    %c0_i32_0 = arith.constant 0 : i32
    return %arg1, %arg0, %c0_i32 : i32, i32, i32
  }
  func.func @transform_7(%arg0: i32, %arg1: i32) -> (i32, i32, i32) {
    %c0_i32 = arith.constant 0 : i32
    %c0_i32_0 = arith.constant 0 : i32
    %c0_i32_1 = arith.constant 0 : i32
    return %c0_i32, %arg0, %c0_i32_0 : i32, i32, i32
  }
  func.func @transform_8(%arg0: i32, %arg1: i32) -> (i32, i32, i32) {
    %c0_i32 = arith.constant 0 : i32
    %c0_i32_0 = arith.constant 0 : i32
    %c0_i32_1 = arith.constant 0 : i32
    return %c0_i32, %arg0, %c0_i32_0 : i32, i32, i32
  }
}

module attributes {stable_mosaic.version = 11 : i64} {
  func.func @lstm_fused_kernel(%arg0: i32, %arg1: i32, %arg2: memref<8x8x4xf32, #tpu.memory_space<vmem>>, %arg3: memref<4x512xf32, #tpu.memory_space<vmem>>, %arg4: memref<128x512xf32, #tpu.memory_space<vmem>>, %arg5: memref<1x512xf32, #tpu.memory_space<vmem>>, %arg6: memref<1x8x128xf32, #tpu.memory_space<vmem>>, %arg7: memref<1x8x128xf32, #tpu.memory_space<vmem>>, %arg8: memref<8x8x128xf32, #tpu.memory_space<vmem>>, %arg9: memref<1x8x128xf32, #tpu.memory_space<vmem>>, %arg10: memref<1x8x128xf32, #tpu.memory_space<vmem>>, %arg11: memref<8x8x512xf32, #tpu.memory_space<vmem>>, %arg12: memref<8x128xf32, #tpu.memory_space<vmem>>, %arg13: memref<8x128xf32, #tpu.memory_space<vmem>>) attributes {dimension_semantics = [#tpu.dimension_semantics<parallel>, #tpu.dimension_semantics<arbitrary>], iteration_bounds = array<i64: 1, 1>, scalar_prefetch = 0 : i64, scratch_operands = 3 : i64, tpu.core_type = #tpu.core_type<tc>, window_params = [{transform_indices = @transform_0, window_bounds = array<i64: 8, 8, 4>}, {pipeline_mode = #tpu.pipeline_mode<synchronous>, transform_indices = @transform_1, window_bounds = array<i64: 4, 512>}, {pipeline_mode = #tpu.pipeline_mode<synchronous>, transform_indices = @transform_2, window_bounds = array<i64: 128, 512>}, {pipeline_mode = #tpu.pipeline_mode<synchronous>, transform_indices = @transform_3, window_bounds = array<i64: 1, 512>}, {transform_indices = @transform_4, window_bounds = array<i64: 1, 8, 128>}, {transform_indices = @transform_5, window_bounds = array<i64: 1, 8, 128>}, {transform_indices = @transform_6, window_bounds = array<i64: 8, 8, 128>}, {transform_indices = @transform_7, window_bounds = array<i64: 1, 8, 128>}, {transform_indices = @transform_8, window_bounds = array<i64: 1, 8, 128>}]} {
    %c0_i32 = arith.constant 0 : i32
    %0 = arith.cmpi eq, %arg1, %c0_i32 : i32
    %1 = arith.extui %0 : i1 to i32
    %c0_i32_0 = arith.constant 0 : i32
    %2 = arith.cmpi ne, %1, %c0_i32_0 : i32
    scf.if %2 {
      %c0_87 = arith.constant 0 : index
      %c0_88 = arith.constant 0 : index
      %c0_89 = arith.constant 0 : index
      %292 = vector.load %arg6[%c0_87, %c0_88, %c0_89] : memref<1x8x128xf32, #tpu.memory_space<vmem>>, vector<1x8x128xf32>
      %293 = vector.shape_cast %292 : vector<1x8x128xf32> to vector<8x128xf32>
      %c0_90 = arith.constant 0 : index
      %c0_91 = arith.constant 0 : index
      %294 = vector.load %arg12[%c0_90, %c0_91] : memref<8x128xf32, #tpu.memory_space<vmem>>, vector<8x128xf32>
      tpu.vector_store %arg12[%c0_90, %c0_91], %293 {strides = array<i32>} : memref<8x128xf32, #tpu.memory_space<vmem>>, vector<8x128xf32>,
      %c0_92 = arith.constant 0 : index
      %c0_93 = arith.constant 0 : index
      %c0_94 = arith.constant 0 : index
      %295 = vector.load %arg7[%c0_92, %c0_93, %c0_94] : memref<1x8x128xf32, #tpu.memory_space<vmem>>, vector<1x8x128xf32>
      %296 = vector.shape_cast %295 : vector<1x8x128xf32> to vector<8x128xf32>
      %c0_95 = arith.constant 0 : index
      %c0_96 = arith.constant 0 : index
      %297 = vector.load %arg13[%c0_95, %c0_96] : memref<8x128xf32, #tpu.memory_space<vmem>>, vector<8x128xf32>
      tpu.vector_store %arg13[%c0_95, %c0_96], %296 {strides = array<i32>} : memref<8x128xf32, #tpu.memory_space<vmem>>, vector<8x128xf32>,
    } else {
    }
    %c0 = arith.constant 0 : index
    %c0_1 = arith.constant 0 : index
    %3 = vector.load %arg3[%c0, %c0_1] : memref<4x512xf32, #tpu.memory_space<vmem>>, vector<4x512xf32>
    %c0_2 = arith.constant 0 : index
    %c0_3 = arith.constant 0 : index
    %c0_4 = arith.constant 0 : index
    %4 = vector.load %arg2[%c0_2, %c0_3, %c0_4] : memref<8x8x4xf32, #tpu.memory_space<vmem>>, vector<8x8x4xf32>
    %5 = vector.shape_cast %4 : vector<8x8x4xf32> to vector<64x4xf32>
    %cst = arith.constant dense<0.000000e+00> : vector<64x512xf32>
    %6 = tpu.matmul %5, %3, %cst {dimension_numbers = #tpu.dot_dimension_numbers<[1], [0], [0], [1], [0, 0, 1, 1], [], []>} : vector<64x4xf32>, vector<4x512xf32>, vector<64x512xf32> -> vector<64x512xf32>
    %c0_5 = arith.constant 0 : index
    %c0_6 = arith.constant 0 : index
    %7 = vector.load %arg5[%c0_5, %c0_6] : memref<1x512xf32, #tpu.memory_space<vmem>>, vector<1x512xf32>
    %8 = vector.broadcast %7 : vector<1x512xf32> to vector<64x512xf32>
    %9 = arith.addf %6, %8 : vector<64x512xf32>
    %10 = vector.shape_cast %9 : vector<64x512xf32> to vector<8x8x512xf32>
    %c0_7 = arith.constant 0 : index
    %c0_8 = arith.constant 0 : index
    %c0_9 = arith.constant 0 : index
    %11 = vector.load %arg11[%c0_7, %c0_8, %c0_9] : memref<8x8x512xf32, #tpu.memory_space<vmem>>, vector<8x8x512xf32>
    tpu.vector_store %arg11[%c0_7, %c0_8, %c0_9], %10 {strides = array<i32>} : memref<8x8x512xf32, #tpu.memory_space<vmem>>, vector<8x8x512xf32>,
    %c0_10 = arith.constant 0 : index
    %c0_11 = arith.constant 0 : index
    %12 = vector.load %arg4[%c0_10, %c0_11] : memref<128x512xf32, #tpu.memory_space<vmem>>, vector<128x512xf32>
    %c0_12 = arith.constant 0 : index
    %c0_13 = arith.constant 0 : index
    %13 = vector.load %arg12[%c0_12, %c0_13] : memref<8x128xf32, #tpu.memory_space<vmem>>, vector<8x128xf32>
    %c0_14 = arith.constant 0 : index
    %c0_15 = arith.constant 0 : index
    %14 = vector.load %arg13[%c0_14, %c0_15] : memref<8x128xf32, #tpu.memory_space<vmem>>, vector<8x128xf32>
    %c0_i32_16 = arith.constant 0 : i32
    %15 = arith.index_cast %c0_i32_16 : i32 to index
    %c0_17 = arith.constant 0 : index
    %c0_18 = arith.constant 0 : index
    %16 = vector.load %arg11[%15, %c0_17, %c0_18] : memref<8x8x512xf32, #tpu.memory_space<vmem>>, vector<1x8x512xf32>
    %17 = vector.shape_cast %16 : vector<1x8x512xf32> to vector<8x512xf32>
    %cst_19 = arith.constant dense<0.000000e+00> : vector<8x512xf32>
    %18 = tpu.matmul %13, %12, %cst_19 {dimension_numbers = #tpu.dot_dimension_numbers<[1], [0], [0], [1], [0, 0, 1, 1], [], []>} : vector<8x128xf32>, vector<128x512xf32>, vector<8x512xf32> -> vector<8x512xf32>
    %19 = arith.addf %17, %18 : vector<8x512xf32>
    %20 = vector.extract_strided_slice %19 {offsets = [0, 0], sizes = [8, 128], strides = [1, 1]} : vector<8x512xf32> to vector<8x128xf32>
    %21 = arith.negf %20 : vector<8x128xf32>
    %22 = math.exp %21 : vector<8x128xf32>
    %cst_20 = arith.constant 1.000000e+00 : f32
    %23 = vector.broadcast %cst_20 : f32 to vector<8x128xf32>
    %24 = arith.addf %23, %22 : vector<8x128xf32>
    %25 = arith.divf %23, %24 : vector<8x128xf32>
    %26 = vector.extract_strided_slice %19 {offsets = [0, 128], sizes = [8, 128], strides = [1, 1]} : vector<8x512xf32> to vector<8x128xf32>
    %27 = arith.negf %26 : vector<8x128xf32>
    %28 = math.exp %27 : vector<8x128xf32>
    %cst_21 = arith.constant 1.000000e+00 : f32
    %29 = vector.broadcast %cst_21 : f32 to vector<8x128xf32>
    %30 = arith.addf %29, %28 : vector<8x128xf32>
    %31 = arith.divf %29, %30 : vector<8x128xf32>
    %32 = vector.extract_strided_slice %19 {offsets = [0, 256], sizes = [8, 128], strides = [1, 1]} : vector<8x512xf32> to vector<8x128xf32>
    %33 = math.tanh %32 : vector<8x128xf32>
    %34 = vector.extract_strided_slice %19 {offsets = [0, 384], sizes = [8, 128], strides = [1, 1]} : vector<8x512xf32> to vector<8x128xf32>
    %35 = arith.negf %34 : vector<8x128xf32>
    %36 = math.exp %35 : vector<8x128xf32>
    %cst_22 = arith.constant 1.000000e+00 : f32
    %37 = vector.broadcast %cst_22 : f32 to vector<8x128xf32>
    %38 = arith.addf %37, %36 : vector<8x128xf32>
    %39 = arith.divf %37, %38 : vector<8x128xf32>
    %40 = arith.mulf %14, %25 : vector<8x128xf32>
    %41 = arith.mulf %31, %33 : vector<8x128xf32>
    %42 = arith.addf %40, %41 : vector<8x128xf32>
    %43 = math.tanh %42 : vector<8x128xf32>
    %44 = arith.mulf %39, %43 : vector<8x128xf32>
    %45 = arith.index_cast %c0_i32_16 : i32 to index
    %c0_23 = arith.constant 0 : index
    %c0_24 = arith.constant 0 : index
    %46 = vector.load %arg8[%45, %c0_23, %c0_24] : memref<8x8x128xf32, #tpu.memory_space<vmem>>, vector<1x8x128xf32>
    %47 = vector.shape_cast %46 : vector<1x8x128xf32> to vector<8x128xf32>
    %48 = vector.shape_cast %44 : vector<8x128xf32> to vector<1x8x128xf32>
    tpu.vector_store %arg8[%45, %c0_23, %c0_24], %48 {strides = array<i32>} : memref<8x8x128xf32, #tpu.memory_space<vmem>>, vector<1x8x128xf32>,
    %c1_i32 = arith.constant 1 : i32
    %49 = arith.index_cast %c1_i32 : i32 to index
    %c0_25 = arith.constant 0 : index
    %c0_26 = arith.constant 0 : index
    %50 = vector.load %arg11[%49, %c0_25, %c0_26] : memref<8x8x512xf32, #tpu.memory_space<vmem>>, vector<1x8x512xf32>
    %51 = vector.shape_cast %50 : vector<1x8x512xf32> to vector<8x512xf32>
    %cst_27 = arith.constant dense<0.000000e+00> : vector<8x512xf32>
    %52 = tpu.matmul %44, %12, %cst_27 {dimension_numbers = #tpu.dot_dimension_numbers<[1], [0], [0], [1], [0, 0, 1, 1], [], []>} : vector<8x128xf32>, vector<128x512xf32>, vector<8x512xf32> -> vector<8x512xf32>
    %53 = arith.addf %51, %52 : vector<8x512xf32>
    %54 = vector.extract_strided_slice %53 {offsets = [0, 0], sizes = [8, 128], strides = [1, 1]} : vector<8x512xf32> to vector<8x128xf32>
    %55 = arith.negf %54 : vector<8x128xf32>
    %56 = math.exp %55 : vector<8x128xf32>
    %cst_28 = arith.constant 1.000000e+00 : f32
    %57 = vector.broadcast %cst_28 : f32 to vector<8x128xf32>
    %58 = arith.addf %57, %56 : vector<8x128xf32>
    %59 = arith.divf %57, %58 : vector<8x128xf32>
    %60 = vector.extract_strided_slice %53 {offsets = [0, 128], sizes = [8, 128], strides = [1, 1]} : vector<8x512xf32> to vector<8x128xf32>
    %61 = arith.negf %60 : vector<8x128xf32>
    %62 = math.exp %61 : vector<8x128xf32>
    %cst_29 = arith.constant 1.000000e+00 : f32
    %63 = vector.broadcast %cst_29 : f32 to vector<8x128xf32>
    %64 = arith.addf %63, %62 : vector<8x128xf32>
    %65 = arith.divf %63, %64 : vector<8x128xf32>
    %66 = vector.extract_strided_slice %53 {offsets = [0, 256], sizes = [8, 128], strides = [1, 1]} : vector<8x512xf32> to vector<8x128xf32>
    %67 = math.tanh %66 : vector<8x128xf32>
    %68 = vector.extract_strided_slice %53 {offsets = [0, 384], sizes = [8, 128], strides = [1, 1]} : vector<8x512xf32> to vector<8x128xf32>
    %69 = arith.negf %68 : vector<8x128xf32>
    %70 = math.exp %69 : vector<8x128xf32>
    %cst_30 = arith.constant 1.000000e+00 : f32
    %71 = vector.broadcast %cst_30 : f32 to vector<8x128xf32>
    %72 = arith.addf %71, %70 : vector<8x128xf32>
    %73 = arith.divf %71, %72 : vector<8x128xf32>
    %74 = arith.mulf %42, %59 : vector<8x128xf32>
    %75 = arith.mulf %65, %67 : vector<8x128xf32>
    %76 = arith.addf %74, %75 : vector<8x128xf32>
    %77 = math.tanh %76 : vector<8x128xf32>
    %78 = arith.mulf %73, %77 : vector<8x128xf32>
    %79 = arith.index_cast %c1_i32 : i32 to index
    %c0_31 = arith.constant 0 : index
    %c0_32 = arith.constant 0 : index
    %80 = vector.load %arg8[%79, %c0_31, %c0_32] : memref<8x8x128xf32, #tpu.memory_space<vmem>>, vector<1x8x128xf32>
    %81 = vector.shape_cast %80 : vector<1x8x128xf32> to vector<8x128xf32>
    %82 = vector.shape_cast %78 : vector<8x128xf32> to vector<1x8x128xf32>
    tpu.vector_store %arg8[%79, %c0_31, %c0_32], %82 {strides = array<i32>} : memref<8x8x128xf32, #tpu.memory_space<vmem>>, vector<1x8x128xf32>,
    %c2_i32 = arith.constant 2 : i32
    %83 = arith.index_cast %c2_i32 : i32 to index
    %c0_33 = arith.constant 0 : index
    %c0_34 = arith.constant 0 : index
    %84 = vector.load %arg11[%83, %c0_33, %c0_34] : memref<8x8x512xf32, #tpu.memory_space<vmem>>, vector<1x8x512xf32>
    %85 = vector.shape_cast %84 : vector<1x8x512xf32> to vector<8x512xf32>
    %cst_35 = arith.constant dense<0.000000e+00> : vector<8x512xf32>
    %86 = tpu.matmul %78, %12, %cst_35 {dimension_numbers = #tpu.dot_dimension_numbers<[1], [0], [0], [1], [0, 0, 1, 1], [], []>} : vector<8x128xf32>, vector<128x512xf32>, vector<8x512xf32> -> vector<8x512xf32>
    %87 = arith.addf %85, %86 : vector<8x512xf32>
    %88 = vector.extract_strided_slice %87 {offsets = [0, 0], sizes = [8, 128], strides = [1, 1]} : vector<8x512xf32> to vector<8x128xf32>
    %89 = arith.negf %88 : vector<8x128xf32>
    %90 = math.exp %89 : vector<8x128xf32>
    %cst_36 = arith.constant 1.000000e+00 : f32
    %91 = vector.broadcast %cst_36 : f32 to vector<8x128xf32>
    %92 = arith.addf %91, %90 : vector<8x128xf32>
    %93 = arith.divf %91, %92 : vector<8x128xf32>
    %94 = vector.extract_strided_slice %87 {offsets = [0, 128], sizes = [8, 128], strides = [1, 1]} : vector<8x512xf32> to vector<8x128xf32>
    %95 = arith.negf %94 : vector<8x128xf32>
    %96 = math.exp %95 : vector<8x128xf32>
    %cst_37 = arith.constant 1.000000e+00 : f32
    %97 = vector.broadcast %cst_37 : f32 to vector<8x128xf32>
    %98 = arith.addf %97, %96 : vector<8x128xf32>
    %99 = arith.divf %97, %98 : vector<8x128xf32>
    %100 = vector.extract_strided_slice %87 {offsets = [0, 256], sizes = [8, 128], strides = [1, 1]} : vector<8x512xf32> to vector<8x128xf32>
    %101 = math.tanh %100 : vector<8x128xf32>
    %102 = vector.extract_strided_slice %87 {offsets = [0, 384], sizes = [8, 128], strides = [1, 1]} : vector<8x512xf32> to vector<8x128xf32>
    %103 = arith.negf %102 : vector<8x128xf32>
    %104 = math.exp %103 : vector<8x128xf32>
    %cst_38 = arith.constant 1.000000e+00 : f32
    %105 = vector.broadcast %cst_38 : f32 to vector<8x128xf32>
    %106 = arith.addf %105, %104 : vector<8x128xf32>
    %107 = arith.divf %105, %106 : vector<8x128xf32>
    %108 = arith.mulf %76, %93 : vector<8x128xf32>
    %109 = arith.mulf %99, %101 : vector<8x128xf32>
    %110 = arith.addf %108, %109 : vector<8x128xf32>
    %111 = math.tanh %110 : vector<8x128xf32>
    %112 = arith.mulf %107, %111 : vector<8x128xf32>
    %113 = arith.index_cast %c2_i32 : i32 to index
    %c0_39 = arith.constant 0 : index
    %c0_40 = arith.constant 0 : index
    %114 = vector.load %arg8[%113, %c0_39, %c0_40] : memref<8x8x128xf32, #tpu.memory_space<vmem>>, vector<1x8x128xf32>
    %115 = vector.shape_cast %114 : vector<1x8x128xf32> to vector<8x128xf32>
    %116 = vector.shape_cast %112 : vector<8x128xf32> to vector<1x8x128xf32>
    tpu.vector_store %arg8[%113, %c0_39, %c0_40], %116 {strides = array<i32>} : memref<8x8x128xf32, #tpu.memory_space<vmem>>, vector<1x8x128xf32>,
    %c3_i32 = arith.constant 3 : i32
    %117 = arith.index_cast %c3_i32 : i32 to index
    %c0_41 = arith.constant 0 : index
    %c0_42 = arith.constant 0 : index
    %118 = vector.load %arg11[%117, %c0_41, %c0_42] : memref<8x8x512xf32, #tpu.memory_space<vmem>>, vector<1x8x512xf32>
    %119 = vector.shape_cast %118 : vector<1x8x512xf32> to vector<8x512xf32>
    %cst_43 = arith.constant dense<0.000000e+00> : vector<8x512xf32>
    %120 = tpu.matmul %112, %12, %cst_43 {dimension_numbers = #tpu.dot_dimension_numbers<[1], [0], [0], [1], [0, 0, 1, 1], [], []>} : vector<8x128xf32>, vector<128x512xf32>, vector<8x512xf32> -> vector<8x512xf32>
    %121 = arith.addf %119, %120 : vector<8x512xf32>
    %122 = vector.extract_strided_slice %121 {offsets = [0, 0], sizes = [8, 128], strides = [1, 1]} : vector<8x512xf32> to vector<8x128xf32>
    %123 = arith.negf %122 : vector<8x128xf32>
    %124 = math.exp %123 : vector<8x128xf32>
    %cst_44 = arith.constant 1.000000e+00 : f32
    %125 = vector.broadcast %cst_44 : f32 to vector<8x128xf32>
    %126 = arith.addf %125, %124 : vector<8x128xf32>
    %127 = arith.divf %125, %126 : vector<8x128xf32>
    %128 = vector.extract_strided_slice %121 {offsets = [0, 128], sizes = [8, 128], strides = [1, 1]} : vector<8x512xf32> to vector<8x128xf32>
    %129 = arith.negf %128 : vector<8x128xf32>
    %130 = math.exp %129 : vector<8x128xf32>
    %cst_45 = arith.constant 1.000000e+00 : f32
    %131 = vector.broadcast %cst_45 : f32 to vector<8x128xf32>
    %132 = arith.addf %131, %130 : vector<8x128xf32>
    %133 = arith.divf %131, %132 : vector<8x128xf32>
    %134 = vector.extract_strided_slice %121 {offsets = [0, 256], sizes = [8, 128], strides = [1, 1]} : vector<8x512xf32> to vector<8x128xf32>
    %135 = math.tanh %134 : vector<8x128xf32>
    %136 = vector.extract_strided_slice %121 {offsets = [0, 384], sizes = [8, 128], strides = [1, 1]} : vector<8x512xf32> to vector<8x128xf32>
    %137 = arith.negf %136 : vector<8x128xf32>
    %138 = math.exp %137 : vector<8x128xf32>
    %cst_46 = arith.constant 1.000000e+00 : f32
    %139 = vector.broadcast %cst_46 : f32 to vector<8x128xf32>
    %140 = arith.addf %139, %138 : vector<8x128xf32>
    %141 = arith.divf %139, %140 : vector<8x128xf32>
    %142 = arith.mulf %110, %127 : vector<8x128xf32>
    %143 = arith.mulf %133, %135 : vector<8x128xf32>
    %144 = arith.addf %142, %143 : vector<8x128xf32>
    %145 = math.tanh %144 : vector<8x128xf32>
    %146 = arith.mulf %141, %145 : vector<8x128xf32>
    %147 = arith.index_cast %c3_i32 : i32 to index
    %c0_47 = arith.constant 0 : index
    %c0_48 = arith.constant 0 : index
    %148 = vector.load %arg8[%147, %c0_47, %c0_48] : memref<8x8x128xf32, #tpu.memory_space<vmem>>, vector<1x8x128xf32>
    %149 = vector.shape_cast %148 : vector<1x8x128xf32> to vector<8x128xf32>
    %150 = vector.shape_cast %146 : vector<8x128xf32> to vector<1x8x128xf32>
    tpu.vector_store %arg8[%147, %c0_47, %c0_48], %150 {strides = array<i32>} : memref<8x8x128xf32, #tpu.memory_space<vmem>>, vector<1x8x128xf32>,
    %c4_i32 = arith.constant 4 : i32
    %151 = arith.index_cast %c4_i32 : i32 to index
    %c0_49 = arith.constant 0 : index
    %c0_50 = arith.constant 0 : index
    %152 = vector.load %arg11[%151, %c0_49, %c0_50] : memref<8x8x512xf32, #tpu.memory_space<vmem>>, vector<1x8x512xf32>
    %153 = vector.shape_cast %152 : vector<1x8x512xf32> to vector<8x512xf32>
    %cst_51 = arith.constant dense<0.000000e+00> : vector<8x512xf32>
    %154 = tpu.matmul %146, %12, %cst_51 {dimension_numbers = #tpu.dot_dimension_numbers<[1], [0], [0], [1], [0, 0, 1, 1], [], []>} : vector<8x128xf32>, vector<128x512xf32>, vector<8x512xf32> -> vector<8x512xf32>
    %155 = arith.addf %153, %154 : vector<8x512xf32>
    %156 = vector.extract_strided_slice %155 {offsets = [0, 0], sizes = [8, 128], strides = [1, 1]} : vector<8x512xf32> to vector<8x128xf32>
    %157 = arith.negf %156 : vector<8x128xf32>
    %158 = math.exp %157 : vector<8x128xf32>
    %cst_52 = arith.constant 1.000000e+00 : f32
    %159 = vector.broadcast %cst_52 : f32 to vector<8x128xf32>
    %160 = arith.addf %159, %158 : vector<8x128xf32>
    %161 = arith.divf %159, %160 : vector<8x128xf32>
    %162 = vector.extract_strided_slice %155 {offsets = [0, 128], sizes = [8, 128], strides = [1, 1]} : vector<8x512xf32> to vector<8x128xf32>
    %163 = arith.negf %162 : vector<8x128xf32>
    %164 = math.exp %163 : vector<8x128xf32>
    %cst_53 = arith.constant 1.000000e+00 : f32
    %165 = vector.broadcast %cst_53 : f32 to vector<8x128xf32>
    %166 = arith.addf %165, %164 : vector<8x128xf32>
    %167 = arith.divf %165, %166 : vector<8x128xf32>
    %168 = vector.extract_strided_slice %155 {offsets = [0, 256], sizes = [8, 128], strides = [1, 1]} : vector<8x512xf32> to vector<8x128xf32>
    %169 = math.tanh %168 : vector<8x128xf32>
    %170 = vector.extract_strided_slice %155 {offsets = [0, 384], sizes = [8, 128], strides = [1, 1]} : vector<8x512xf32> to vector<8x128xf32>
    %171 = arith.negf %170 : vector<8x128xf32>
    %172 = math.exp %171 : vector<8x128xf32>
    %cst_54 = arith.constant 1.000000e+00 : f32
    %173 = vector.broadcast %cst_54 : f32 to vector<8x128xf32>
    %174 = arith.addf %173, %172 : vector<8x128xf32>
    %175 = arith.divf %173, %174 : vector<8x128xf32>
    %176 = arith.mulf %144, %161 : vector<8x128xf32>
    %177 = arith.mulf %167, %169 : vector<8x128xf32>
    %178 = arith.addf %176, %177 : vector<8x128xf32>
    %179 = math.tanh %178 : vector<8x128xf32>
    %180 = arith.mulf %175, %179 : vector<8x128xf32>
    %181 = arith.index_cast %c4_i32 : i32 to index
    %c0_55 = arith.constant 0 : index
    %c0_56 = arith.constant 0 : index
    %182 = vector.load %arg8[%181, %c0_55, %c0_56] : memref<8x8x128xf32, #tpu.memory_space<vmem>>, vector<1x8x128xf32>
    %183 = vector.shape_cast %182 : vector<1x8x128xf32> to vector<8x128xf32>
    %184 = vector.shape_cast %180 : vector<8x128xf32> to vector<1x8x128xf32>
    tpu.vector_store %arg8[%181, %c0_55, %c0_56], %184 {strides = array<i32>} : memref<8x8x128xf32, #tpu.memory_space<vmem>>, vector<1x8x128xf32>,
    %c5_i32 = arith.constant 5 : i32
    %185 = arith.index_cast %c5_i32 : i32 to index
    %c0_57 = arith.constant 0 : index
    %c0_58 = arith.constant 0 : index
    %186 = vector.load %arg11[%185, %c0_57, %c0_58] : memref<8x8x512xf32, #tpu.memory_space<vmem>>, vector<1x8x512xf32>
    %187 = vector.shape_cast %186 : vector<1x8x512xf32> to vector<8x512xf32>
    %cst_59 = arith.constant dense<0.000000e+00> : vector<8x512xf32>
    %188 = tpu.matmul %180, %12, %cst_59 {dimension_numbers = #tpu.dot_dimension_numbers<[1], [0], [0], [1], [0, 0, 1, 1], [], []>} : vector<8x128xf32>, vector<128x512xf32>, vector<8x512xf32> -> vector<8x512xf32>
    %189 = arith.addf %187, %188 : vector<8x512xf32>
    %190 = vector.extract_strided_slice %189 {offsets = [0, 0], sizes = [8, 128], strides = [1, 1]} : vector<8x512xf32> to vector<8x128xf32>
    %191 = arith.negf %190 : vector<8x128xf32>
    %192 = math.exp %191 : vector<8x128xf32>
    %cst_60 = arith.constant 1.000000e+00 : f32
    %193 = vector.broadcast %cst_60 : f32 to vector<8x128xf32>
    %194 = arith.addf %193, %192 : vector<8x128xf32>
    %195 = arith.divf %193, %194 : vector<8x128xf32>
    %196 = vector.extract_strided_slice %189 {offsets = [0, 128], sizes = [8, 128], strides = [1, 1]} : vector<8x512xf32> to vector<8x128xf32>
    %197 = arith.negf %196 : vector<8x128xf32>
    %198 = math.exp %197 : vector<8x128xf32>
    %cst_61 = arith.constant 1.000000e+00 : f32
    %199 = vector.broadcast %cst_61 : f32 to vector<8x128xf32>
    %200 = arith.addf %199, %198 : vector<8x128xf32>
    %201 = arith.divf %199, %200 : vector<8x128xf32>
    %202 = vector.extract_strided_slice %189 {offsets = [0, 256], sizes = [8, 128], strides = [1, 1]} : vector<8x512xf32> to vector<8x128xf32>
    %203 = math.tanh %202 : vector<8x128xf32>
    %204 = vector.extract_strided_slice %189 {offsets = [0, 384], sizes = [8, 128], strides = [1, 1]} : vector<8x512xf32> to vector<8x128xf32>
    %205 = arith.negf %204 : vector<8x128xf32>
    %206 = math.exp %205 : vector<8x128xf32>
    %cst_62 = arith.constant 1.000000e+00 : f32
    %207 = vector.broadcast %cst_62 : f32 to vector<8x128xf32>
    %208 = arith.addf %207, %206 : vector<8x128xf32>
    %209 = arith.divf %207, %208 : vector<8x128xf32>
    %210 = arith.mulf %178, %195 : vector<8x128xf32>
    %211 = arith.mulf %201, %203 : vector<8x128xf32>
    %212 = arith.addf %210, %211 : vector<8x128xf32>
    %213 = math.tanh %212 : vector<8x128xf32>
    %214 = arith.mulf %209, %213 : vector<8x128xf32>
    %215 = arith.index_cast %c5_i32 : i32 to index
    %c0_63 = arith.constant 0 : index
    %c0_64 = arith.constant 0 : index
    %216 = vector.load %arg8[%215, %c0_63, %c0_64] : memref<8x8x128xf32, #tpu.memory_space<vmem>>, vector<1x8x128xf32>
    %217 = vector.shape_cast %216 : vector<1x8x128xf32> to vector<8x128xf32>
    %218 = vector.shape_cast %214 : vector<8x128xf32> to vector<1x8x128xf32>
    tpu.vector_store %arg8[%215, %c0_63, %c0_64], %218 {strides = array<i32>} : memref<8x8x128xf32, #tpu.memory_space<vmem>>, vector<1x8x128xf32>,
    %c6_i32 = arith.constant 6 : i32
    %219 = arith.index_cast %c6_i32 : i32 to index
    %c0_65 = arith.constant 0 : index
    %c0_66 = arith.constant 0 : index
    %220 = vector.load %arg11[%219, %c0_65, %c0_66] : memref<8x8x512xf32, #tpu.memory_space<vmem>>, vector<1x8x512xf32>
    %221 = vector.shape_cast %220 : vector<1x8x512xf32> to vector<8x512xf32>
    %cst_67 = arith.constant dense<0.000000e+00> : vector<8x512xf32>
    %222 = tpu.matmul %214, %12, %cst_67 {dimension_numbers = #tpu.dot_dimension_numbers<[1], [0], [0], [1], [0, 0, 1, 1], [], []>} : vector<8x128xf32>, vector<128x512xf32>, vector<8x512xf32> -> vector<8x512xf32>
    %223 = arith.addf %221, %222 : vector<8x512xf32>
    %224 = vector.extract_strided_slice %223 {offsets = [0, 0], sizes = [8, 128], strides = [1, 1]} : vector<8x512xf32> to vector<8x128xf32>
    %225 = arith.negf %224 : vector<8x128xf32>
    %226 = math.exp %225 : vector<8x128xf32>
    %cst_68 = arith.constant 1.000000e+00 : f32
    %227 = vector.broadcast %cst_68 : f32 to vector<8x128xf32>
    %228 = arith.addf %227, %226 : vector<8x128xf32>
    %229 = arith.divf %227, %228 : vector<8x128xf32>
    %230 = vector.extract_strided_slice %223 {offsets = [0, 128], sizes = [8, 128], strides = [1, 1]} : vector<8x512xf32> to vector<8x128xf32>
    %231 = arith.negf %230 : vector<8x128xf32>
    %232 = math.exp %231 : vector<8x128xf32>
    %cst_69 = arith.constant 1.000000e+00 : f32
    %233 = vector.broadcast %cst_69 : f32 to vector<8x128xf32>
    %234 = arith.addf %233, %232 : vector<8x128xf32>
    %235 = arith.divf %233, %234 : vector<8x128xf32>
    %236 = vector.extract_strided_slice %223 {offsets = [0, 256], sizes = [8, 128], strides = [1, 1]} : vector<8x512xf32> to vector<8x128xf32>
    %237 = math.tanh %236 : vector<8x128xf32>
    %238 = vector.extract_strided_slice %223 {offsets = [0, 384], sizes = [8, 128], strides = [1, 1]} : vector<8x512xf32> to vector<8x128xf32>
    %239 = arith.negf %238 : vector<8x128xf32>
    %240 = math.exp %239 : vector<8x128xf32>
    %cst_70 = arith.constant 1.000000e+00 : f32
    %241 = vector.broadcast %cst_70 : f32 to vector<8x128xf32>
    %242 = arith.addf %241, %240 : vector<8x128xf32>
    %243 = arith.divf %241, %242 : vector<8x128xf32>
    %244 = arith.mulf %212, %229 : vector<8x128xf32>
    %245 = arith.mulf %235, %237 : vector<8x128xf32>
    %246 = arith.addf %244, %245 : vector<8x128xf32>
    %247 = math.tanh %246 : vector<8x128xf32>
    %248 = arith.mulf %243, %247 : vector<8x128xf32>
    %249 = arith.index_cast %c6_i32 : i32 to index
    %c0_71 = arith.constant 0 : index
    %c0_72 = arith.constant 0 : index
    %250 = vector.load %arg8[%249, %c0_71, %c0_72] : memref<8x8x128xf32, #tpu.memory_space<vmem>>, vector<1x8x128xf32>
    %251 = vector.shape_cast %250 : vector<1x8x128xf32> to vector<8x128xf32>
    %252 = vector.shape_cast %248 : vector<8x128xf32> to vector<1x8x128xf32>
    tpu.vector_store %arg8[%249, %c0_71, %c0_72], %252 {strides = array<i32>} : memref<8x8x128xf32, #tpu.memory_space<vmem>>, vector<1x8x128xf32>,
    %c7_i32 = arith.constant 7 : i32
    %253 = arith.index_cast %c7_i32 : i32 to index
    %c0_73 = arith.constant 0 : index
    %c0_74 = arith.constant 0 : index
    %254 = vector.load %arg11[%253, %c0_73, %c0_74] : memref<8x8x512xf32, #tpu.memory_space<vmem>>, vector<1x8x512xf32>
    %255 = vector.shape_cast %254 : vector<1x8x512xf32> to vector<8x512xf32>
    %cst_75 = arith.constant dense<0.000000e+00> : vector<8x512xf32>
    %256 = tpu.matmul %248, %12, %cst_75 {dimension_numbers = #tpu.dot_dimension_numbers<[1], [0], [0], [1], [0, 0, 1, 1], [], []>} : vector<8x128xf32>, vector<128x512xf32>, vector<8x512xf32> -> vector<8x512xf32>
    %257 = arith.addf %255, %256 : vector<8x512xf32>
    %258 = vector.extract_strided_slice %257 {offsets = [0, 0], sizes = [8, 128], strides = [1, 1]} : vector<8x512xf32> to vector<8x128xf32>
    %259 = arith.negf %258 : vector<8x128xf32>
    %260 = math.exp %259 : vector<8x128xf32>
    %cst_76 = arith.constant 1.000000e+00 : f32
    %261 = vector.broadcast %cst_76 : f32 to vector<8x128xf32>
    %262 = arith.addf %261, %260 : vector<8x128xf32>
    %263 = arith.divf %261, %262 : vector<8x128xf32>
    %264 = vector.extract_strided_slice %257 {offsets = [0, 128], sizes = [8, 128], strides = [1, 1]} : vector<8x512xf32> to vector<8x128xf32>
    %265 = arith.negf %264 : vector<8x128xf32>
    %266 = math.exp %265 : vector<8x128xf32>
    %cst_77 = arith.constant 1.000000e+00 : f32
    %267 = vector.broadcast %cst_77 : f32 to vector<8x128xf32>
    %268 = arith.addf %267, %266 : vector<8x128xf32>
    %269 = arith.divf %267, %268 : vector<8x128xf32>
    %270 = vector.extract_strided_slice %257 {offsets = [0, 256], sizes = [8, 128], strides = [1, 1]} : vector<8x512xf32> to vector<8x128xf32>
    %271 = math.tanh %270 : vector<8x128xf32>
    %272 = vector.extract_strided_slice %257 {offsets = [0, 384], sizes = [8, 128], strides = [1, 1]} : vector<8x512xf32> to vector<8x128xf32>
    %273 = arith.negf %272 : vector<8x128xf32>
    %274 = math.exp %273 : vector<8x128xf32>
    %cst_78 = arith.constant 1.000000e+00 : f32
    %275 = vector.broadcast %cst_78 : f32 to vector<8x128xf32>
    %276 = arith.addf %275, %274 : vector<8x128xf32>
    %277 = arith.divf %275, %276 : vector<8x128xf32>
    %278 = arith.mulf %246, %263 : vector<8x128xf32>
    %279 = arith.mulf %269, %271 : vector<8x128xf32>
    %280 = arith.addf %278, %279 : vector<8x128xf32>
    %281 = math.tanh %280 : vector<8x128xf32>
    %282 = arith.mulf %277, %281 : vector<8x128xf32>
    %283 = arith.index_cast %c7_i32 : i32 to index
    %c0_79 = arith.constant 0 : index
    %c0_80 = arith.constant 0 : index
    %284 = vector.load %arg8[%283, %c0_79, %c0_80] : memref<8x8x128xf32, #tpu.memory_space<vmem>>, vector<1x8x128xf32>
    %285 = vector.shape_cast %284 : vector<1x8x128xf32> to vector<8x128xf32>
    %286 = vector.shape_cast %282 : vector<8x128xf32> to vector<1x8x128xf32>
    tpu.vector_store %arg8[%283, %c0_79, %c0_80], %286 {strides = array<i32>} : memref<8x8x128xf32, #tpu.memory_space<vmem>>, vector<1x8x128xf32>,
    %c8_i32 = arith.constant 8 : i32
    %c0_81 = arith.constant 0 : index
    %c0_82 = arith.constant 0 : index
    %287 = vector.load %arg12[%c0_81, %c0_82] : memref<8x128xf32, #tpu.memory_space<vmem>>, vector<8x128xf32>
    tpu.vector_store %arg12[%c0_81, %c0_82], %282 {strides = array<i32>} : memref<8x128xf32, #tpu.memory_space<vmem>>, vector<8x128xf32>,
    %c0_83 = arith.constant 0 : index
    %c0_84 = arith.constant 0 : index
    %288 = vector.load %arg13[%c0_83, %c0_84] : memref<8x128xf32, #tpu.memory_space<vmem>>, vector<8x128xf32>
    tpu.vector_store %arg13[%c0_83, %c0_84], %280 {strides = array<i32>} : memref<8x128xf32, #tpu.memory_space<vmem>>, vector<8x128xf32>,
    %c0_i32_85 = arith.constant 0 : i32
    %289 = arith.cmpi eq, %arg1, %c0_i32_85 : i32
    %290 = arith.extui %289 : i1 to i32
    %c0_i32_86 = arith.constant 0 : i32
    %291 = arith.cmpi ne, %290, %c0_i32_86 : i32
    scf.if %291 {
      %c0_87 = arith.constant 0 : index
      %c0_88 = arith.constant 0 : index
      %c0_89 = arith.constant 0 : index
      %292 = vector.load %arg9[%c0_87, %c0_88, %c0_89] : memref<1x8x128xf32, #tpu.memory_space<vmem>>, vector<1x8x128xf32>
      %293 = vector.shape_cast %292 : vector<1x8x128xf32> to vector<8x128xf32>
      %294 = vector.shape_cast %282 : vector<8x128xf32> to vector<1x8x128xf32>
      tpu.vector_store %arg9[%c0_87, %c0_88, %c0_89], %294 {strides = array<i32>} : memref<1x8x128xf32, #tpu.memory_space<vmem>>, vector<1x8x128xf32>,
      %c0_90 = arith.constant 0 : index
      %c0_91 = arith.constant 0 : index
      %c0_92 = arith.constant 0 : index
      %295 = vector.load %arg10[%c0_90, %c0_91, %c0_92] : memref<1x8x128xf32, #tpu.memory_space<vmem>>, vector<1x8x128xf32>
      %296 = vector.shape_cast %295 : vector<1x8x128xf32> to vector<8x128xf32>
      %297 = vector.shape_cast %280 : vector<8x128xf32> to vector<1x8x128xf32>
      tpu.vector_store %arg10[%c0_90, %c0_91, %c0_92], %297 {strides = array<i32>} : memref<1x8x128xf32, #tpu.memory_space<vmem>>, vector<1x8x128xf32>,
    } else {
    }
    return
  }
  func.func @transform_0(%arg0: i32, %arg1: i32) -> (i32, i32, i32) {
    %c0_i32 = arith.constant 0 : i32
    %c0_i32_0 = arith.constant 0 : i32
    return %arg1, %arg0, %c0_i32 : i32, i32, i32
  }
  func.func @transform_1(%arg0: i32, %arg1: i32) -> (i32, i32) {
    %c0_i32 = arith.constant 0 : i32
    %c0_i32_0 = arith.constant 0 : i32
    %c0_i32_1 = arith.constant 0 : i32
    return %c0_i32, %c0_i32_0 : i32, i32
  }
  func.func @transform_2(%arg0: i32, %arg1: i32) -> (i32, i32) {
    %c0_i32 = arith.constant 0 : i32
    %c0_i32_0 = arith.constant 0 : i32
    %c0_i32_1 = arith.constant 0 : i32
    return %c0_i32, %c0_i32_0 : i32, i32
  }
  func.func @transform_3(%arg0: i32, %arg1: i32) -> (i32, i32) {
    %c0_i32 = arith.constant 0 : i32
    %c0_i32_0 = arith.constant 0 : i32
    %c0_i32_1 = arith.constant 0 : i32
    return %c0_i32, %c0_i32_0 : i32, i32
  }
  func.func @transform_4(%arg0: i32, %arg1: i32) -> (i32, i32, i32) {
    %c0_i32 = arith.constant 0 : i32
    %c0_i32_0 = arith.constant 0 : i32
    %c0_i32_1 = arith.constant 0 : i32
    return %c0_i32, %arg0, %c0_i32_0 : i32, i32, i32
  }
  func.func @transform_5(%arg0: i32, %arg1: i32) -> (i32, i32, i32) {
    %c0_i32 = arith.constant 0 : i32
    %c0_i32_0 = arith.constant 0 : i32
    %c0_i32_1 = arith.constant 0 : i32
    return %c0_i32, %arg0, %c0_i32_0 : i32, i32, i32
  }
  func.func @transform_6(%arg0: i32, %arg1: i32) -> (i32, i32, i32) {
    %c0_i32 = arith.constant 0 : i32
    %c0_i32_0 = arith.constant 0 : i32
    return %arg1, %arg0, %c0_i32 : i32, i32, i32
  }
  func.func @transform_7(%arg0: i32, %arg1: i32) -> (i32, i32, i32) {
    %c0_i32 = arith.constant 0 : i32
    %c0_i32_0 = arith.constant 0 : i32
    %c0_i32_1 = arith.constant 0 : i32
    return %c0_i32, %arg0, %c0_i32_0 : i32, i32, i32
  }
  func.func @transform_8(%arg0: i32, %arg1: i32) -> (i32, i32, i32) {
    %c0_i32 = arith.constant 0 : i32
    %c0_i32_0 = arith.constant 0 : i32
    %c0_i32_1 = arith.constant 0 : i32
    return %c0_i32, %arg0, %c0_i32_0 : i32, i32, i32
  }
}

</mosaic_0001>

<llo_original>
// kernel: tpu_custom_call.1
$region0: #{tpu_custom_call.1}
  #allocation0 [shape = 'u32[]', space=smem, size = 0x4, offset = 0x4, fixed_abs, tag = 'smem constant byte address 0x4 - core index']
  #allocation1 [shape = 'u32[144,128]{1,0:T(1,128)}', space=vmem, size = 0x12000, scoped, tag = 'internal scratch']
  #allocation2 [shape = 'f32[8,8,512]{2,1,0:T(8,128)}', space=vmem, size = 0x20000, scoped, tag = 'scratch operand']
  #allocation3 [shape = 'f32[8,128]{1,0:T(8,128)}', space=vmem, size = 0x1000, scoped, tag = 'scratch operand']
  #allocation4 [shape = 'f32[8,128]{1,0:T(8,128)}', space=vmem, size = 0x1000, scoped, tag = 'scratch operand']
  %s0 = inlined_call_operand.vmem [shape: f32[8,8,4], index: 0, kind: input, shape index: {}]
  %s1 = inlined_call_operand.vmem [shape: f32[4,512], index: 1, kind: input, shape index: {}]
  %s2 = inlined_call_operand.hbm [shape: f32[128,512], index: 2, kind: input, shape index: {}]
  %s3 = inlined_call_operand.vmem [shape: f32[1,512], index: 3, kind: input, shape index: {}]
  %s4 = inlined_call_operand.vmem [shape: f32[1,8,128], index: 4, kind: input, shape index: {}]
  %s5 = inlined_call_operand.vmem [shape: f32[1,8,128], index: 5, kind: input, shape index: {}]
  %s6 = inlined_call_operand.hbm [shape: f32[8,8,128], index: 6, kind: output, shape index: {0}]
  %s7 = inlined_call_operand.hbm [shape: f32[1,8,128], index: 7, kind: output, shape index: {1}]
  %s8 = inlined_call_operand.hbm [shape: f32[1,8,128], index: 8, kind: output, shape index: {2}]
  %9 = xla_tuple %s6, %s7, %s8
  %s10 = sld [smem:[#allocation0]]
  $region62: #{tpu_custom_call.1} parent=0
    _
  %s12 = ssub.s32 1, %s10
  %s13 = scalar_select 0, %s12, %s10
  $region1: #{tpu_custom_call.1} parent=0
    #allocation5 [shape = 'u8[262144]{0}', space=vmem, size = 0x40000, scoped, tag = 'input window, operand 2, single buffered']
    #allocation6 [shape = 's32[1]{0}', space=sflag, size = 0x4, scoped, tag = 'scoped memory for tpu_custom_call.1']
    #allocation7 [shape = 's32[1]{0}', space=sflag, size = 0x4, scoped, tag = 'scoped memory for tpu_custom_call.1']
    #allocation8 [shape = 'u8[32768]{0}', space=vmem, size = 0x8000, scoped, tag = 'output window, operand 0, single buffered']
    #allocation9 [shape = 'u8[4096]{0}', space=vmem, size = 0x1000, scoped, tag = 'output window, operand 1, single buffered']
    #allocation10 [shape = 's32[1]{0}', space=sflag, size = 0x4, scoped, tag = 'scoped memory for tpu_custom_call.1']
    #allocation11 [shape = 'u8[4096]{0}', space=vmem, size = 0x1000, scoped, tag = 'output window, operand 2, single buffered']
    %14 = vsyncpa [#allocation6], 0
    %15 = vsyncpa [#allocation7], 0
    %16 = vsyncpa [#allocation10], 0
    // Predicated region
    $region2: #{tpu_custom_call.1} parent=1 // pred_check
      _
    $region3: #{tpu_custom_call.1} parent=1 // pred_check_branch
      %18 = sbr.rel (0) target = $region5
    $region4: #{tpu_custom_call.1} parent=1 // pred_region
      _
    $region5: #{tpu_custom_call.1} parent=1 // pred_fallthru
      _
    // Predicated region
    $region6: #{tpu_custom_call.1} parent=1 // pred_check
      _
    $region7: #{tpu_custom_call.1} parent=1 // pred_check_branch
      %20 = sbr.rel (0) target = $region9
    $region8: #{tpu_custom_call.1} parent=1 // pred_region
      _
    $region9: #{tpu_custom_call.1} parent=1 // pred_fallthru
      _
    // Predicated region
    $region10: #{tpu_custom_call.1} parent=1 // pred_check
      _
    $region11: #{tpu_custom_call.1} parent=1 // pred_check_branch
      %22 = sbr.rel (0) target = $region13
    $region12: #{tpu_custom_call.1} parent=1 // pred_region
      %s24 = ssub.s32 8192, 8192
      %25 = vsyncadd [#allocation6], %s24
      %s26 = sshll.u32 [#allocation5], 4
      %s27 = int_to_ptr.vmem [resolvable:$true] %s26
      %32 = dma.hbm_to_vmem [thread:$0]  %s2, 8192, %s27, [#allocation6], 512, 512, 32
    $region13: #{tpu_custom_call.1} parent=1 // pred_fallthru
      _
    // Predicated region
    $region14: #{tpu_custom_call.1} parent=1 // pred_check
      _
    $region15: #{tpu_custom_call.1} parent=1 // pred_check_branch
      %34 = sbr.rel (0) target = $region17
    $region16: #{tpu_custom_call.1} parent=1 // pred_region
      _
    $region17: #{tpu_custom_call.1} parent=1 // pred_fallthru
      _
    // Predicated region
    $region18: #{tpu_custom_call.1} parent=1 // pred_check
      _
    $region19: #{tpu_custom_call.1} parent=1 // pred_check_branch
      %36 = sbr.rel (0) target = $region21
    $region20: #{tpu_custom_call.1} parent=1 // pred_region
      _
    $region21: #{tpu_custom_call.1} parent=1 // pred_fallthru
      _
    // Predicated region
    $region22: #{tpu_custom_call.1} parent=1 // pred_check
      _
    $region23: #{tpu_custom_call.1} parent=1 // pred_check_branch
      %38 = sbr.rel (0) target = $region25
    $region24: #{tpu_custom_call.1} parent=1 // pred_region
      _
    $region25: #{tpu_custom_call.1} parent=1 // pred_fallthru
      _
    // Predicated region
    $region26: #{tpu_custom_call.1} parent=1 // pred_check
      _
    $region27: #{tpu_custom_call.1} parent=1 // pred_check_branch
      %40 = sbr.rel (0) target = $region29
    $region28: #{tpu_custom_call.1} parent=1 // pred_region
      %41 = dma.done [#allocation6], 8192
    $region29: #{tpu_custom_call.1} parent=1 // pred_fallthru
      _
    %p42 = scmp.eq.s32.totalorder 0, 0
    // Predicated region
    $region30: #{tpu_custom_call.1} parent=1 // pred_check
      %p43 = pneg %p42
    $region31: #{tpu_custom_call.1} parent=1 // pred_check_branch
      %45 = sbr.rel (%p43) target = $region33
    $region32: #{tpu_custom_call.1} parent=1 // pred_region
      %v46 = vld [vmem:[%s4] sm:$0xff]
      %47 = vst [vmem:[#allocation3] sm:$0xff] %v46
      %v48 = vld [vmem:[%s5] sm:$0xff]
      %49 = vst [vmem:[#allocation4] sm:$0xff] %v48
    $region33: #{tpu_custom_call.1} parent=1 // pred_fallthru
      _
    %v50 = vld [vmem:[%s1] sm:$0xff]
    %v51 = vld [vmem:[%s1 + $0x8] sm:$0xff]
    %v52 = vld [vmem:[%s0] sm:$0xff]
    %v53 = vld [vmem:[%s0 + $0x8] sm:$0xff]
    %v54 = vld [vmem:[%s0 + $0x10] sm:$0xff]
    %v55 = vld [vmem:[%s0 + $0x18] sm:$0xff]
    %v56 = vld [vmem:[%s0 + $0x20] sm:$0xff]
    %v57 = vld [vmem:[%s0 + $0x28] sm:$0xff]
    %v58 = vld [vmem:[%s0 + $0x30] sm:$0xff]
    %v59 = vld [vmem:[%s0 + $0x38] sm:$0xff]
    %v60 = vld [vmem:[%s3] sm:$0xf]
    %v62 = vlaneseq
    %v63 = vshrl.u32 %v62, 7
    %v64 = vsub.s32 0, %v63
    %v65 = vrot.slane %v60, %v64
    %v66 = vlaneseq
    %v67 = vshrl.u32 %v66, 7
    %v68 = vsub.s32 1, %v67
    %v69 = vrot.slane %v60, %v68
    %v70 = vlaneseq
    %v71 = vshrl.u32 %v70, 7
    %v72 = vsub.s32 2, %v71
    %v73 = vrot.slane %v60, %v72
    %v74 = vlaneseq
    %v75 = vshrl.u32 %v74, 7
    %v76 = vsub.s32 3, %v75
    %v77 = vrot.slane %v60, %v76
    %v84 = vcombine.high %v50, %v50
    %v85 = vcombine.high %v51, %v51
    %vm86 = vcmask 31744
    %v88 = vsel %vm86, %v52, 0
    %v91 = vsel %vm86, %v53, 0
    %v94 = vsel %vm86, %v54, 0
    %v97 = vsel %vm86, %v55, 0
    %v100 = vsel %vm86, %v56, 0
    %v103 = vsel %vm86, %v57, 0
    %v106 = vsel %vm86, %v58, 0
    %v109 = vsel %vm86, %v59, 0
    %vm111 = vcmask 1043456
    %v112 = vsel %vm111, %v50, 0
    %v114 = vsel %vm111, %v84, 0
    %v116 = vsel %vm111, %v51, 0
    %v118 = vsel %vm111, %v85, 0
    %120 = vmatprep.subr.mxu0 0.0
    %121 = vmatpush1.msra.mxu0 0.0
    %122 = vmatprep.subr.mxu0 0.0
    %123 = vmatpush1.msra.mxu0 0.0
    %124 = vmatprep.subr.mxu0 0.0
    %125 = vmatpush1.msra.mxu0 0.0
    %126 = vmatprep.subr.mxu0 0.0
    %127 = vmatpush1.msra.mxu0 0.0
    %128 = vmatprep.subr.mxu0 0.0
    %129 = vmatpush1.msra.mxu0 0.0
    %130 = vmatprep.subr.mxu0 0.0
    %131 = vmatpush1.msra.mxu0 0.0
    %132 = vmatprep.subr.mxu0 0.0
    %133 = vmatpush1.msra.mxu0 0.0
    %134 = vmatprep.subr.mxu0 0.0
    %135 = vmatpush1.msra.mxu0 0.0
    %136 = vmatprep.subr.mxu0 0.0
    %137 = vmatpush1.msra.mxu0 0.0
    %138 = vmatprep.subr.mxu0 0.0
    %139 = vmatpush1.msra.mxu0 0.0
    %140 = vmatprep.subr.mxu0 0.0
    %141 = vmatpush1.msra.mxu0 0.0
    %142 = vmatprep.subr.mxu0 0.0
    %143 = vmatpush1.msra.mxu0 0.0
    %144 = vmatprep.subr.mxu0 0.0
    %145 = vmatpush1.msra.mxu0 0.0
    %146 = vmatprep.subr.mxu0 0.0
    %147 = vmatpush1.msra.mxu0 0.0
    %148 = vmatprep.subr.mxu0 0.0
    %149 = vmatpush1.msra.mxu0 0.0
    %150 = vmatprep.subr.mxu0 %v114
    %151 = vmatpush1.msra.mxu0 %v112
    %152 = vmatprep.subr.mxu0 0.0
    %153 = vmatpush2.msra.mxu0 0.0
    %154 = vmatprep.subr.mxu0 0.0
    %155 = vmatpush2.msra.mxu0 0.0
    %156 = vmatprep.subr.mxu0 0.0
    %157 = vmatpush2.msra.mxu0 0.0
    %158 = vmatprep.subr.mxu0 0.0
    %159 = vmatpush2.msra.mxu0 0.0
    %160 = vmatprep.subr.mxu0 0.0
    %161 = vmatpush2.msra.mxu0 0.0
    %162 = vmatprep.subr.mxu0 0.0
    %163 = vmatpush2.msra.mxu0 0.0
    %164 = vmatprep.subr.mxu0 0.0
    %165 = vmatpush2.msra.mxu0 0.0
    %166 = vmatprep.subr.mxu0 0.0
    %167 = vmatpush2.msra.mxu0 0.0
    %168 = vmatprep.subr.mxu0 0.0
    %169 = vmatpush2.msra.mxu0 0.0
    %170 = vmatprep.subr.mxu0 0.0
    %171 = vmatpush2.msra.mxu0 0.0
    %172 = vmatprep.subr.mxu0 0.0
    %173 = vmatpush2.msra.mxu0 0.0
    %174 = vmatprep.subr.mxu0 0.0
    %175 = vmatpush2.msra.mxu0 0.0
    %176 = vmatprep.subr.mxu0 0.0
    %177 = vmatpush2.msra.mxu0 0.0
    %178 = vmatprep.subr.mxu0 0.0
    %179 = vmatpush2.msra.mxu0 0.0
    %180 = vmatprep.subr.mxu0 0.0
    %181 = vmatpush2.msra.mxu0 0.0
    %182 = vmatprep.subr.mxu0 0.0
    %183 = vmatpush2.msra.mxu0 0.0
    %184 = vmatprep.mubr.f32.mxu0 0.0
    %185 = vmatmul.mubr.f32.gmra.mxu0 %v88
    %v186 = vpop.f32.mrf.mxu0
    %v187 = vadd.f32 %v65, %v186
    %v188 = vpop.f32.mrf.mxu0
    %v189 = vadd.f32 %v69, %v188
    %190 = vmatprep.mubr.f32.mxu0 0.0
    %191 = vmatmul.mubr.f32.gmra.mxu0 %v91
    %v192 = vpop.f32.mrf.mxu0
    %v193 = vadd.f32 %v65, %v192
    %v194 = vpop.f32.mrf.mxu0
    %v195 = vadd.f32 %v69, %v194
    %196 = vmatprep.mubr.f32.mxu0 0.0
    %197 = vmatmul.mubr.f32.gmra.mxu0 %v94
    %v198 = vpop.f32.mrf.mxu0
    %v199 = vadd.f32 %v65, %v198
    %v200 = vpop.f32.mrf.mxu0
    %v201 = vadd.f32 %v69, %v200
    %202 = vmatprep.mubr.f32.mxu0 0.0
    %203 = vmatmul.mubr.f32.gmra.mxu0 %v97
    %v204 = vpop.f32.mrf.mxu0
    %v205 = vadd.f32 %v65, %v204
    %v206 = vpop.f32.mrf.mxu0
    %v207 = vadd.f32 %v69, %v206
    %208 = vmatprep.mubr.f32.mxu0 0.0
    %209 = vmatmul.mubr.f32.gmra.mxu0 %v100
    %v210 = vpop.f32.mrf.mxu0
    %v211 = vadd.f32 %v65, %v210
    %v212 = vpop.f32.mrf.mxu0
    %v213 = vadd.f32 %v69, %v212
    %214 = vmatprep.mubr.f32.mxu0 0.0
    %215 = vmatmul.mubr.f32.gmra.mxu0 %v103
    %v216 = vpop.f32.mrf.mxu0
    %v217 = vadd.f32 %v65, %v216
    %v218 = vpop.f32.mrf.mxu0
    %v219 = vadd.f32 %v69, %v218
    %220 = vmatprep.mubr.f32.mxu0 0.0
    %221 = vmatmul.mubr.f32.gmra.mxu0 %v106
    %v222 = vpop.f32.mrf.mxu0
    %v223 = vadd.f32 %v65, %v222
    %v224 = vpop.f32.mrf.mxu0
    %v225 = vadd.f32 %v69, %v224
    %226 = vmatprep.mubr.f32.mxu0 0.0
    %227 = vmatmul.mubr.f32.gmra.mxu0 %v109
    %v228 = vpop.f32.mrf.mxu0
    %v229 = vadd.f32 %v65, %v228
    %v230 = vpop.f32.mrf.mxu0
    %v231 = vadd.f32 %v69, %v230
    %232 = vdwg.mxu0
    %233 = vmatprep.subr.mxu0 0.0
    %234 = vmatpush1.msra.mxu0 0.0
    %235 = vmatprep.subr.mxu0 0.0
    %236 = vmatpush1.msra.mxu0 0.0
    %237 = vmatprep.subr.mxu0 0.0
    %238 = vmatpush1.msra.mxu0 0.0
    %239 = vmatprep.subr.mxu0 0.0
    %240 = vmatpush1.msra.mxu0 0.0
    %241 = vmatprep.subr.mxu0 0.0
    %242 = vmatpush1.msra.mxu0 0.0
    %243 = vmatprep.subr.mxu0 0.0
    %244 = vmatpush1.msra.mxu0 0.0
    %245 = vmatprep.subr.mxu0 0.0
    %246 = vmatpush1.msra.mxu0 0.0
    %247 = vmatprep.subr.mxu0 0.0
    %248 = vmatpush1.msra.mxu0 0.0
    %249 = vmatprep.subr.mxu0 0.0
    %250 = vmatpush1.msra.mxu0 0.0
    %251 = vmatprep.subr.mxu0 0.0
    %252 = vmatpush1.msra.mxu0 0.0
    %253 = vmatprep.subr.mxu0 0.0
    %254 = vmatpush1.msra.mxu0 0.0
    %255 = vmatprep.subr.mxu0 0.0
    %256 = vmatpush1.msra.mxu0 0.0
    %257 = vmatprep.subr.mxu0 0.0
    %258 = vmatpush1.msra.mxu0 0.0
    %259 = vmatprep.subr.mxu0 0.0
    %260 = vmatpush1.msra.mxu0 0.0
    %261 = vmatprep.subr.mxu0 0.0
    %262 = vmatpush1.msra.mxu0 0.0
    %263 = vmatprep.subr.mxu0 %v118
    %264 = vmatpush1.msra.mxu0 %v116
    %265 = vmatprep.subr.mxu0 0.0
    %266 = vmatpush2.msra.mxu0 0.0
    %267 = vmatprep.subr.mxu0 0.0
    %268 = vmatpush2.msra.mxu0 0.0
    %269 = vmatprep.subr.mxu0 0.0
    %270 = vmatpush2.msra.mxu0 0.0
    %271 = vmatprep.subr.mxu0 0.0
    %272 = vmatpush2.msra.mxu0 0.0
    %273 = vmatprep.subr.mxu0 0.0
    %274 = vmatpush2.msra.mxu0 0.0
    %275 = vmatprep.subr.mxu0 0.0
    %276 = vmatpush2.msra.mxu0 0.0
    %277 = vmatprep.subr.mxu0 0.0
    %278 = vmatpush2.msra.mxu0 0.0
    %279 = vmatprep.subr.mxu0 0.0
    %280 = vmatpush2.msra.mxu0 0.0
    %281 = vmatprep.subr.mxu0 0.0
    %282 = vmatpush2.msra.mxu0 0.0
    %283 = vmatprep.subr.mxu0 0.0
    %284 = vmatpush2.msra.mxu0 0.0
    %285 = vmatprep.subr.mxu0 0.0
    %286 = vmatpush2.msra.mxu0 0.0
    %287 = vmatprep.subr.mxu0 0.0
    %288 = vmatpush2.msra.mxu0 0.0
    %289 = vmatprep.subr.mxu0 0.0
    %290 = vmatpush2.msra.mxu0 0.0
    %291 = vmatprep.subr.mxu0 0.0
    %292 = vmatpush2.msra.mxu0 0.0
    %293 = vmatprep.subr.mxu0 0.0
    %294 = vmatpush2.msra.mxu0 0.0
    %295 = vmatprep.subr.mxu0 0.0
    %296 = vmatpush2.msra.mxu0 0.0
    %297 = vmatprep.mubr.f32.mxu0 0.0
    %298 = vmatmul.mubr.f32.gmra.mxu0 %v88
    %v299 = vpop.f32.mrf.mxu0
    %v300 = vadd.f32 %v73, %v299
    %v301 = vpop.f32.mrf.mxu0
    %v302 = vadd.f32 %v77, %v301
    %303 = vmatprep.mubr.f32.mxu0 0.0
    %304 = vmatmul.mubr.f32.gmra.mxu0 %v91
    %v305 = vpop.f32.mrf.mxu0
    %v306 = vadd.f32 %v73, %v305
    %v307 = vpop.f32.mrf.mxu0
    %v308 = vadd.f32 %v77, %v307
    %309 = vmatprep.mubr.f32.mxu0 0.0
    %310 = vmatmul.mubr.f32.gmra.mxu0 %v94
    %v311 = vpop.f32.mrf.mxu0
    %v312 = vadd.f32 %v73, %v311
    %v313 = vpop.f32.mrf.mxu0
    %v314 = vadd.f32 %v77, %v313
    %315 = vmatprep.mubr.f32.mxu0 0.0
    %316 = vmatmul.mubr.f32.gmra.mxu0 %v97
    %v317 = vpop.f32.mrf.mxu0
    %v318 = vadd.f32 %v73, %v317
    %v319 = vpop.f32.mrf.mxu0
    %v320 = vadd.f32 %v77, %v319
    %321 = vmatprep.mubr.f32.mxu0 0.0
    %322 = vmatmul.mubr.f32.gmra.mxu0 %v100
    %v323 = vpop.f32.mrf.mxu0
    %v324 = vadd.f32 %v73, %v323
    %v325 = vpop.f32.mrf.mxu0
    %v326 = vadd.f32 %v77, %v325
    %327 = vmatprep.mubr.f32.mxu0 0.0
    %328 = vmatmul.mubr.f32.gmra.mxu0 %v103
    %v329 = vpop.f32.mrf.mxu0
    %v330 = vadd.f32 %v73, %v329
    %v331 = vpop.f32.mrf.mxu0
    %v332 = vadd.f32 %v77, %v331
    %333 = vmatprep.mubr.f32.mxu0 0.0
    %334 = vmatmul.mubr.f32.gmra.mxu0 %v106
    %v335 = vpop.f32.mrf.mxu0
    %v336 = vadd.f32 %v73, %v335
    %v337 = vpop.f32.mrf.mxu0
    %v338 = vadd.f32 %v77, %v337
    %339 = vmatprep.mubr.f32.mxu0 0.0
    %340 = vmatmul.mubr.f32.gmra.mxu0 %v109
    %v341 = vpop.f32.mrf.mxu0
    %v342 = vadd.f32 %v73, %v341
    %v343 = vpop.f32.mrf.mxu0
    %v344 = vadd.f32 %v77, %v343
    %345 = vdwg.mxu0
    %346 = vst [vmem:[#allocation2] sm:$0xff] %v187
    %347 = vst [vmem:[#allocation2 + $0x8] sm:$0xff] %v189
    %348 = vst [vmem:[#allocation2 + $0x10] sm:$0xff] %v300
    %349 = vst [vmem:[#allocation2 + $0x18] sm:$0xff] %v302
    %350 = vst [vmem:[#allocation2 + $0x20] sm:$0xff] %v193
    %351 = vst [vmem:[#allocation2 + $0x28] sm:$0xff] %v195
    %352 = vst [vmem:[#allocation2 + $0x30] sm:$0xff] %v306
    %353 = vst [vmem:[#allocation2 + $0x38] sm:$0xff] %v308
    %354 = vst [vmem:[#allocation2 + $0x40] sm:$0xff] %v199
    %355 = vst [vmem:[#allocation2 + $0x48] sm:$0xff] %v201
    %356 = vst [vmem:[#allocation2 + $0x50] sm:$0xff] %v312
    %357 = vst [vmem:[#allocation2 + $0x58] sm:$0xff] %v314
    %358 = vst [vmem:[#allocation2 + $0x60] sm:$0xff] %v205
    %359 = vst [vmem:[#allocation2 + $0x68] sm:$0xff] %v207
    %360 = vst [vmem:[#allocation2 + $0x70] sm:$0xff] %v318
    %361 = vst [vmem:[#allocation2 + $0x78] sm:$0xff] %v320
    %362 = vst [vmem:[#allocation2 + $0x80] sm:$0xff] %v211
    %363 = vst [vmem:[#allocation2 + $0x88] sm:$0xff] %v213
    %364 = vst [vmem:[#allocation2 + $0x90] sm:$0xff] %v324
    %365 = vst [vmem:[#allocation2 + $0x98] sm:$0xff] %v326
    %366 = vst [vmem:[#allocation2 + $0xa0] sm:$0xff] %v217
    %367 = vst [vmem:[#allocation2 + $0xa8] sm:$0xff] %v219
    %368 = vst [vmem:[#allocation2 + $0xb0] sm:$0xff] %v330
    %369 = vst [vmem:[#allocation2 + $0xb8] sm:$0xff] %v332
    %370 = vst [vmem:[#allocation2 + $0xc0] sm:$0xff] %v223
    %371 = vst [vmem:[#allocation2 + $0xc8] sm:$0xff] %v225
    %372 = vst [vmem:[#allocation2 + $0xd0] sm:$0xff] %v336
    %373 = vst [vmem:[#allocation2 + $0xd8] sm:$0xff] %v338
    %374 = vst [vmem:[#allocation2 + $0xe0] sm:$0xff] %v229
    %375 = vst [vmem:[#allocation2 + $0xe8] sm:$0xff] %v231
    %376 = vst [vmem:[#allocation2 + $0xf0] sm:$0xff] %v342
    %377 = vst [vmem:[#allocation2 + $0xf8] sm:$0xff] %v344
    %v378 = vld [vmem:[#allocation5] sm:$0xff]
    %v379 = vld [vmem:[#allocation5 + $0x8] sm:$0xff]
    %v380 = vld [vmem:[#allocation5 + $0x10] sm:$0xff]
    %v381 = vld [vmem:[#allocation5 + $0x18] sm:$0xff]
    %v382 = vld [vmem:[#allocation5 + $0x20] sm:$0xff]
    %v383 = vld [vmem:[#allocation5 + $0x28] sm:$0xff]
    %v384 = vld [vmem:[#allocation5 + $0x30] sm:$0xff]
    %v385 = vld [vmem:[#allocation5 + $0x38] sm:$0xff]
    %v386 = vld [vmem:[#allocation5 + $0x40] sm:$0xff]
    %v387 = vld [vmem:[#allocation5 + $0x48] sm:$0xff]
    %v388 = vld [vmem:[#allocation5 + $0x50] sm:$0xff]
    %v389 = vld [vmem:[#allocation5 + $0x58] sm:$0xff]
    %v390 = vld [vmem:[#allocation5 + $0x60] sm:$0xff]
    %v391 = vld [vmem:[#allocation5 + $0x68] sm:$0xff]
    %v392 = vld [vmem:[#allocation5 + $0x70] sm:$0xff]
    %v393 = vld [vmem:[#allocation5 + $0x78] sm:$0xff]
    %v394 = vld [vmem:[#allocation5 + $0x80] sm:$0xff]
    %v395 = vld [vmem:[#allocation5 + $0x88] sm:$0xff]
    %v396 = vld [vmem:[#allocation5 + $0x90] sm:$0xff]
    %v397 = vld [vmem:[#allocation5 + $0x98] sm:$0xff]
    %v398 = vld [vmem:[#allocation5 + $0xa0] sm:$0xff]
    %v399 = vld [vmem:[#allocation5 + $0xa8] sm:$0xff]
    %v400 = vld [vmem:[#allocation5 + $0xb0] sm:$0xff]
    %v401 = vld [vmem:[#allocation5 + $0xb8] sm:$0xff]
    %v402 = vld [vmem:[#allocation5 + $0xc0] sm:$0xff]
    %v403 = vld [vmem:[#allocation5 + $0xc8] sm:$0xff]
    %v404 = vld [vmem:[#allocation5 + $0xd0] sm:$0xff]
    %v405 = vld [vmem:[#allocation5 + $0xd8] sm:$0xff]
    %v406 = vld [vmem:[#allocation5 + $0xe0] sm:$0xff]
    %v407 = vld [vmem:[#allocation5 + $0xe8] sm:$0xff]
    %v408 = vld [vmem:[#allocation5 + $0xf0] sm:$0xff]
    %v409 = vld [vmem:[#allocation5 + $0xf8] sm:$0xff]
    %v410 = vld [vmem:[#allocation5 + $0x100] sm:$0xff]
    %v411 = vld [vmem:[#allocation5 + $0x108] sm:$0xff]
    %v412 = vld [vmem:[#allocation5 + $0x110] sm:$0xff]
    %v413 = vld [vmem:[#allocation5 + $0x118] sm:$0xff]
    %v414 = vld [vmem:[#allocation5 + $0x120] sm:$0xff]
    %v415 = vld [vmem:[#allocation5 + $0x128] sm:$0xff]
    %v416 = vld [vmem:[#allocation5 + $0x130] sm:$0xff]
    %v417 = vld [vmem:[#allocation5 + $0x138] sm:$0xff]
    %v418 = vld [vmem:[#allocation5 + $0x140] sm:$0xff]
    %v419 = vld [vmem:[#allocation5 + $0x148] sm:$0xff]
    %v420 = vld [vmem:[#allocation5 + $0x150] sm:$0xff]
    %v421 = vld [vmem:[#allocation5 + $0x158] sm:$0xff]
    %v422 = vld [vmem:[#allocation5 + $0x160] sm:$0xff]
    %v423 = vld [vmem:[#allocation5 + $0x168] sm:$0xff]
    %v424 = vld [vmem:[#allocation5 + $0x170] sm:$0xff]
    %v425 = vld [vmem:[#allocation5 + $0x178] sm:$0xff]
    %v426 = vld [vmem:[#allocation5 + $0x180] sm:$0xff]
    %v427 = vld [vmem:[#allocation5 + $0x188] sm:$0xff]
    %v428 = vld [vmem:[#allocation5 + $0x190] sm:$0xff]
    %v429 = vld [vmem:[#allocation5 + $0x198] sm:$0xff]
    %v430 = vld [vmem:[#allocation5 + $0x1a0] sm:$0xff]
    %v431 = vld [vmem:[#allocation5 + $0x1a8] sm:$0xff]
    %v432 = vld [vmem:[#allocation5 + $0x1b0] sm:$0xff]
    %v433 = vld [vmem:[#allocation5 + $0x1b8] sm:$0xff]
    %v434 = vld [vmem:[#allocation5 + $0x1c0] sm:$0xff]
    %v435 = vld [vmem:[#allocation5 + $0x1c8] sm:$0xff]
    %v436 = vld [vmem:[#allocation5 + $0x1d0] sm:$0xff]
    %v437 = vld [vmem:[#allocation5 + $0x1d8] sm:$0xff]
    %v438 = vld [vmem:[#allocation5 + $0x1e0] sm:$0xff]
    %v439 = vld [vmem:[#allocation5 + $0x1e8] sm:$0xff]
    %v440 = vld [vmem:[#allocation5 + $0x1f0] sm:$0xff]
    %v441 = vld [vmem:[#allocation5 + $0x1f8] sm:$0xff]
    %v442 = vld [vmem:[#allocation3] sm:$0xff]
    %v443 = vld [vmem:[#allocation4] sm:$0xff]
    %v444 = vld [vmem:[#allocation2] sm:$0xff]
    %v445 = vld [vmem:[#allocation2 + $0x8] sm:$0xff]
    %v446 = vld [vmem:[#allocation2 + $0x10] sm:$0xff]
    %v447 = vld [vmem:[#allocation2 + $0x18] sm:$0xff]
    %448 = vmatprep.subr.mxu0 %v439
    %449 = vmatpush1.msra.mxu0 %v438
    %450 = vmatprep.subr.mxu0 %v435
    %451 = vmatpush1.msra.mxu0 %v434
    %452 = vmatprep.subr.mxu0 %v431
    %453 = vmatpush1.msra.mxu0 %v430
    %454 = vmatprep.subr.mxu0 %v427
    %455 = vmatpush1.msra.mxu0 %v426
    %456 = vmatprep.subr.mxu0 %v423
    %457 = vmatpush1.msra.mxu0 %v422
    %458 = vmatprep.subr.mxu0 %v419
    %459 = vmatpush1.msra.mxu0 %v418
    %460 = vmatprep.subr.mxu0 %v415
    %461 = vmatpush1.msra.mxu0 %v414
    %462 = vmatprep.subr.mxu0 %v411
    %463 = vmatpush1.msra.mxu0 %v410
    %464 = vmatprep.subr.mxu0 %v407
    %465 = vmatpush1.msra.mxu0 %v406
    %466 = vmatprep.subr.mxu0 %v403
    %467 = vmatpush1.msra.mxu0 %v402
    %468 = vmatprep.subr.mxu0 %v399
    %469 = vmatpush1.msra.mxu0 %v398
    %470 = vmatprep.subr.mxu0 %v395
    %471 = vmatpush1.msra.mxu0 %v394
    %472 = vmatprep.subr.mxu0 %v391
    %473 = vmatpush1.msra.mxu0 %v390
    %474 = vmatprep.subr.mxu0 %v387
    %475 = vmatpush1.msra.mxu0 %v386
    %476 = vmatprep.subr.mxu0 %v383
    %477 = vmatpush1.msra.mxu0 %v382
    %478 = vmatprep.subr.mxu0 %v379
    %479 = vmatpush1.msra.mxu0 %v378
    %480 = vmatprep.subr.mxu0 0.0
    %481 = vmatpush2.msra.mxu0 0.0
    %482 = vmatprep.subr.mxu0 0.0
    %483 = vmatpush2.msra.mxu0 0.0
    %484 = vmatprep.subr.mxu0 0.0
    %485 = vmatpush2.msra.mxu0 0.0
    %486 = vmatprep.subr.mxu0 0.0
    %487 = vmatpush2.msra.mxu0 0.0
    %488 = vmatprep.subr.mxu0 0.0
    %489 = vmatpush2.msra.mxu0 0.0
    %490 = vmatprep.subr.mxu0 0.0
    %491 = vmatpush2.msra.mxu0 0.0
    %492 = vmatprep.subr.mxu0 0.0
    %493 = vmatpush2.msra.mxu0 0.0
    %494 = vmatprep.subr.mxu0 0.0
    %495 = vmatpush2.msra.mxu0 0.0
    %496 = vmatprep.subr.mxu0 0.0
    %497 = vmatpush2.msra.mxu0 0.0
    %498 = vmatprep.subr.mxu0 0.0
    %499 = vmatpush2.msra.mxu0 0.0
    %500 = vmatprep.subr.mxu0 0.0
    %501 = vmatpush2.msra.mxu0 0.0
    %502 = vmatprep.subr.mxu0 0.0
    %503 = vmatpush2.msra.mxu0 0.0
    %504 = vmatprep.subr.mxu0 0.0
    %505 = vmatpush2.msra.mxu0 0.0
    %506 = vmatprep.subr.mxu0 0.0
    %507 = vmatpush2.msra.mxu0 0.0
    %508 = vmatprep.subr.mxu0 0.0
    %509 = vmatpush2.msra.mxu0 0.0
    %510 = vmatprep.subr.mxu0 0.0
    %511 = vmatpush2.msra.mxu0 0.0
    %512 = vmatprep.mubr.f32.mxu0 0.0
    %513 = vmatmul.mubr.f32.gmra.mxu0 %v442
    %v514 = vpop.f32.mrf.mxu0
    %v515 = vadd.f32 0.0, %v514
    %v516 = vpop.f32.mrf.mxu0
    %v517 = vadd.f32 0.0, %v516
    %518 = vdwg.mxu0
    %519 = vmatprep.subr.mxu0 %v441
    %520 = vmatpush1.msra.mxu0 %v440
    %521 = vmatprep.subr.mxu0 %v437
    %522 = vmatpush1.msra.mxu0 %v436
    %523 = vmatprep.subr.mxu0 %v433
    %524 = vmatpush1.msra.mxu0 %v432
    %525 = vmatprep.subr.mxu0 %v429
    %526 = vmatpush1.msra.mxu0 %v428
    %527 = vmatprep.subr.mxu0 %v425
    %528 = vmatpush1.msra.mxu0 %v424
    %529 = vmatprep.subr.mxu0 %v421
    %530 = vmatpush1.msra.mxu0 %v420
    %531 = vmatprep.subr.mxu0 %v417
    %532 = vmatpush1.msra.mxu0 %v416
    %533 = vmatprep.subr.mxu0 %v413
    %534 = vmatpush1.msra.mxu0 %v412
    %535 = vmatprep.subr.mxu0 %v409
    %536 = vmatpush1.msra.mxu0 %v408
    %537 = vmatprep.subr.mxu0 %v405
    %538 = vmatpush1.msra.mxu0 %v404
    %539 = vmatprep.subr.mxu0 %v401
    %540 = vmatpush1.msra.mxu0 %v400
    %541 = vmatprep.subr.mxu0 %v397
    %542 = vmatpush1.msra.mxu0 %v396
    %543 = vmatprep.subr.mxu0 %v393
    %544 = vmatpush1.msra.mxu0 %v392
    %545 = vmatprep.subr.mxu0 %v389
    %546 = vmatpush1.msra.mxu0 %v388
    %547 = vmatprep.subr.mxu0 %v385
    %548 = vmatpush1.msra.mxu0 %v384
    %549 = vmatprep.subr.mxu0 %v381
    %550 = vmatpush1.msra.mxu0 %v380
    %551 = vmatprep.subr.mxu0 0.0
    %552 = vmatpush2.msra.mxu0 0.0
    %553 = vmatprep.subr.mxu0 0.0
    %554 = vmatpush2.msra.mxu0 0.0
    %555 = vmatprep.subr.mxu0 0.0
    %556 = vmatpush2.msra.mxu0 0.0
    %557 = vmatprep.subr.mxu0 0.0
    %558 = vmatpush2.msra.mxu0 0.0
    %559 = vmatprep.subr.mxu0 0.0
    %560 = vmatpush2.msra.mxu0 0.0
    %561 = vmatprep.subr.mxu0 0.0
    %562 = vmatpush2.msra.mxu0 0.0
    %563 = vmatprep.subr.mxu0 0.0
    %564 = vmatpush2.msra.mxu0 0.0
    %565 = vmatprep.subr.mxu0 0.0
    %566 = vmatpush2.msra.mxu0 0.0
    %567 = vmatprep.subr.mxu0 0.0
    %568 = vmatpush2.msra.mxu0 0.0
    %569 = vmatprep.subr.mxu0 0.0
    %570 = vmatpush2.msra.mxu0 0.0
    %571 = vmatprep.subr.mxu0 0.0
    %572 = vmatpush2.msra.mxu0 0.0
    %573 = vmatprep.subr.mxu0 0.0
    %574 = vmatpush2.msra.mxu0 0.0
    %575 = vmatprep.subr.mxu0 0.0
    %576 = vmatpush2.msra.mxu0 0.0
    %577 = vmatprep.subr.mxu0 0.0
    %578 = vmatpush2.msra.mxu0 0.0
    %579 = vmatprep.subr.mxu0 0.0
    %580 = vmatpush2.msra.mxu0 0.0
    %581 = vmatprep.subr.mxu0 0.0
    %582 = vmatpush2.msra.mxu0 0.0
    %583 = vmatprep.mubr.f32.mxu0 0.0
    %584 = vmatmul.mubr.f32.gmra.mxu0 %v442
    %v585 = vpop.f32.mrf.mxu0
    %v586 = vadd.f32 0.0, %v585
    %v587 = vpop.f32.mrf.mxu0
    %v588 = vadd.f32 0.0, %v587
    %589 = vdwg.mxu0
    %v590 = vadd.f32 %v444, %v515
    %v591 = vadd.f32 %v445, %v517
    %v592 = vadd.f32 %v446, %v586
    %v593 = vadd.f32 %v447, %v588
    %v594 = vxor.u32 %v590, 2147483648
    %v595 = vmul.f32 %v594, 1.442695
    %v596 = vpow.pop %v595
    %v597 = vadd.f32 %v596, 1.0
    %v598 = vrcp.pop %v597
    %v599 = vmul.f32 1.0, %v598
    %v600 = vxor.u32 %v591, 2147483648
    %v601 = vmul.f32 %v600, 1.442695
    %v602 = vpow.pop %v601
    %v603 = vadd.f32 %v602, 1.0
    %v604 = vrcp.pop %v603
    %v605 = vmul.f32 1.0, %v604
    %v606 = vtanh.pop %v592
    %v607 = vxor.u32 %v593, 2147483648
    %v608 = vmul.f32 %v607, 1.442695
    %v609 = vpow.pop %v608
    %v610 = vadd.f32 %v609, 1.0
    %v611 = vrcp.pop %v610
    %v612 = vmul.f32 1.0, %v611
    %v613 = vmul.f32 %v443, %v599
    %v614 = vmul.f32 %v605, %v606
    %v615 = vadd.f32 %v613, %v614
    %v616 = vtanh.pop %v615
    %v617 = vmul.f32 %v612, %v616
    %618 = vst [vmem:[#allocation8] sm:$0xff] %v617
    %s619 = scalar_lea.vmem [#allocation2], 32
    %v620 = vld [vmem:[%s619] sm:$0xff]
    %v621 = vld [vmem:[%s619 + $0x8] sm:$0xff]
    %v622 = vld [vmem:[%s619 + $0x10] sm:$0xff]
    %v623 = vld [vmem:[%s619 + $0x18] sm:$0xff]
    %624 = vmatprep.subr.mxu0 %v439
    %625 = vmatpush1.msra.mxu0 %v438
    %626 = vmatprep.subr.mxu0 %v435
    %627 = vmatpush1.msra.mxu0 %v434
    %628 = vmatprep.subr.mxu0 %v431
    %629 = vmatpush1.msra.mxu0 %v430
    %630 = vmatprep.subr.mxu0 %v427
    %631 = vmatpush1.msra.mxu0 %v426
    %632 = vmatprep.subr.mxu0 %v423
    %633 = vmatpush1.msra.mxu0 %v422
    %634 = vmatprep.subr.mxu0 %v419
    %635 = vmatpush1.msra.mxu0 %v418
    %636 = vmatprep.subr.mxu0 %v415
    %637 = vmatpush1.msra.mxu0 %v414
    %638 = vmatprep.subr.mxu0 %v411
    %639 = vmatpush1.msra.mxu0 %v410
    %640 = vmatprep.subr.mxu0 %v407
    %641 = vmatpush1.msra.mxu0 %v406
    %642 = vmatprep.subr.mxu0 %v403
    %643 = vmatpush1.msra.mxu0 %v402
    %644 = vmatprep.subr.mxu0 %v399
    %645 = vmatpush1.msra.mxu0 %v398
    %646 = vmatprep.subr.mxu0 %v395
    %647 = vmatpush1.msra.mxu0 %v394
    %648 = vmatprep.subr.mxu0 %v391
    %649 = vmatpush1.msra.mxu0 %v390
    %650 = vmatprep.subr.mxu0 %v387
    %651 = vmatpush1.msra.mxu0 %v386
    %652 = vmatprep.subr.mxu0 %v383
    %653 = vmatpush1.msra.mxu0 %v382
    %654 = vmatprep.subr.mxu0 %v379
    %655 = vmatpush1.msra.mxu0 %v378
    %656 = vmatprep.subr.mxu0 0.0
    %657 = vmatpush2.msra.mxu0 0.0
    %658 = vmatprep.subr.mxu0 0.0
    %659 = vmatpush2.msra.mxu0 0.0
    %660 = vmatprep.subr.mxu0 0.0
    %661 = vmatpush2.msra.mxu0 0.0
    %662 = vmatprep.subr.mxu0 0.0
    %663 = vmatpush2.msra.mxu0 0.0
    %664 = vmatprep.subr.mxu0 0.0
    %665 = vmatpush2.msra.mxu0 0.0
    %666 = vmatprep.subr.mxu0 0.0
    %667 = vmatpush2.msra.mxu0 0.0
    %668 = vmatprep.subr.mxu0 0.0
    %669 = vmatpush2.msra.mxu0 0.0
    %670 = vmatprep.subr.mxu0 0.0
    %671 = vmatpush2.msra.mxu0 0.0
    %672 = vmatprep.subr.mxu0 0.0
    %673 = vmatpush2.msra.mxu0 0.0
    %674 = vmatprep.subr.mxu0 0.0
    %675 = vmatpush2.msra.mxu0 0.0
    %676 = vmatprep.subr.mxu0 0.0
    %677 = vmatpush2.msra.mxu0 0.0
    %678 = vmatprep.subr.mxu0 0.0
    %679 = vmatpush2.msra.mxu0 0.0
    %680 = vmatprep.subr.mxu0 0.0
    %681 = vmatpush2.msra.mxu0 0.0
    %682 = vmatprep.subr.mxu0 0.0
    %683 = vmatpush2.msra.mxu0 0.0
    %684 = vmatprep.subr.mxu0 0.0
    %685 = vmatpush2.msra.mxu0 0.0
    %686 = vmatprep.subr.mxu0 0.0
    %687 = vmatpush2.msra.mxu0 0.0
    %688 = vmatprep.mubr.f32.mxu0 0.0
    %689 = vmatmul.mubr.f32.gmra.mxu0 %v617
    %v690 = vpop.f32.mrf.mxu0
    %v691 = vadd.f32 0.0, %v690
    %v692 = vpop.f32.mrf.mxu0
    %v693 = vadd.f32 0.0, %v692
    %694 = vdwg.mxu0
    %695 = vmatprep.subr.mxu0 %v441
    %696 = vmatpush1.msra.mxu0 %v440
    %697 = vmatprep.subr.mxu0 %v437
    %698 = vmatpush1.msra.mxu0 %v436
    %699 = vmatprep.subr.mxu0 %v433
    %700 = vmatpush1.msra.mxu0 %v432
    %701 = vmatprep.subr.mxu0 %v429
    %702 = vmatpush1.msra.mxu0 %v428
    %703 = vmatprep.subr.mxu0 %v425
    %704 = vmatpush1.msra.mxu0 %v424
    %705 = vmatprep.subr.mxu0 %v421
    %706 = vmatpush1.msra.mxu0 %v420
    %707 = vmatprep.subr.mxu0 %v417
    %708 = vmatpush1.msra.mxu0 %v416
    %709 = vmatprep.subr.mxu0 %v413
    %710 = vmatpush1.msra.mxu0 %v412
    %711 = vmatprep.subr.mxu0 %v409
    %712 = vmatpush1.msra.mxu0 %v408
    %713 = vmatprep.subr.mxu0 %v405
    %714 = vmatpush1.msra.mxu0 %v404
    %715 = vmatprep.subr.mxu0 %v401
    %716 = vmatpush1.msra.mxu0 %v400
    %717 = vmatprep.subr.mxu0 %v397
    %718 = vmatpush1.msra.mxu0 %v396
    %719 = vmatprep.subr.mxu0 %v393
    %720 = vmatpush1.msra.mxu0 %v392
    %721 = vmatprep.subr.mxu0 %v389
    %722 = vmatpush1.msra.mxu0 %v388
    %723 = vmatprep.subr.mxu0 %v385
    %724 = vmatpush1.msra.mxu0 %v384
    %725 = vmatprep.subr.mxu0 %v381
    %726 = vmatpush1.msra.mxu0 %v380
    %727 = vmatprep.subr.mxu0 0.0
    %728 = vmatpush2.msra.mxu0 0.0
    %729 = vmatprep.subr.mxu0 0.0
    %730 = vmatpush2.msra.mxu0 0.0
    %731 = vmatprep.subr.mxu0 0.0
    %732 = vmatpush2.msra.mxu0 0.0
    %733 = vmatprep.subr.mxu0 0.0
    %734 = vmatpush2.msra.mxu0 0.0
    %735 = vmatprep.subr.mxu0 0.0
    %736 = vmatpush2.msra.mxu0 0.0
    %737 = vmatprep.subr.mxu0 0.0
    %738 = vmatpush2.msra.mxu0 0.0
    %739 = vmatprep.subr.mxu0 0.0
    %740 = vmatpush2.msra.mxu0 0.0
    %741 = vmatprep.subr.mxu0 0.0
    %742 = vmatpush2.msra.mxu0 0.0
    %743 = vmatprep.subr.mxu0 0.0
    %744 = vmatpush2.msra.mxu0 0.0
    %745 = vmatprep.subr.mxu0 0.0
    %746 = vmatpush2.msra.mxu0 0.0
    %747 = vmatprep.subr.mxu0 0.0
    %748 = vmatpush2.msra.mxu0 0.0
    %749 = vmatprep.subr.mxu0 0.0
    %750 = vmatpush2.msra.mxu0 0.0
    %751 = vmatprep.subr.mxu0 0.0
    %752 = vmatpush2.msra.mxu0 0.0
    %753 = vmatprep.subr.mxu0 0.0
    %754 = vmatpush2.msra.mxu0 0.0
    %755 = vmatprep.subr.mxu0 0.0
    %756 = vmatpush2.msra.mxu0 0.0
    %757 = vmatprep.subr.mxu0 0.0
    %758 = vmatpush2.msra.mxu0 0.0
    %759 = vmatprep.mubr.f32.mxu0 0.0
    %760 = vmatmul.mubr.f32.gmra.mxu0 %v617
    %v761 = vpop.f32.mrf.mxu0
    %v762 = vadd.f32 0.0, %v761
    %v763 = vpop.f32.mrf.mxu0
    %v764 = vadd.f32 0.0, %v763
    %765 = vdwg.mxu0
    %v766 = vadd.f32 %v620, %v691
    %v767 = vadd.f32 %v621, %v693
    %v768 = vadd.f32 %v622, %v762
    %v769 = vadd.f32 %v623, %v764
    %v770 = vxor.u32 %v766, 2147483648
    %v771 = vmul.f32 %v770, 1.442695
    %v772 = vpow.pop %v771
    %v773 = vadd.f32 %v772, 1.0
    %v774 = vrcp.pop %v773
    %v775 = vmul.f32 1.0, %v774
    %v776 = vxor.u32 %v767, 2147483648
    %v777 = vmul.f32 %v776, 1.442695
    %v778 = vpow.pop %v777
    %v779 = vadd.f32 %v778, 1.0
    %v780 = vrcp.pop %v779
    %v781 = vmul.f32 1.0, %v780
    %v782 = vtanh.pop %v768
    %v783 = vxor.u32 %v769, 2147483648
    %v784 = vmul.f32 %v783, 1.442695
    %v785 = vpow.pop %v784
    %v786 = vadd.f32 %v785, 1.0
    %v787 = vrcp.pop %v786
    %v788 = vmul.f32 1.0, %v787
    %v789 = vmul.f32 %v615, %v775
    %v790 = vmul.f32 %v781, %v782
    %v791 = vadd.f32 %v789, %v790
    %v792 = vtanh.pop %v791
    %v793 = vmul.f32 %v788, %v792
    %s794 = scalar_lea.vmem [#allocation8], 8
    %795 = vst [vmem:[%s794] sm:$0xff] %v793
    %s796 = scalar_lea.vmem [#allocation2], 64
    %v797 = vld [vmem:[%s796] sm:$0xff]
    %v798 = vld [vmem:[%s796 + $0x8] sm:$0xff]
    %v799 = vld [vmem:[%s796 + $0x10] sm:$0xff]
    %v800 = vld [vmem:[%s796 + $0x18] sm:$0xff]
    %801 = vmatprep.subr.mxu0 %v439
    %802 = vmatpush1.msra.mxu0 %v438
    %803 = vmatprep.subr.mxu0 %v435
    %804 = vmatpush1.msra.mxu0 %v434
    %805 = vmatprep.subr.mxu0 %v431
    %806 = vmatpush1.msra.mxu0 %v430
    %807 = vmatprep.subr.mxu0 %v427
    %808 = vmatpush1.msra.mxu0 %v426
    %809 = vmatprep.subr.mxu0 %v423
    %810 = vmatpush1.msra.mxu0 %v422
    %811 = vmatprep.subr.mxu0 %v419
    %812 = vmatpush1.msra.mxu0 %v418
    %813 = vmatprep.subr.mxu0 %v415
    %814 = vmatpush1.msra.mxu0 %v414
    %815 = vmatprep.subr.mxu0 %v411
    %816 = vmatpush1.msra.mxu0 %v410
    %817 = vmatprep.subr.mxu0 %v407
    %818 = vmatpush1.msra.mxu0 %v406
    %819 = vmatprep.subr.mxu0 %v403
    %820 = vmatpush1.msra.mxu0 %v402
    %821 = vmatprep.subr.mxu0 %v399
    %822 = vmatpush1.msra.mxu0 %v398
    %823 = vmatprep.subr.mxu0 %v395
    %824 = vmatpush1.msra.mxu0 %v394
    %825 = vmatprep.subr.mxu0 %v391
    %826 = vmatpush1.msra.mxu0 %v390
    %827 = vmatprep.subr.mxu0 %v387
    %828 = vmatpush1.msra.mxu0 %v386
    %829 = vmatprep.subr.mxu0 %v383
    %830 = vmatpush1.msra.mxu0 %v382
    %831 = vmatprep.subr.mxu0 %v379
    %832 = vmatpush1.msra.mxu0 %v378
    %833 = vmatprep.subr.mxu0 0.0
    %834 = vmatpush2.msra.mxu0 0.0
    %835 = vmatprep.subr.mxu0 0.0
    %836 = vmatpush2.msra.mxu0 0.0
    %837 = vmatprep.subr.mxu0 0.0
    %838 = vmatpush2.msra.mxu0 0.0
    %839 = vmatprep.subr.mxu0 0.0
    %840 = vmatpush2.msra.mxu0 0.0
    %841 = vmatprep.subr.mxu0 0.0
    %842 = vmatpush2.msra.mxu0 0.0
    %843 = vmatprep.subr.mxu0 0.0
    %844 = vmatpush2.msra.mxu0 0.0
    %845 = vmatprep.subr.mxu0 0.0
    %846 = vmatpush2.msra.mxu0 0.0
    %847 = vmatprep.subr.mxu0 0.0
    %848 = vmatpush2.msra.mxu0 0.0
    %849 = vmatprep.subr.mxu0 0.0
    %850 = vmatpush2.msra.mxu0 0.0
    %851 = vmatprep.subr.mxu0 0.0
    %852 = vmatpush2.msra.mxu0 0.0
    %853 = vmatprep.subr.mxu0 0.0
    %854 = vmatpush2.msra.mxu0 0.0
    %855 = vmatprep.subr.mxu0 0.0
    %856 = vmatpush2.msra.mxu0 0.0
    %857 = vmatprep.subr.mxu0 0.0
    %858 = vmatpush2.msra.mxu0 0.0
    %859 = vmatprep.subr.mxu0 0.0
    %860 = vmatpush2.msra.mxu0 0.0
    %861 = vmatprep.subr.mxu0 0.0
    %862 = vmatpush2.msra.mxu0 0.0
    %863 = vmatprep.subr.mxu0 0.0
    %864 = vmatpush2.msra.mxu0 0.0
    %865 = vmatprep.mubr.f32.mxu0 0.0
    %866 = vmatmul.mubr.f32.gmra.mxu0 %v793
    %v867 = vpop.f32.mrf.mxu0
    %v868 = vadd.f32 0.0, %v867
    %v869 = vpop.f32.mrf.mxu0
    %v870 = vadd.f32 0.0, %v869
    %871 = vdwg.mxu0
    %872 = vmatprep.subr.mxu0 %v441
    %873 = vmatpush1.msra.mxu0 %v440
    %874 = vmatprep.subr.mxu0 %v437
    %875 = vmatpush1.msra.mxu0 %v436
    %876 = vmatprep.subr.mxu0 %v433
    %877 = vmatpush1.msra.mxu0 %v432
    %878 = vmatprep.subr.mxu0 %v429
    %879 = vmatpush1.msra.mxu0 %v428
    %880 = vmatprep.subr.mxu0 %v425
    %881 = vmatpush1.msra.mxu0 %v424
    %882 = vmatprep.subr.mxu0 %v421
    %883 = vmatpush1.msra.mxu0 %v420
    %884 = vmatprep.subr.mxu0 %v417
    %885 = vmatpush1.msra.mxu0 %v416
    %886 = vmatprep.subr.mxu0 %v413
    %887 = vmatpush1.msra.mxu0 %v412
    %888 = vmatprep.subr.mxu0 %v409
    %889 = vmatpush1.msra.mxu0 %v408
    %890 = vmatprep.subr.mxu0 %v405
    %891 = vmatpush1.msra.mxu0 %v404
    %892 = vmatprep.subr.mxu0 %v401
    %893 = vmatpush1.msra.mxu0 %v400
    %894 = vmatprep.subr.mxu0 %v397
    %895 = vmatpush1.msra.mxu0 %v396
    %896 = vmatprep.subr.mxu0 %v393
    %897 = vmatpush1.msra.mxu0 %v392
    %898 = vmatprep.subr.mxu0 %v389
    %899 = vmatpush1.msra.mxu0 %v388
    %900 = vmatprep.subr.mxu0 %v385
    %901 = vmatpush1.msra.mxu0 %v384
    %902 = vmatprep.subr.mxu0 %v381
    %903 = vmatpush1.msra.mxu0 %v380
    %904 = vmatprep.subr.mxu0 0.0
    %905 = vmatpush2.msra.mxu0 0.0
    %906 = vmatprep.subr.mxu0 0.0
    %907 = vmatpush2.msra.mxu0 0.0
    %908 = vmatprep.subr.mxu0 0.0
    %909 = vmatpush2.msra.mxu0 0.0
    %910 = vmatprep.subr.mxu0 0.0
    %911 = vmatpush2.msra.mxu0 0.0
    %912 = vmatprep.subr.mxu0 0.0
    %913 = vmatpush2.msra.mxu0 0.0
    %914 = vmatprep.subr.mxu0 0.0
    %915 = vmatpush2.msra.mxu0 0.0
    %916 = vmatprep.subr.mxu0 0.0
    %917 = vmatpush2.msra.mxu0 0.0
    %918 = vmatprep.subr.mxu0 0.0
    %919 = vmatpush2.msra.mxu0 0.0
    %920 = vmatprep.subr.mxu0 0.0
    %921 = vmatpush2.msra.mxu0 0.0
    %922 = vmatprep.subr.mxu0 0.0
    %923 = vmatpush2.msra.mxu0 0.0
    %924 = vmatprep.subr.mxu0 0.0
    %925 = vmatpush2.msra.mxu0 0.0
    %926 = vmatprep.subr.mxu0 0.0
    %927 = vmatpush2.msra.mxu0 0.0
    %928 = vmatprep.subr.mxu0 0.0
    %929 = vmatpush2.msra.mxu0 0.0
    %930 = vmatprep.subr.mxu0 0.0
    %931 = vmatpush2.msra.mxu0 0.0
    %932 = vmatprep.subr.mxu0 0.0
    %933 = vmatpush2.msra.mxu0 0.0
    %934 = vmatprep.subr.mxu0 0.0
    %935 = vmatpush2.msra.mxu0 0.0
    %936 = vmatprep.mubr.f32.mxu0 0.0
    %937 = vmatmul.mubr.f32.gmra.mxu0 %v793
    %v938 = vpop.f32.mrf.mxu0
    %v939 = vadd.f32 0.0, %v938
    %v940 = vpop.f32.mrf.mxu0
    %v941 = vadd.f32 0.0, %v940
    %942 = vdwg.mxu0
    %v943 = vadd.f32 %v797, %v868
    %v944 = vadd.f32 %v798, %v870
    %v945 = vadd.f32 %v799, %v939
    %v946 = vadd.f32 %v800, %v941
    %v947 = vxor.u32 %v943, 2147483648
    %v948 = vmul.f32 %v947, 1.442695
    %v949 = vpow.pop %v948
    %v950 = vadd.f32 %v949, 1.0
    %v951 = vrcp.pop %v950
    %v952 = vmul.f32 1.0, %v951
    %v953 = vxor.u32 %v944, 2147483648
    %v954 = vmul.f32 %v953, 1.442695
    %v955 = vpow.pop %v954
    %v956 = vadd.f32 %v955, 1.0
    %v957 = vrcp.pop %v956
    %v958 = vmul.f32 1.0, %v957
    %v959 = vtanh.pop %v945
    %v960 = vxor.u32 %v946, 2147483648
    %v961 = vmul.f32 %v960, 1.442695
    %v962 = vpow.pop %v961
    %v963 = vadd.f32 %v962, 1.0
    %v964 = vrcp.pop %v963
    %v965 = vmul.f32 1.0, %v964
    %v966 = vmul.f32 %v791, %v952
    %v967 = vmul.f32 %v958, %v959
    %v968 = vadd.f32 %v966, %v967
    %v969 = vtanh.pop %v968
    %v970 = vmul.f32 %v965, %v969
    %s971 = scalar_lea.vmem [#allocation8], 16
    %972 = vst [vmem:[%s971] sm:$0xff] %v970
    %s973 = scalar_lea.vmem [#allocation2], 96
    %v974 = vld [vmem:[%s973] sm:$0xff]
    %v975 = vld [vmem:[%s973 + $0x8] sm:$0xff]
    %v976 = vld [vmem:[%s973 + $0x10] sm:$0xff]
    %v977 = vld [vmem:[%s973 + $0x18] sm:$0xff]
    %978 = vmatprep.subr.mxu0 %v439
    %979 = vmatpush1.msra.mxu0 %v438
    %980 = vmatprep.subr.mxu0 %v435
    %981 = vmatpush1.msra.mxu0 %v434
    %982 = vmatprep.subr.mxu0 %v431
    %983 = vmatpush1.msra.mxu0 %v430
    %984 = vmatprep.subr.mxu0 %v427
    %985 = vmatpush1.msra.mxu0 %v426
    %986 = vmatprep.subr.mxu0 %v423
    %987 = vmatpush1.msra.mxu0 %v422
    %988 = vmatprep.subr.mxu0 %v419
    %989 = vmatpush1.msra.mxu0 %v418
    %990 = vmatprep.subr.mxu0 %v415
    %991 = vmatpush1.msra.mxu0 %v414
    %992 = vmatprep.subr.mxu0 %v411
    %993 = vmatpush1.msra.mxu0 %v410
    %994 = vmatprep.subr.mxu0 %v407
    %995 = vmatpush1.msra.mxu0 %v406
    %996 = vmatprep.subr.mxu0 %v403
    %997 = vmatpush1.msra.mxu0 %v402
    %998 = vmatprep.subr.mxu0 %v399
    %999 = vmatpush1.msra.mxu0 %v398
    %1000 = vmatprep.subr.mxu0 %v395
    %1001 = vmatpush1.msra.mxu0 %v394
    %1002 = vmatprep.subr.mxu0 %v391
    %1003 = vmatpush1.msra.mxu0 %v390
    %1004 = vmatprep.subr.mxu0 %v387
    %1005 = vmatpush1.msra.mxu0 %v386
    %1006 = vmatprep.subr.mxu0 %v383
    %1007 = vmatpush1.msra.mxu0 %v382
    %1008 = vmatprep.subr.mxu0 %v379
    %1009 = vmatpush1.msra.mxu0 %v378
    %1010 = vmatprep.subr.mxu0 0.0
    %1011 = vmatpush2.msra.mxu0 0.0
    %1012 = vmatprep.subr.mxu0 0.0
    %1013 = vmatpush2.msra.mxu0 0.0
    %1014 = vmatprep.subr.mxu0 0.0
    %1015 = vmatpush2.msra.mxu0 0.0
    %1016 = vmatprep.subr.mxu0 0.0
    %1017 = vmatpush2.msra.mxu0 0.0
    %1018 = vmatprep.subr.mxu0 0.0
    %1019 = vmatpush2.msra.mxu0 0.0
    %1020 = vmatprep.subr.mxu0 0.0
    %1021 = vmatpush2.msra.mxu0 0.0
    %1022 = vmatprep.subr.mxu0 0.0
    %1023 = vmatpush2.msra.mxu0 0.0
    %1024 = vmatprep.subr.mxu0 0.0
    %1025 = vmatpush2.msra.mxu0 0.0
    %1026 = vmatprep.subr.mxu0 0.0
    %1027 = vmatpush2.msra.mxu0 0.0
    %1028 = vmatprep.subr.mxu0 0.0
    %1029 = vmatpush2.msra.mxu0 0.0
    %1030 = vmatprep.subr.mxu0 0.0
    %1031 = vmatpush2.msra.mxu0 0.0
    %1032 = vmatprep.subr.mxu0 0.0
    %1033 = vmatpush2.msra.mxu0 0.0
    %1034 = vmatprep.subr.mxu0 0.0
    %1035 = vmatpush2.msra.mxu0 0.0
    %1036 = vmatprep.subr.mxu0 0.0
    %1037 = vmatpush2.msra.mxu0 0.0
    %1038 = vmatprep.subr.mxu0 0.0
    %1039 = vmatpush2.msra.mxu0 0.0
    %1040 = vmatprep.subr.mxu0 0.0
    %1041 = vmatpush2.msra.mxu0 0.0
    %1042 = vmatprep.mubr.f32.mxu0 0.0
    %1043 = vmatmul.mubr.f32.gmra.mxu0 %v970
    %v1044 = vpop.f32.mrf.mxu0
    %v1045 = vadd.f32 0.0, %v1044
    %v1046 = vpop.f32.mrf.mxu0
    %v1047 = vadd.f32 0.0, %v1046
    %1048 = vdwg.mxu0
    %1049 = vmatprep.subr.mxu0 %v441
    %1050 = vmatpush1.msra.mxu0 %v440
    %1051 = vmatprep.subr.mxu0 %v437
    %1052 = vmatpush1.msra.mxu0 %v436
    %1053 = vmatprep.subr.mxu0 %v433
    %1054 = vmatpush1.msra.mxu0 %v432
    %1055 = vmatprep.subr.mxu0 %v429
    %1056 = vmatpush1.msra.mxu0 %v428
    %1057 = vmatprep.subr.mxu0 %v425
    %1058 = vmatpush1.msra.mxu0 %v424
    %1059 = vmatprep.subr.mxu0 %v421
    %1060 = vmatpush1.msra.mxu0 %v420
    %1061 = vmatprep.subr.mxu0 %v417
    %1062 = vmatpush1.msra.mxu0 %v416
    %1063 = vmatprep.subr.mxu0 %v413
    %1064 = vmatpush1.msra.mxu0 %v412
    %1065 = vmatprep.subr.mxu0 %v409
    %1066 = vmatpush1.msra.mxu0 %v408
    %1067 = vmatprep.subr.mxu0 %v405
    %1068 = vmatpush1.msra.mxu0 %v404
    %1069 = vmatprep.subr.mxu0 %v401
    %1070 = vmatpush1.msra.mxu0 %v400
    %1071 = vmatprep.subr.mxu0 %v397
    %1072 = vmatpush1.msra.mxu0 %v396
    %1073 = vmatprep.subr.mxu0 %v393
    %1074 = vmatpush1.msra.mxu0 %v392
    %1075 = vmatprep.subr.mxu0 %v389
    %1076 = vmatpush1.msra.mxu0 %v388
    %1077 = vmatprep.subr.mxu0 %v385
    %1078 = vmatpush1.msra.mxu0 %v384
    %1079 = vmatprep.subr.mxu0 %v381
    %1080 = vmatpush1.msra.mxu0 %v380
    %1081 = vmatprep.subr.mxu0 0.0
    %1082 = vmatpush2.msra.mxu0 0.0
    %1083 = vmatprep.subr.mxu0 0.0
    %1084 = vmatpush2.msra.mxu0 0.0
    %1085 = vmatprep.subr.mxu0 0.0
    %1086 = vmatpush2.msra.mxu0 0.0
    %1087 = vmatprep.subr.mxu0 0.0
    %1088 = vmatpush2.msra.mxu0 0.0
    %1089 = vmatprep.subr.mxu0 0.0
    %1090 = vmatpush2.msra.mxu0 0.0
    %1091 = vmatprep.subr.mxu0 0.0
    %1092 = vmatpush2.msra.mxu0 0.0
    %1093 = vmatprep.subr.mxu0 0.0
    %1094 = vmatpush2.msra.mxu0 0.0
    %1095 = vmatprep.subr.mxu0 0.0
    %1096 = vmatpush2.msra.mxu0 0.0
    %1097 = vmatprep.subr.mxu0 0.0
    %1098 = vmatpush2.msra.mxu0 0.0
    %1099 = vmatprep.subr.mxu0 0.0
    %1100 = vmatpush2.msra.mxu0 0.0
    %1101 = vmatprep.subr.mxu0 0.0
    %1102 = vmatpush2.msra.mxu0 0.0
    %1103 = vmatprep.subr.mxu0 0.0
    %1104 = vmatpush2.msra.mxu0 0.0
    %1105 = vmatprep.subr.mxu0 0.0
    %1106 = vmatpush2.msra.mxu0 0.0
    %1107 = vmatprep.subr.mxu0 0.0
    %1108 = vmatpush2.msra.mxu0 0.0
    %1109 = vmatprep.subr.mxu0 0.0
    %1110 = vmatpush2.msra.mxu0 0.0
    %1111 = vmatprep.subr.mxu0 0.0
    %1112 = vmatpush2.msra.mxu0 0.0
    %1113 = vmatprep.mubr.f32.mxu0 0.0
    %1114 = vmatmul.mubr.f32.gmra.mxu0 %v970
    %v1115 = vpop.f32.mrf.mxu0
    %v1116 = vadd.f32 0.0, %v1115
    %v1117 = vpop.f32.mrf.mxu0
    %v1118 = vadd.f32 0.0, %v1117
    %1119 = vdwg.mxu0
    %v1120 = vadd.f32 %v974, %v1045
    %v1121 = vadd.f32 %v975, %v1047
    %v1122 = vadd.f32 %v976, %v1116
    %v1123 = vadd.f32 %v977, %v1118
    %v1124 = vxor.u32 %v1120, 2147483648
    %v1125 = vmul.f32 %v1124, 1.442695
    %v1126 = vpow.pop %v1125
    %v1127 = vadd.f32 %v1126, 1.0
    %v1128 = vrcp.pop %v1127
    %v1129 = vmul.f32 1.0, %v1128
    %v1130 = vxor.u32 %v1121, 2147483648
    %v1131 = vmul.f32 %v1130, 1.442695
    %v1132 = vpow.pop %v1131
    %v1133 = vadd.f32 %v1132, 1.0
    %v1134 = vrcp.pop %v1133
    %v1135 = vmul.f32 1.0, %v1134
    %v1136 = vtanh.pop %v1122
    %v1137 = vxor.u32 %v1123, 2147483648
    %v1138 = vmul.f32 %v1137, 1.442695
    %v1139 = vpow.pop %v1138
    %v1140 = vadd.f32 %v1139, 1.0
    %v1141 = vrcp.pop %v1140
    %v1142 = vmul.f32 1.0, %v1141
    %v1143 = vmul.f32 %v968, %v1129
    %v1144 = vmul.f32 %v1135, %v1136
    %v1145 = vadd.f32 %v1143, %v1144
    %v1146 = vtanh.pop %v1145
    %v1147 = vmul.f32 %v1142, %v1146
    %s1148 = scalar_lea.vmem [#allocation8], 24
    %1149 = vst [vmem:[%s1148] sm:$0xff] %v1147
    %s1150 = scalar_lea.vmem [#allocation2], 128
    %v1151 = vld [vmem:[%s1150] sm:$0xff]
    %v1152 = vld [vmem:[%s1150 + $0x8] sm:$0xff]
    %v1153 = vld [vmem:[%s1150 + $0x10] sm:$0xff]
    %v1154 = vld [vmem:[%s1150 + $0x18] sm:$0xff]
    %1155 = vmatprep.subr.mxu0 %v439
    %1156 = vmatpush1.msra.mxu0 %v438
    %1157 = vmatprep.subr.mxu0 %v435
    %1158 = vmatpush1.msra.mxu0 %v434
    %1159 = vmatprep.subr.mxu0 %v431
    %1160 = vmatpush1.msra.mxu0 %v430
    %1161 = vmatprep.subr.mxu0 %v427
    %1162 = vmatpush1.msra.mxu0 %v426
    %1163 = vmatprep.subr.mxu0 %v423
    %1164 = vmatpush1.msra.mxu0 %v422
    %1165 = vmatprep.subr.mxu0 %v419
    %1166 = vmatpush1.msra.mxu0 %v418
    %1167 = vmatprep.subr.mxu0 %v415
    %1168 = vmatpush1.msra.mxu0 %v414
    %1169 = vmatprep.subr.mxu0 %v411
    %1170 = vmatpush1.msra.mxu0 %v410
    %1171 = vmatprep.subr.mxu0 %v407
    %1172 = vmatpush1.msra.mxu0 %v406
    %1173 = vmatprep.subr.mxu0 %v403
    %1174 = vmatpush1.msra.mxu0 %v402
    %1175 = vmatprep.subr.mxu0 %v399
    %1176 = vmatpush1.msra.mxu0 %v398
    %1177 = vmatprep.subr.mxu0 %v395
    %1178 = vmatpush1.msra.mxu0 %v394
    %1179 = vmatprep.subr.mxu0 %v391
    %1180 = vmatpush1.msra.mxu0 %v390
    %1181 = vmatprep.subr.mxu0 %v387
    %1182 = vmatpush1.msra.mxu0 %v386
    %1183 = vmatprep.subr.mxu0 %v383
    %1184 = vmatpush1.msra.mxu0 %v382
    %1185 = vmatprep.subr.mxu0 %v379
    %1186 = vmatpush1.msra.mxu0 %v378
    %1187 = vmatprep.subr.mxu0 0.0
    %1188 = vmatpush2.msra.mxu0 0.0
    %1189 = vmatprep.subr.mxu0 0.0
    %1190 = vmatpush2.msra.mxu0 0.0
    %1191 = vmatprep.subr.mxu0 0.0
    %1192 = vmatpush2.msra.mxu0 0.0
    %1193 = vmatprep.subr.mxu0 0.0
    %1194 = vmatpush2.msra.mxu0 0.0
    %1195 = vmatprep.subr.mxu0 0.0
    %1196 = vmatpush2.msra.mxu0 0.0
    %1197 = vmatprep.subr.mxu0 0.0
    %1198 = vmatpush2.msra.mxu0 0.0
    %1199 = vmatprep.subr.mxu0 0.0
    %1200 = vmatpush2.msra.mxu0 0.0
    %1201 = vmatprep.subr.mxu0 0.0
    %1202 = vmatpush2.msra.mxu0 0.0
    %1203 = vmatprep.subr.mxu0 0.0
    %1204 = vmatpush2.msra.mxu0 0.0
    %1205 = vmatprep.subr.mxu0 0.0
    %1206 = vmatpush2.msra.mxu0 0.0
    %1207 = vmatprep.subr.mxu0 0.0
    %1208 = vmatpush2.msra.mxu0 0.0
    %1209 = vmatprep.subr.mxu0 0.0
    %1210 = vmatpush2.msra.mxu0 0.0
    %1211 = vmatprep.subr.mxu0 0.0
    %1212 = vmatpush2.msra.mxu0 0.0
    %1213 = vmatprep.subr.mxu0 0.0
    %1214 = vmatpush2.msra.mxu0 0.0
    %1215 = vmatprep.subr.mxu0 0.0
    %1216 = vmatpush2.msra.mxu0 0.0
    %1217 = vmatprep.subr.mxu0 0.0
    %1218 = vmatpush2.msra.mxu0 0.0
    %1219 = vmatprep.mubr.f32.mxu0 0.0
    %1220 = vmatmul.mubr.f32.gmra.mxu0 %v1147
    %v1221 = vpop.f32.mrf.mxu0
    %v1222 = vadd.f32 0.0, %v1221
    %v1223 = vpop.f32.mrf.mxu0
    %v1224 = vadd.f32 0.0, %v1223
    %1225 = vdwg.mxu0
    %1226 = vmatprep.subr.mxu0 %v441
    %1227 = vmatpush1.msra.mxu0 %v440
    %1228 = vmatprep.subr.mxu0 %v437
    %1229 = vmatpush1.msra.mxu0 %v436
    %1230 = vmatprep.subr.mxu0 %v433
    %1231 = vmatpush1.msra.mxu0 %v432
    %1232 = vmatprep.subr.mxu0 %v429
    %1233 = vmatpush1.msra.mxu0 %v428
    %1234 = vmatprep.subr.mxu0 %v425
    %1235 = vmatpush1.msra.mxu0 %v424
    %1236 = vmatprep.subr.mxu0 %v421
    %1237 = vmatpush1.msra.mxu0 %v420
    %1238 = vmatprep.subr.mxu0 %v417
    %1239 = vmatpush1.msra.mxu0 %v416
    %1240 = vmatprep.subr.mxu0 %v413
    %1241 = vmatpush1.msra.mxu0 %v412
    %1242 = vmatprep.subr.mxu0 %v409
    %1243 = vmatpush1.msra.mxu0 %v408
    %1244 = vmatprep.subr.mxu0 %v405
    %1245 = vmatpush1.msra.mxu0 %v404
    %1246 = vmatprep.subr.mxu0 %v401
    %1247 = vmatpush1.msra.mxu0 %v400
    %1248 = vmatprep.subr.mxu0 %v397
    %1249 = vmatpush1.msra.mxu0 %v396
    %1250 = vmatprep.subr.mxu0 %v393
    %1251 = vmatpush1.msra.mxu0 %v392
    %1252 = vmatprep.subr.mxu0 %v389
    %1253 = vmatpush1.msra.mxu0 %v388
    %1254 = vmatprep.subr.mxu0 %v385
    %1255 = vmatpush1.msra.mxu0 %v384
    %1256 = vmatprep.subr.mxu0 %v381
    %1257 = vmatpush1.msra.mxu0 %v380
    %1258 = vmatprep.subr.mxu0 0.0
    %1259 = vmatpush2.msra.mxu0 0.0
    %1260 = vmatprep.subr.mxu0 0.0
    %1261 = vmatpush2.msra.mxu0 0.0
    %1262 = vmatprep.subr.mxu0 0.0
    %1263 = vmatpush2.msra.mxu0 0.0
    %1264 = vmatprep.subr.mxu0 0.0
    %1265 = vmatpush2.msra.mxu0 0.0
    %1266 = vmatprep.subr.mxu0 0.0
    %1267 = vmatpush2.msra.mxu0 0.0
    %1268 = vmatprep.subr.mxu0 0.0
    %1269 = vmatpush2.msra.mxu0 0.0
    %1270 = vmatprep.subr.mxu0 0.0
    %1271 = vmatpush2.msra.mxu0 0.0
    %1272 = vmatprep.subr.mxu0 0.0
    %1273 = vmatpush2.msra.mxu0 0.0
    %1274 = vmatprep.subr.mxu0 0.0
    %1275 = vmatpush2.msra.mxu0 0.0
    %1276 = vmatprep.subr.mxu0 0.0
    %1277 = vmatpush2.msra.mxu0 0.0
    %1278 = vmatprep.subr.mxu0 0.0
    %1279 = vmatpush2.msra.mxu0 0.0
    %1280 = vmatprep.subr.mxu0 0.0
    %1281 = vmatpush2.msra.mxu0 0.0
    %1282 = vmatprep.subr.mxu0 0.0
    %1283 = vmatpush2.msra.mxu0 0.0
    %1284 = vmatprep.subr.mxu0 0.0
    %1285 = vmatpush2.msra.mxu0 0.0
    %1286 = vmatprep.subr.mxu0 0.0
    %1287 = vmatpush2.msra.mxu0 0.0
    %1288 = vmatprep.subr.mxu0 0.0
    %1289 = vmatpush2.msra.mxu0 0.0
    %1290 = vmatprep.mubr.f32.mxu0 0.0
    %1291 = vmatmul.mubr.f32.gmra.mxu0 %v1147
    %v1292 = vpop.f32.mrf.mxu0
    %v1293 = vadd.f32 0.0, %v1292
    %v1294 = vpop.f32.mrf.mxu0
    %v1295 = vadd.f32 0.0, %v1294
    %1296 = vdwg.mxu0
    %v1297 = vadd.f32 %v1151, %v1222
    %v1298 = vadd.f32 %v1152, %v1224
    %v1299 = vadd.f32 %v1153, %v1293
    %v1300 = vadd.f32 %v1154, %v1295
    %v1301 = vxor.u32 %v1297, 2147483648
    %v1302 = vmul.f32 %v1301, 1.442695
    %v1303 = vpow.pop %v1302
    %v1304 = vadd.f32 %v1303, 1.0
    %v1305 = vrcp.pop %v1304
    %v1306 = vmul.f32 1.0, %v1305
    %v1307 = vxor.u32 %v1298, 2147483648
    %v1308 = vmul.f32 %v1307, 1.442695
    %v1309 = vpow.pop %v1308
    %v1310 = vadd.f32 %v1309, 1.0
    %v1311 = vrcp.pop %v1310
    %v1312 = vmul.f32 1.0, %v1311
    %v1313 = vtanh.pop %v1299
    %v1314 = vxor.u32 %v1300, 2147483648
    %v1315 = vmul.f32 %v1314, 1.442695
    %v1316 = vpow.pop %v1315
    %v1317 = vadd.f32 %v1316, 1.0
    %v1318 = vrcp.pop %v1317
    %v1319 = vmul.f32 1.0, %v1318
    %v1320 = vmul.f32 %v1145, %v1306
    %v1321 = vmul.f32 %v1312, %v1313
    %v1322 = vadd.f32 %v1320, %v1321
    %v1323 = vtanh.pop %v1322
    %v1324 = vmul.f32 %v1319, %v1323
    %s1325 = scalar_lea.vmem [#allocation8], 32
    %1326 = vst [vmem:[%s1325] sm:$0xff] %v1324
    %s1327 = scalar_lea.vmem [#allocation2], 160
    %v1328 = vld [vmem:[%s1327] sm:$0xff]
    %v1329 = vld [vmem:[%s1327 + $0x8] sm:$0xff]
    %v1330 = vld [vmem:[%s1327 + $0x10] sm:$0xff]
    %v1331 = vld [vmem:[%s1327 + $0x18] sm:$0xff]
    %1332 = vmatprep.subr.mxu0 %v439
    %1333 = vmatpush1.msra.mxu0 %v438
    %1334 = vmatprep.subr.mxu0 %v435
    %1335 = vmatpush1.msra.mxu0 %v434
    %1336 = vmatprep.subr.mxu0 %v431
    %1337 = vmatpush1.msra.mxu0 %v430
    %1338 = vmatprep.subr.mxu0 %v427
    %1339 = vmatpush1.msra.mxu0 %v426
    %1340 = vmatprep.subr.mxu0 %v423
    %1341 = vmatpush1.msra.mxu0 %v422
    %1342 = vmatprep.subr.mxu0 %v419
    %1343 = vmatpush1.msra.mxu0 %v418
    %1344 = vmatprep.subr.mxu0 %v415
    %1345 = vmatpush1.msra.mxu0 %v414
    %1346 = vmatprep.subr.mxu0 %v411
    %1347 = vmatpush1.msra.mxu0 %v410
    %1348 = vmatprep.subr.mxu0 %v407
    %1349 = vmatpush1.msra.mxu0 %v406
    %1350 = vmatprep.subr.mxu0 %v403
    %1351 = vmatpush1.msra.mxu0 %v402
    %1352 = vmatprep.subr.mxu0 %v399
    %1353 = vmatpush1.msra.mxu0 %v398
    %1354 = vmatprep.subr.mxu0 %v395
    %1355 = vmatpush1.msra.mxu0 %v394
    %1356 = vmatprep.subr.mxu0 %v391
    %1357 = vmatpush1.msra.mxu0 %v390
    %1358 = vmatprep.subr.mxu0 %v387
    %1359 = vmatpush1.msra.mxu0 %v386
    %1360 = vmatprep.subr.mxu0 %v383
    %1361 = vmatpush1.msra.mxu0 %v382
    %1362 = vmatprep.subr.mxu0 %v379
    %1363 = vmatpush1.msra.mxu0 %v378
    %1364 = vmatprep.subr.mxu0 0.0
    %1365 = vmatpush2.msra.mxu0 0.0
    %1366 = vmatprep.subr.mxu0 0.0
    %1367 = vmatpush2.msra.mxu0 0.0
    %1368 = vmatprep.subr.mxu0 0.0
    %1369 = vmatpush2.msra.mxu0 0.0
    %1370 = vmatprep.subr.mxu0 0.0
    %1371 = vmatpush2.msra.mxu0 0.0
    %1372 = vmatprep.subr.mxu0 0.0
    %1373 = vmatpush2.msra.mxu0 0.0
    %1374 = vmatprep.subr.mxu0 0.0
    %1375 = vmatpush2.msra.mxu0 0.0
    %1376 = vmatprep.subr.mxu0 0.0
    %1377 = vmatpush2.msra.mxu0 0.0
    %1378 = vmatprep.subr.mxu0 0.0
    %1379 = vmatpush2.msra.mxu0 0.0
    %1380 = vmatprep.subr.mxu0 0.0
    %1381 = vmatpush2.msra.mxu0 0.0
    %1382 = vmatprep.subr.mxu0 0.0
    %1383 = vmatpush2.msra.mxu0 0.0
    %1384 = vmatprep.subr.mxu0 0.0
    %1385 = vmatpush2.msra.mxu0 0.0
    %1386 = vmatprep.subr.mxu0 0.0
    %1387 = vmatpush2.msra.mxu0 0.0
    %1388 = vmatprep.subr.mxu0 0.0
    %1389 = vmatpush2.msra.mxu0 0.0
    %1390 = vmatprep.subr.mxu0 0.0
    %1391 = vmatpush2.msra.mxu0 0.0
    %1392 = vmatprep.subr.mxu0 0.0
    %1393 = vmatpush2.msra.mxu0 0.0
    %1394 = vmatprep.subr.mxu0 0.0
    %1395 = vmatpush2.msra.mxu0 0.0
    %1396 = vmatprep.mubr.f32.mxu0 0.0
    %1397 = vmatmul.mubr.f32.gmra.mxu0 %v1324
    %v1398 = vpop.f32.mrf.mxu0
    %v1399 = vadd.f32 0.0, %v1398
    %v1400 = vpop.f32.mrf.mxu0
    %v1401 = vadd.f32 0.0, %v1400
    %1402 = vdwg.mxu0
    %1403 = vmatprep.subr.mxu0 %v441
    %1404 = vmatpush1.msra.mxu0 %v440
    %1405 = vmatprep.subr.mxu0 %v437
    %1406 = vmatpush1.msra.mxu0 %v436
    %1407 = vmatprep.subr.mxu0 %v433
    %1408 = vmatpush1.msra.mxu0 %v432
    %1409 = vmatprep.subr.mxu0 %v429
    %1410 = vmatpush1.msra.mxu0 %v428
    %1411 = vmatprep.subr.mxu0 %v425
    %1412 = vmatpush1.msra.mxu0 %v424
    %1413 = vmatprep.subr.mxu0 %v421
    %1414 = vmatpush1.msra.mxu0 %v420
    %1415 = vmatprep.subr.mxu0 %v417
    %1416 = vmatpush1.msra.mxu0 %v416
    %1417 = vmatprep.subr.mxu0 %v413
    %1418 = vmatpush1.msra.mxu0 %v412
    %1419 = vmatprep.subr.mxu0 %v409
    %1420 = vmatpush1.msra.mxu0 %v408
    %1421 = vmatprep.subr.mxu0 %v405
    %1422 = vmatpush1.msra.mxu0 %v404
    %1423 = vmatprep.subr.mxu0 %v401
    %1424 = vmatpush1.msra.mxu0 %v400
    %1425 = vmatprep.subr.mxu0 %v397
    %1426 = vmatpush1.msra.mxu0 %v396
    %1427 = vmatprep.subr.mxu0 %v393
    %1428 = vmatpush1.msra.mxu0 %v392
    %1429 = vmatprep.subr.mxu0 %v389
    %1430 = vmatpush1.msra.mxu0 %v388
    %1431 = vmatprep.subr.mxu0 %v385
    %1432 = vmatpush1.msra.mxu0 %v384
    %1433 = vmatprep.subr.mxu0 %v381
    %1434 = vmatpush1.msra.mxu0 %v380
    %1435 = vmatprep.subr.mxu0 0.0
    %1436 = vmatpush2.msra.mxu0 0.0
    %1437 = vmatprep.subr.mxu0 0.0
    %1438 = vmatpush2.msra.mxu0 0.0
    %1439 = vmatprep.subr.mxu0 0.0
    %1440 = vmatpush2.msra.mxu0 0.0
    %1441 = vmatprep.subr.mxu0 0.0
    %1442 = vmatpush2.msra.mxu0 0.0
    %1443 = vmatprep.subr.mxu0 0.0
    %1444 = vmatpush2.msra.mxu0 0.0
    %1445 = vmatprep.subr.mxu0 0.0
    %1446 = vmatpush2.msra.mxu0 0.0
    %1447 = vmatprep.subr.mxu0 0.0
    %1448 = vmatpush2.msra.mxu0 0.0
    %1449 = vmatprep.subr.mxu0 0.0
    %1450 = vmatpush2.msra.mxu0 0.0
    %1451 = vmatprep.subr.mxu0 0.0
    %1452 = vmatpush2.msra.mxu0 0.0
    %1453 = vmatprep.subr.mxu0 0.0
    %1454 = vmatpush2.msra.mxu0 0.0
    %1455 = vmatprep.subr.mxu0 0.0
    %1456 = vmatpush2.msra.mxu0 0.0
    %1457 = vmatprep.subr.mxu0 0.0
    %1458 = vmatpush2.msra.mxu0 0.0
    %1459 = vmatprep.subr.mxu0 0.0
    %1460 = vmatpush2.msra.mxu0 0.0
    %1461 = vmatprep.subr.mxu0 0.0
    %1462 = vmatpush2.msra.mxu0 0.0
    %1463 = vmatprep.subr.mxu0 0.0
    %1464 = vmatpush2.msra.mxu0 0.0
    %1465 = vmatprep.subr.mxu0 0.0
    %1466 = vmatpush2.msra.mxu0 0.0
    %1467 = vmatprep.mubr.f32.mxu0 0.0
    %1468 = vmatmul.mubr.f32.gmra.mxu0 %v1324
    %v1469 = vpop.f32.mrf.mxu0
    %v1470 = vadd.f32 0.0, %v1469
    %v1471 = vpop.f32.mrf.mxu0
    %v1472 = vadd.f32 0.0, %v1471
    %1473 = vdwg.mxu0
    %v1474 = vadd.f32 %v1328, %v1399
    %v1475 = vadd.f32 %v1329, %v1401
    %v1476 = vadd.f32 %v1330, %v1470
    %v1477 = vadd.f32 %v1331, %v1472
    %v1478 = vxor.u32 %v1474, 2147483648
    %v1479 = vmul.f32 %v1478, 1.442695
    %v1480 = vpow.pop %v1479
    %v1481 = vadd.f32 %v1480, 1.0
    %v1482 = vrcp.pop %v1481
    %v1483 = vmul.f32 1.0, %v1482
    %v1484 = vxor.u32 %v1475, 2147483648
    %v1485 = vmul.f32 %v1484, 1.442695
    %v1486 = vpow.pop %v1485
    %v1487 = vadd.f32 %v1486, 1.0
    %v1488 = vrcp.pop %v1487
    %v1489 = vmul.f32 1.0, %v1488
    %v1490 = vtanh.pop %v1476
    %v1491 = vxor.u32 %v1477, 2147483648
    %v1492 = vmul.f32 %v1491, 1.442695
    %v1493 = vpow.pop %v1492
    %v1494 = vadd.f32 %v1493, 1.0
    %v1495 = vrcp.pop %v1494
    %v1496 = vmul.f32 1.0, %v1495
    %v1497 = vmul.f32 %v1322, %v1483
    %v1498 = vmul.f32 %v1489, %v1490
    %v1499 = vadd.f32 %v1497, %v1498
    %v1500 = vtanh.pop %v1499
    %v1501 = vmul.f32 %v1496, %v1500
    %s1502 = scalar_lea.vmem [#allocation8], 40
    %1503 = vst [vmem:[%s1502] sm:$0xff] %v1501
    %s1504 = scalar_lea.vmem [#allocation2], 192
    %v1505 = vld [vmem:[%s1504] sm:$0xff]
    %v1506 = vld [vmem:[%s1504 + $0x8] sm:$0xff]
    %v1507 = vld [vmem:[%s1504 + $0x10] sm:$0xff]
    %v1508 = vld [vmem:[%s1504 + $0x18] sm:$0xff]
    %1509 = vmatprep.subr.mxu0 %v439
    %1510 = vmatpush1.msra.mxu0 %v438
    %1511 = vmatprep.subr.mxu0 %v435
    %1512 = vmatpush1.msra.mxu0 %v434
    %1513 = vmatprep.subr.mxu0 %v431
    %1514 = vmatpush1.msra.mxu0 %v430
    %1515 = vmatprep.subr.mxu0 %v427
    %1516 = vmatpush1.msra.mxu0 %v426
    %1517 = vmatprep.subr.mxu0 %v423
    %1518 = vmatpush1.msra.mxu0 %v422
    %1519 = vmatprep.subr.mxu0 %v419
    %1520 = vmatpush1.msra.mxu0 %v418
    %1521 = vmatprep.subr.mxu0 %v415
    %1522 = vmatpush1.msra.mxu0 %v414
    %1523 = vmatprep.subr.mxu0 %v411
    %1524 = vmatpush1.msra.mxu0 %v410
    %1525 = vmatprep.subr.mxu0 %v407
    %1526 = vmatpush1.msra.mxu0 %v406
    %1527 = vmatprep.subr.mxu0 %v403
    %1528 = vmatpush1.msra.mxu0 %v402
    %1529 = vmatprep.subr.mxu0 %v399
    %1530 = vmatpush1.msra.mxu0 %v398
    %1531 = vmatprep.subr.mxu0 %v395
    %1532 = vmatpush1.msra.mxu0 %v394
    %1533 = vmatprep.subr.mxu0 %v391
    %1534 = vmatpush1.msra.mxu0 %v390
    %1535 = vmatprep.subr.mxu0 %v387
    %1536 = vmatpush1.msra.mxu0 %v386
    %1537 = vmatprep.subr.mxu0 %v383
    %1538 = vmatpush1.msra.mxu0 %v382
    %1539 = vmatprep.subr.mxu0 %v379
    %1540 = vmatpush1.msra.mxu0 %v378
    %1541 = vmatprep.subr.mxu0 0.0
    %1542 = vmatpush2.msra.mxu0 0.0
    %1543 = vmatprep.subr.mxu0 0.0
    %1544 = vmatpush2.msra.mxu0 0.0
    %1545 = vmatprep.subr.mxu0 0.0
    %1546 = vmatpush2.msra.mxu0 0.0
    %1547 = vmatprep.subr.mxu0 0.0
    %1548 = vmatpush2.msra.mxu0 0.0
    %1549 = vmatprep.subr.mxu0 0.0
    %1550 = vmatpush2.msra.mxu0 0.0
    %1551 = vmatprep.subr.mxu0 0.0
    %1552 = vmatpush2.msra.mxu0 0.0
    %1553 = vmatprep.subr.mxu0 0.0
    %1554 = vmatpush2.msra.mxu0 0.0
    %1555 = vmatprep.subr.mxu0 0.0
    %1556 = vmatpush2.msra.mxu0 0.0
    %1557 = vmatprep.subr.mxu0 0.0
    %1558 = vmatpush2.msra.mxu0 0.0
    %1559 = vmatprep.subr.mxu0 0.0
    %1560 = vmatpush2.msra.mxu0 0.0
    %1561 = vmatprep.subr.mxu0 0.0
    %1562 = vmatpush2.msra.mxu0 0.0
    %1563 = vmatprep.subr.mxu0 0.0
    %1564 = vmatpush2.msra.mxu0 0.0
    %1565 = vmatprep.subr.mxu0 0.0
    %1566 = vmatpush2.msra.mxu0 0.0
    %1567 = vmatprep.subr.mxu0 0.0
    %1568 = vmatpush2.msra.mxu0 0.0
    %1569 = vmatprep.subr.mxu0 0.0
    %1570 = vmatpush2.msra.mxu0 0.0
    %1571 = vmatprep.subr.mxu0 0.0
    %1572 = vmatpush2.msra.mxu0 0.0
    %1573 = vmatprep.mubr.f32.mxu0 0.0
    %1574 = vmatmul.mubr.f32.gmra.mxu0 %v1501
    %v1575 = vpop.f32.mrf.mxu0
    %v1576 = vadd.f32 0.0, %v1575
    %v1577 = vpop.f32.mrf.mxu0
    %v1578 = vadd.f32 0.0, %v1577
    %1579 = vdwg.mxu0
    %1580 = vmatprep.subr.mxu0 %v441
    %1581 = vmatpush1.msra.mxu0 %v440
    %1582 = vmatprep.subr.mxu0 %v437
    %1583 = vmatpush1.msra.mxu0 %v436
    %1584 = vmatprep.subr.mxu0 %v433
    %1585 = vmatpush1.msra.mxu0 %v432
    %1586 = vmatprep.subr.mxu0 %v429
    %1587 = vmatpush1.msra.mxu0 %v428
    %1588 = vmatprep.subr.mxu0 %v425
    %1589 = vmatpush1.msra.mxu0 %v424
    %1590 = vmatprep.subr.mxu0 %v421
    %1591 = vmatpush1.msra.mxu0 %v420
    %1592 = vmatprep.subr.mxu0 %v417
    %1593 = vmatpush1.msra.mxu0 %v416
    %1594 = vmatprep.subr.mxu0 %v413
    %1595 = vmatpush1.msra.mxu0 %v412
    %1596 = vmatprep.subr.mxu0 %v409
    %1597 = vmatpush1.msra.mxu0 %v408
    %1598 = vmatprep.subr.mxu0 %v405
    %1599 = vmatpush1.msra.mxu0 %v404
    %1600 = vmatprep.subr.mxu0 %v401
    %1601 = vmatpush1.msra.mxu0 %v400
    %1602 = vmatprep.subr.mxu0 %v397
    %1603 = vmatpush1.msra.mxu0 %v396
    %1604 = vmatprep.subr.mxu0 %v393
    %1605 = vmatpush1.msra.mxu0 %v392
    %1606 = vmatprep.subr.mxu0 %v389
    %1607 = vmatpush1.msra.mxu0 %v388
    %1608 = vmatprep.subr.mxu0 %v385
    %1609 = vmatpush1.msra.mxu0 %v384
    %1610 = vmatprep.subr.mxu0 %v381
    %1611 = vmatpush1.msra.mxu0 %v380
    %1612 = vmatprep.subr.mxu0 0.0
    %1613 = vmatpush2.msra.mxu0 0.0
    %1614 = vmatprep.subr.mxu0 0.0
    %1615 = vmatpush2.msra.mxu0 0.0
    %1616 = vmatprep.subr.mxu0 0.0
    %1617 = vmatpush2.msra.mxu0 0.0
    %1618 = vmatprep.subr.mxu0 0.0
    %1619 = vmatpush2.msra.mxu0 0.0
    %1620 = vmatprep.subr.mxu0 0.0
    %1621 = vmatpush2.msra.mxu0 0.0
    %1622 = vmatprep.subr.mxu0 0.0
    %1623 = vmatpush2.msra.mxu0 0.0
    %1624 = vmatprep.subr.mxu0 0.0
    %1625 = vmatpush2.msra.mxu0 0.0
    %1626 = vmatprep.subr.mxu0 0.0
    %1627 = vmatpush2.msra.mxu0 0.0
    %1628 = vmatprep.subr.mxu0 0.0
    %1629 = vmatpush2.msra.mxu0 0.0
    %1630 = vmatprep.subr.mxu0 0.0
    %1631 = vmatpush2.msra.mxu0 0.0
    %1632 = vmatprep.subr.mxu0 0.0
    %1633 = vmatpush2.msra.mxu0 0.0
    %1634 = vmatprep.subr.mxu0 0.0
    %1635 = vmatpush2.msra.mxu0 0.0
    %1636 = vmatprep.subr.mxu0 0.0
    %1637 = vmatpush2.msra.mxu0 0.0
    %1638 = vmatprep.subr.mxu0 0.0
    %1639 = vmatpush2.msra.mxu0 0.0
    %1640 = vmatprep.subr.mxu0 0.0
    %1641 = vmatpush2.msra.mxu0 0.0
    %1642 = vmatprep.subr.mxu0 0.0
    %1643 = vmatpush2.msra.mxu0 0.0
    %1644 = vmatprep.mubr.f32.mxu0 0.0
    %1645 = vmatmul.mubr.f32.gmra.mxu0 %v1501
    %v1646 = vpop.f32.mrf.mxu0
    %v1647 = vadd.f32 0.0, %v1646
    %v1648 = vpop.f32.mrf.mxu0
    %v1649 = vadd.f32 0.0, %v1648
    %1650 = vdwg.mxu0
    %v1651 = vadd.f32 %v1505, %v1576
    %v1652 = vadd.f32 %v1506, %v1578
    %v1653 = vadd.f32 %v1507, %v1647
    %v1654 = vadd.f32 %v1508, %v1649
    %v1655 = vxor.u32 %v1651, 2147483648
    %v1656 = vmul.f32 %v1655, 1.442695
    %v1657 = vpow.pop %v1656
    %v1658 = vadd.f32 %v1657, 1.0
    %v1659 = vrcp.pop %v1658
    %v1660 = vmul.f32 1.0, %v1659
    %v1661 = vxor.u32 %v1652, 2147483648
    %v1662 = vmul.f32 %v1661, 1.442695
    %v1663 = vpow.pop %v1662
    %v1664 = vadd.f32 %v1663, 1.0
    %v1665 = vrcp.pop %v1664
    %v1666 = vmul.f32 1.0, %v1665
    %v1667 = vtanh.pop %v1653
    %v1668 = vxor.u32 %v1654, 2147483648
    %v1669 = vmul.f32 %v1668, 1.442695
    %v1670 = vpow.pop %v1669
    %v1671 = vadd.f32 %v1670, 1.0
    %v1672 = vrcp.pop %v1671
    %v1673 = vmul.f32 1.0, %v1672
    %v1674 = vmul.f32 %v1499, %v1660
    %v1675 = vmul.f32 %v1666, %v1667
    %v1676 = vadd.f32 %v1674, %v1675
    %v1677 = vtanh.pop %v1676
    %v1678 = vmul.f32 %v1673, %v1677
    %s1679 = scalar_lea.vmem [#allocation8], 48
    %1680 = vst [vmem:[%s1679] sm:$0xff] %v1678
    %s1681 = scalar_lea.vmem [#allocation2], 224
    %v1682 = vld [vmem:[%s1681] sm:$0xff]
    %v1683 = vld [vmem:[%s1681 + $0x8] sm:$0xff]
    %v1684 = vld [vmem:[%s1681 + $0x10] sm:$0xff]
    %v1685 = vld [vmem:[%s1681 + $0x18] sm:$0xff]
    %1686 = vmatprep.subr.mxu0 %v439
    %1687 = vmatpush1.msra.mxu0 %v438
    %1688 = vmatprep.subr.mxu0 %v435
    %1689 = vmatpush1.msra.mxu0 %v434
    %1690 = vmatprep.subr.mxu0 %v431
    %1691 = vmatpush1.msra.mxu0 %v430
    %1692 = vmatprep.subr.mxu0 %v427
    %1693 = vmatpush1.msra.mxu0 %v426
    %1694 = vmatprep.subr.mxu0 %v423
    %1695 = vmatpush1.msra.mxu0 %v422
    %1696 = vmatprep.subr.mxu0 %v419
    %1697 = vmatpush1.msra.mxu0 %v418
    %1698 = vmatprep.subr.mxu0 %v415
    %1699 = vmatpush1.msra.mxu0 %v414
    %1700 = vmatprep.subr.mxu0 %v411
    %1701 = vmatpush1.msra.mxu0 %v410
    %1702 = vmatprep.subr.mxu0 %v407
    %1703 = vmatpush1.msra.mxu0 %v406
    %1704 = vmatprep.subr.mxu0 %v403
    %1705 = vmatpush1.msra.mxu0 %v402
    %1706 = vmatprep.subr.mxu0 %v399
    %1707 = vmatpush1.msra.mxu0 %v398
    %1708 = vmatprep.subr.mxu0 %v395
    %1709 = vmatpush1.msra.mxu0 %v394
    %1710 = vmatprep.subr.mxu0 %v391
    %1711 = vmatpush1.msra.mxu0 %v390
    %1712 = vmatprep.subr.mxu0 %v387
    %1713 = vmatpush1.msra.mxu0 %v386
    %1714 = vmatprep.subr.mxu0 %v383
    %1715 = vmatpush1.msra.mxu0 %v382
    %1716 = vmatprep.subr.mxu0 %v379
    %1717 = vmatpush1.msra.mxu0 %v378
    %1718 = vmatprep.subr.mxu0 0.0
    %1719 = vmatpush2.msra.mxu0 0.0
    %1720 = vmatprep.subr.mxu0 0.0
    %1721 = vmatpush2.msra.mxu0 0.0
    %1722 = vmatprep.subr.mxu0 0.0
    %1723 = vmatpush2.msra.mxu0 0.0
    %1724 = vmatprep.subr.mxu0 0.0
    %1725 = vmatpush2.msra.mxu0 0.0
    %1726 = vmatprep.subr.mxu0 0.0
    %1727 = vmatpush2.msra.mxu0 0.0
    %1728 = vmatprep.subr.mxu0 0.0
    %1729 = vmatpush2.msra.mxu0 0.0
    %1730 = vmatprep.subr.mxu0 0.0
    %1731 = vmatpush2.msra.mxu0 0.0
    %1732 = vmatprep.subr.mxu0 0.0
    %1733 = vmatpush2.msra.mxu0 0.0
    %1734 = vmatprep.subr.mxu0 0.0
    %1735 = vmatpush2.msra.mxu0 0.0
    %1736 = vmatprep.subr.mxu0 0.0
    %1737 = vmatpush2.msra.mxu0 0.0
    %1738 = vmatprep.subr.mxu0 0.0
    %1739 = vmatpush2.msra.mxu0 0.0
    %1740 = vmatprep.subr.mxu0 0.0
    %1741 = vmatpush2.msra.mxu0 0.0
    %1742 = vmatprep.subr.mxu0 0.0
    %1743 = vmatpush2.msra.mxu0 0.0
    %1744 = vmatprep.subr.mxu0 0.0
    %1745 = vmatpush2.msra.mxu0 0.0
    %1746 = vmatprep.subr.mxu0 0.0
    %1747 = vmatpush2.msra.mxu0 0.0
    %1748 = vmatprep.subr.mxu0 0.0
    %1749 = vmatpush2.msra.mxu0 0.0
    %1750 = vmatprep.mubr.f32.mxu0 0.0
    %1751 = vmatmul.mubr.f32.gmra.mxu0 %v1678
    %v1752 = vpop.f32.mrf.mxu0
    %v1753 = vadd.f32 0.0, %v1752
    %v1754 = vpop.f32.mrf.mxu0
    %v1755 = vadd.f32 0.0, %v1754
    %1756 = vdwg.mxu0
    %1757 = vmatprep.subr.mxu0 %v441
    %1758 = vmatpush1.msra.mxu0 %v440
    %1759 = vmatprep.subr.mxu0 %v437
    %1760 = vmatpush1.msra.mxu0 %v436
    %1761 = vmatprep.subr.mxu0 %v433
    %1762 = vmatpush1.msra.mxu0 %v432
    %1763 = vmatprep.subr.mxu0 %v429
    %1764 = vmatpush1.msra.mxu0 %v428
    %1765 = vmatprep.subr.mxu0 %v425
    %1766 = vmatpush1.msra.mxu0 %v424
    %1767 = vmatprep.subr.mxu0 %v421
    %1768 = vmatpush1.msra.mxu0 %v420
    %1769 = vmatprep.subr.mxu0 %v417
    %1770 = vmatpush1.msra.mxu0 %v416
    %1771 = vmatprep.subr.mxu0 %v413
    %1772 = vmatpush1.msra.mxu0 %v412
    %1773 = vmatprep.subr.mxu0 %v409
    %1774 = vmatpush1.msra.mxu0 %v408
    %1775 = vmatprep.subr.mxu0 %v405
    %1776 = vmatpush1.msra.mxu0 %v404
    %1777 = vmatprep.subr.mxu0 %v401
    %1778 = vmatpush1.msra.mxu0 %v400
    %1779 = vmatprep.subr.mxu0 %v397
    %1780 = vmatpush1.msra.mxu0 %v396
    %1781 = vmatprep.subr.mxu0 %v393
    %1782 = vmatpush1.msra.mxu0 %v392
    %1783 = vmatprep.subr.mxu0 %v389
    %1784 = vmatpush1.msra.mxu0 %v388
    %1785 = vmatprep.subr.mxu0 %v385
    %1786 = vmatpush1.msra.mxu0 %v384
    %1787 = vmatprep.subr.mxu0 %v381
    %1788 = vmatpush1.msra.mxu0 %v380
    %1789 = vmatprep.subr.mxu0 0.0
    %1790 = vmatpush2.msra.mxu0 0.0
    %1791 = vmatprep.subr.mxu0 0.0
    %1792 = vmatpush2.msra.mxu0 0.0
    %1793 = vmatprep.subr.mxu0 0.0
    %1794 = vmatpush2.msra.mxu0 0.0
    %1795 = vmatprep.subr.mxu0 0.0
    %1796 = vmatpush2.msra.mxu0 0.0
    %1797 = vmatprep.subr.mxu0 0.0
    %1798 = vmatpush2.msra.mxu0 0.0
    %1799 = vmatprep.subr.mxu0 0.0
    %1800 = vmatpush2.msra.mxu0 0.0
    %1801 = vmatprep.subr.mxu0 0.0
    %1802 = vmatpush2.msra.mxu0 0.0
    %1803 = vmatprep.subr.mxu0 0.0
    %1804 = vmatpush2.msra.mxu0 0.0
    %1805 = vmatprep.subr.mxu0 0.0
    %1806 = vmatpush2.msra.mxu0 0.0
    %1807 = vmatprep.subr.mxu0 0.0
    %1808 = vmatpush2.msra.mxu0 0.0
    %1809 = vmatprep.subr.mxu0 0.0
    %1810 = vmatpush2.msra.mxu0 0.0
    %1811 = vmatprep.subr.mxu0 0.0
    %1812 = vmatpush2.msra.mxu0 0.0
    %1813 = vmatprep.subr.mxu0 0.0
    %1814 = vmatpush2.msra.mxu0 0.0
    %1815 = vmatprep.subr.mxu0 0.0
    %1816 = vmatpush2.msra.mxu0 0.0
    %1817 = vmatprep.subr.mxu0 0.0
    %1818 = vmatpush2.msra.mxu0 0.0
    %1819 = vmatprep.subr.mxu0 0.0
    %1820 = vmatpush2.msra.mxu0 0.0
    %1821 = vmatprep.mubr.f32.mxu0 0.0
    %1822 = vmatmul.mubr.f32.gmra.mxu0 %v1678
    %v1823 = vpop.f32.mrf.mxu0
    %v1824 = vadd.f32 0.0, %v1823
    %v1825 = vpop.f32.mrf.mxu0
    %v1826 = vadd.f32 0.0, %v1825
    %1827 = vdwg.mxu0
    %v1828 = vadd.f32 %v1682, %v1753
    %v1829 = vadd.f32 %v1683, %v1755
    %v1830 = vadd.f32 %v1684, %v1824
    %v1831 = vadd.f32 %v1685, %v1826
    %v1832 = vxor.u32 %v1828, 2147483648
    %v1833 = vmul.f32 %v1832, 1.442695
    %v1834 = vpow.pop %v1833
    %v1835 = vadd.f32 %v1834, 1.0
    %v1836 = vrcp.pop %v1835
    %v1837 = vmul.f32 1.0, %v1836
    %v1838 = vxor.u32 %v1829, 2147483648
    %v1839 = vmul.f32 %v1838, 1.442695
    %v1840 = vpow.pop %v1839
    %v1841 = vadd.f32 %v1840, 1.0
    %v1842 = vrcp.pop %v1841
    %v1843 = vmul.f32 1.0, %v1842
    %v1844 = vtanh.pop %v1830
    %v1845 = vxor.u32 %v1831, 2147483648
    %v1846 = vmul.f32 %v1845, 1.442695
    %v1847 = vpow.pop %v1846
    %v1848 = vadd.f32 %v1847, 1.0
    %v1849 = vrcp.pop %v1848
    %v1850 = vmul.f32 1.0, %v1849
    %v1851 = vmul.f32 %v1676, %v1837
    %v1852 = vmul.f32 %v1843, %v1844
    %v1853 = vadd.f32 %v1851, %v1852
    %v1854 = vtanh.pop %v1853
    %v1855 = vmul.f32 %v1850, %v1854
    %s1856 = scalar_lea.vmem [#allocation8], 56
    %1857 = vst [vmem:[%s1856] sm:$0xff] %v1855
    %1858 = vst [vmem:[#allocation3] sm:$0xff] %v1855
    %1859 = vst [vmem:[#allocation4] sm:$0xff] %v1853
    // Predicated region
    $region34: #{tpu_custom_call.1} parent=1 // pred_check
      %p1860 = pneg %p42
    $region35: #{tpu_custom_call.1} parent=1 // pred_check_branch
      %1862 = sbr.rel (%p1860) target = $region37
    $region36: #{tpu_custom_call.1} parent=1 // pred_region
      %1863 = vst [vmem:[#allocation9] sm:$0xff] %v1855
      %1864 = vst [vmem:[#allocation11] sm:$0xff] %v1853
    $region37: #{tpu_custom_call.1} parent=1 // pred_fallthru
      _
    // Predicated region
    $region38: #{tpu_custom_call.1} parent=1 // pred_check
      _
    $region39: #{tpu_custom_call.1} parent=1 // pred_check_branch
      %1866 = sbr.rel (0) target = $region41
    $region40: #{tpu_custom_call.1} parent=1 // pred_region
      %s1868 = ssub.s32 1024, 1024
      %1869 = vsyncadd [#allocation7], %s1868
      %s1870 = sshll.u32 [#allocation8], 4
      %s1871 = int_to_ptr.vmem [resolvable:$true] %s1870
      %1876 = dma.vmem_to_hbm [thread:$0]  %s1871, 1024, %s6, [#allocation7], 128, 128, 8
    $region41: #{tpu_custom_call.1} parent=1 // pred_fallthru
      _
    // Predicated region
    $region42: #{tpu_custom_call.1} parent=1 // pred_check
      _
    $region43: #{tpu_custom_call.1} parent=1 // pred_check_branch
      %1878 = sbr.rel (0) target = $region45
    $region44: #{tpu_custom_call.1} parent=1 // pred_region
      %s1880 = ssub.s32 128, 128
      %1881 = vsyncadd [#allocation10], %s1880
      %s1883 = sshll.u32 [#allocation9], 4
      %s1884 = int_to_ptr.vmem [resolvable:$true] %s1883
      %1886 = dma.vmem_to_hbm [thread:$0]  %s1884, 128, %s7, [#allocation10]
    $region45: #{tpu_custom_call.1} parent=1 // pred_fallthru
      _
    // Predicated region
    $region46: #{tpu_custom_call.1} parent=1 // pred_check
      _
    $region47: #{tpu_custom_call.1} parent=1 // pred_check_branch
      %1888 = sbr.rel (0) target = $region49
    $region48: #{tpu_custom_call.1} parent=1 // pred_region
      %s1890 = ssub.s32 128, 128
      %1891 = vsyncadd [#allocation10], %s1890
      %s1893 = sshll.u32 [#allocation11], 4
      %s1894 = int_to_ptr.vmem [resolvable:$true] %s1893
      %1896 = dma.vmem_to_hbm [thread:$0]  %s1894, 128, %s8, [#allocation10]
    $region49: #{tpu_custom_call.1} parent=1 // pred_fallthru
      _
    // Predicated region
    $region50: #{tpu_custom_call.1} parent=1 // pred_check
      _
    $region51: #{tpu_custom_call.1} parent=1 // pred_check_branch
      %1898 = sbr.rel (0) target = $region53
    $region52: #{tpu_custom_call.1} parent=1 // pred_region
      %1899 = dma.done [#allocation7], 1024
    $region53: #{tpu_custom_call.1} parent=1 // pred_fallthru
      _
    // Predicated region
    $region54: #{tpu_custom_call.1} parent=1 // pred_check
      _
    $region55: #{tpu_custom_call.1} parent=1 // pred_check_branch
      %1901 = sbr.rel (0) target = $region57
    $region56: #{tpu_custom_call.1} parent=1 // pred_region
      %1902 = dma.done [#allocation10], 128
    $region57: #{tpu_custom_call.1} parent=1 // pred_fallthru
      _
    // Predicated region
    $region58: #{tpu_custom_call.1} parent=1 // pred_check
      _
    $region59: #{tpu_custom_call.1} parent=1 // pred_check_branch
      %1904 = sbr.rel (0) target = $region61
    $region60: #{tpu_custom_call.1} parent=1 // pred_region
      %1905 = dma.done [#allocation10], 128
    $region61: #{tpu_custom_call.1} parent=1 // pred_fallthru
      _
    %1906 = vsyncpa [#allocation6], 1
    %1907 = vsyncpa [#allocation7], 1
    %1908 = vsyncpa [#allocation10], 1

// kernel: tpu_custom_call.1
$region0: #{tpu_custom_call.1}
  #allocation0 [shape = 'u32[]', space=smem, size = 0x4, offset = 0x4, fixed_abs, tag = 'smem constant byte address 0x4 - core index']
  #allocation1 [shape = 'u32[144,128]{1,0:T(1,128)}', space=vmem, size = 0x12000, scoped, tag = 'internal scratch']
  #allocation2 [shape = 'f32[8,8,512]{2,1,0:T(8,128)}', space=vmem, size = 0x20000, scoped, tag = 'scratch operand']
  #allocation3 [shape = 'f32[8,128]{1,0:T(8,128)}', space=vmem, size = 0x1000, scoped, tag = 'scratch operand']
  #allocation4 [shape = 'f32[8,128]{1,0:T(8,128)}', space=vmem, size = 0x1000, scoped, tag = 'scratch operand']
  %s0 = inlined_call_operand.vmem [shape: f32[8,8,4], index: 0, kind: input, shape index: {}]
  %s1 = inlined_call_operand.vmem [shape: f32[4,512], index: 1, kind: input, shape index: {}]
  %s2 = inlined_call_operand.hbm [shape: f32[128,512], index: 2, kind: input, shape index: {}]
  %s3 = inlined_call_operand.vmem [shape: f32[1,512], index: 3, kind: input, shape index: {}]
  %s4 = inlined_call_operand.vmem [shape: f32[1,8,128], index: 4, kind: input, shape index: {}]
  %s5 = inlined_call_operand.vmem [shape: f32[1,8,128], index: 5, kind: input, shape index: {}]
  %s6 = inlined_call_operand.hbm [shape: f32[8,8,128], index: 6, kind: output, shape index: {0}]
  %s7 = inlined_call_operand.hbm [shape: f32[1,8,128], index: 7, kind: output, shape index: {1}]
  %s8 = inlined_call_operand.hbm [shape: f32[1,8,128], index: 8, kind: output, shape index: {2}]
  %9 = xla_tuple %s6, %s7, %s8
  %s10 = sld [smem:[#allocation0]]
  $region62: #{tpu_custom_call.1} parent=0
    _
  %s12 = ssub.s32 1, %s10
  %s13 = scalar_select 0, %s12, %s10
  $region1: #{tpu_custom_call.1} parent=0
    #allocation5 [shape = 'u8[262144]{0}', space=vmem, size = 0x40000, scoped, tag = 'input window, operand 2, single buffered']
    #allocation6 [shape = 's32[1]{0}', space=sflag, size = 0x4, scoped, tag = 'scoped memory for tpu_custom_call.1']
    #allocation7 [shape = 's32[1]{0}', space=sflag, size = 0x4, scoped, tag = 'scoped memory for tpu_custom_call.1']
    #allocation8 [shape = 'u8[32768]{0}', space=vmem, size = 0x8000, scoped, tag = 'output window, operand 0, single buffered']
    #allocation9 [shape = 'u8[4096]{0}', space=vmem, size = 0x1000, scoped, tag = 'output window, operand 1, single buffered']
    #allocation10 [shape = 's32[1]{0}', space=sflag, size = 0x4, scoped, tag = 'scoped memory for tpu_custom_call.1']
    #allocation11 [shape = 'u8[4096]{0}', space=vmem, size = 0x1000, scoped, tag = 'output window, operand 2, single buffered']
    %14 = vsyncpa [#allocation6], 0
    %15 = vsyncpa [#allocation7], 0
    %16 = vsyncpa [#allocation10], 0
    // Predicated region
    $region2: #{tpu_custom_call.1} parent=1 // pred_check
      _
    $region3: #{tpu_custom_call.1} parent=1 // pred_check_branch
      %18 = sbr.rel (0) target = $region5
    $region4: #{tpu_custom_call.1} parent=1 // pred_region
      _
    $region5: #{tpu_custom_call.1} parent=1 // pred_fallthru
      _
    // Predicated region
    $region6: #{tpu_custom_call.1} parent=1 // pred_check
      _
    $region7: #{tpu_custom_call.1} parent=1 // pred_check_branch
      %20 = sbr.rel (0) target = $region9
    $region8: #{tpu_custom_call.1} parent=1 // pred_region
      _
    $region9: #{tpu_custom_call.1} parent=1 // pred_fallthru
      _
    // Predicated region
    $region10: #{tpu_custom_call.1} parent=1 // pred_check
      _
    $region11: #{tpu_custom_call.1} parent=1 // pred_check_branch
      %22 = sbr.rel (0) target = $region13
    $region12: #{tpu_custom_call.1} parent=1 // pred_region
      %s24 = ssub.s32 8192, 8192
      %25 = vsyncadd [#allocation6], %s24
      %s26 = sshll.u32 [#allocation5], 4
      %s27 = int_to_ptr.vmem [resolvable:$true] %s26
      %32 = dma.hbm_to_vmem [thread:$0]  %s2, 8192, %s27, [#allocation6], 512, 512, 32
    $region13: #{tpu_custom_call.1} parent=1 // pred_fallthru
      _
    // Predicated region
    $region14: #{tpu_custom_call.1} parent=1 // pred_check
      _
    $region15: #{tpu_custom_call.1} parent=1 // pred_check_branch
      %34 = sbr.rel (0) target = $region17
    $region16: #{tpu_custom_call.1} parent=1 // pred_region
      _
    $region17: #{tpu_custom_call.1} parent=1 // pred_fallthru
      _
    // Predicated region
    $region18: #{tpu_custom_call.1} parent=1 // pred_check
      _
    $region19: #{tpu_custom_call.1} parent=1 // pred_check_branch
      %36 = sbr.rel (0) target = $region21
    $region20: #{tpu_custom_call.1} parent=1 // pred_region
      _
    $region21: #{tpu_custom_call.1} parent=1 // pred_fallthru
      _
    // Predicated region
    $region22: #{tpu_custom_call.1} parent=1 // pred_check
      _
    $region23: #{tpu_custom_call.1} parent=1 // pred_check_branch
      %38 = sbr.rel (0) target = $region25
    $region24: #{tpu_custom_call.1} parent=1 // pred_region
      _
    $region25: #{tpu_custom_call.1} parent=1 // pred_fallthru
      _
    // Predicated region
    $region26: #{tpu_custom_call.1} parent=1 // pred_check
      _
    $region27: #{tpu_custom_call.1} parent=1 // pred_check_branch
      %40 = sbr.rel (0) target = $region29
    $region28: #{tpu_custom_call.1} parent=1 // pred_region
      %41 = dma.done [#allocation6], 8192
    $region29: #{tpu_custom_call.1} parent=1 // pred_fallthru
      _
    %p42 = scmp.eq.s32.totalorder 0, 0
    // Predicated region
    $region30: #{tpu_custom_call.1} parent=1 // pred_check
      %p43 = pneg %p42
    $region31: #{tpu_custom_call.1} parent=1 // pred_check_branch
      %45 = sbr.rel (%p43) target = $region33
    $region32: #{tpu_custom_call.1} parent=1 // pred_region
      %v46 = vld [vmem:[%s4] sm:$0xff]
      %47 = vst [vmem:[#allocation3] sm:$0xff] %v46
      %v48 = vld [vmem:[%s5] sm:$0xff]
      %49 = vst [vmem:[#allocation4] sm:$0xff] %v48
    $region33: #{tpu_custom_call.1} parent=1 // pred_fallthru
      _
    %v50 = vld [vmem:[%s1] sm:$0xff]
    %v51 = vld [vmem:[%s1 + $0x8] sm:$0xff]
    %v52 = vld [vmem:[%s0] sm:$0xff]
    %v53 = vld [vmem:[%s0 + $0x8] sm:$0xff]
    %v54 = vld [vmem:[%s0 + $0x10] sm:$0xff]
    %v55 = vld [vmem:[%s0 + $0x18] sm:$0xff]
    %v56 = vld [vmem:[%s0 + $0x20] sm:$0xff]
    %v57 = vld [vmem:[%s0 + $0x28] sm:$0xff]
    %v58 = vld [vmem:[%s0 + $0x30] sm:$0xff]
    %v59 = vld [vmem:[%s0 + $0x38] sm:$0xff]
    %v60 = vld [vmem:[%s3] sm:$0xf]
    %v62 = vlaneseq
    %v63 = vshrl.u32 %v62, 7
    %v64 = vsub.s32 0, %v63
    %v65 = vrot.slane %v60, %v64
    %v66 = vlaneseq
    %v67 = vshrl.u32 %v66, 7
    %v68 = vsub.s32 1, %v67
    %v69 = vrot.slane %v60, %v68
    %v70 = vlaneseq
    %v71 = vshrl.u32 %v70, 7
    %v72 = vsub.s32 2, %v71
    %v73 = vrot.slane %v60, %v72
    %v74 = vlaneseq
    %v75 = vshrl.u32 %v74, 7
    %v76 = vsub.s32 3, %v75
    %v77 = vrot.slane %v60, %v76
    %v84 = vcombine.high %v50, %v50
    %v85 = vcombine.high %v51, %v51
    %vm86 = vcmask 31744
    %v88 = vsel %vm86, %v52, 0
    %v91 = vsel %vm86, %v53, 0
    %v94 = vsel %vm86, %v54, 0
    %v97 = vsel %vm86, %v55, 0
    %v100 = vsel %vm86, %v56, 0
    %v103 = vsel %vm86, %v57, 0
    %v106 = vsel %vm86, %v58, 0
    %v109 = vsel %vm86, %v59, 0
    %vm111 = vcmask 1043456
    %v112 = vsel %vm111, %v50, 0
    %v114 = vsel %vm111, %v84, 0
    %v116 = vsel %vm111, %v51, 0
    %v118 = vsel %vm111, %v85, 0
    %120 = vmatprep.subr.mxu0 0.0
    %121 = vmatpush1.msra.mxu0 0.0
    %122 = vmatprep.subr.mxu0 0.0
    %123 = vmatpush1.msra.mxu0 0.0
    %124 = vmatprep.subr.mxu0 0.0
    %125 = vmatpush1.msra.mxu0 0.0
    %126 = vmatprep.subr.mxu0 0.0
    %127 = vmatpush1.msra.mxu0 0.0
    %128 = vmatprep.subr.mxu0 0.0
    %129 = vmatpush1.msra.mxu0 0.0
    %130 = vmatprep.subr.mxu0 0.0
    %131 = vmatpush1.msra.mxu0 0.0
    %132 = vmatprep.subr.mxu0 0.0
    %133 = vmatpush1.msra.mxu0 0.0
    %134 = vmatprep.subr.mxu0 0.0
    %135 = vmatpush1.msra.mxu0 0.0
    %136 = vmatprep.subr.mxu0 0.0
    %137 = vmatpush1.msra.mxu0 0.0
    %138 = vmatprep.subr.mxu0 0.0
    %139 = vmatpush1.msra.mxu0 0.0
    %140 = vmatprep.subr.mxu0 0.0
    %141 = vmatpush1.msra.mxu0 0.0
    %142 = vmatprep.subr.mxu0 0.0
    %143 = vmatpush1.msra.mxu0 0.0
    %144 = vmatprep.subr.mxu0 0.0
    %145 = vmatpush1.msra.mxu0 0.0
    %146 = vmatprep.subr.mxu0 0.0
    %147 = vmatpush1.msra.mxu0 0.0
    %148 = vmatprep.subr.mxu0 0.0
    %149 = vmatpush1.msra.mxu0 0.0
    %150 = vmatprep.subr.mxu0 %v114
    %151 = vmatpush1.msra.mxu0 %v112
    %152 = vmatprep.subr.mxu0 0.0
    %153 = vmatpush2.msra.mxu0 0.0
    %154 = vmatprep.subr.mxu0 0.0
    %155 = vmatpush2.msra.mxu0 0.0
    %156 = vmatprep.subr.mxu0 0.0
    %157 = vmatpush2.msra.mxu0 0.0
    %158 = vmatprep.subr.mxu0 0.0
    %159 = vmatpush2.msra.mxu0 0.0
    %160 = vmatprep.subr.mxu0 0.0
    %161 = vmatpush2.msra.mxu0 0.0
    %162 = vmatprep.subr.mxu0 0.0
    %163 = vmatpush2.msra.mxu0 0.0
    %164 = vmatprep.subr.mxu0 0.0
    %165 = vmatpush2.msra.mxu0 0.0
    %166 = vmatprep.subr.mxu0 0.0
    %167 = vmatpush2.msra.mxu0 0.0
    %168 = vmatprep.subr.mxu0 0.0
    %169 = vmatpush2.msra.mxu0 0.0
    %170 = vmatprep.subr.mxu0 0.0
    %171 = vmatpush2.msra.mxu0 0.0
    %172 = vmatprep.subr.mxu0 0.0
    %173 = vmatpush2.msra.mxu0 0.0
    %174 = vmatprep.subr.mxu0 0.0
    %175 = vmatpush2.msra.mxu0 0.0
    %176 = vmatprep.subr.mxu0 0.0
    %177 = vmatpush2.msra.mxu0 0.0
    %178 = vmatprep.subr.mxu0 0.0
    %179 = vmatpush2.msra.mxu0 0.0
    %180 = vmatprep.subr.mxu0 0.0
    %181 = vmatpush2.msra.mxu0 0.0
    %182 = vmatprep.subr.mxu0 0.0
    %183 = vmatpush2.msra.mxu0 0.0
    %184 = vmatprep.mubr.f32.mxu0 0.0
    %185 = vmatmul.mubr.f32.gmra.mxu0 %v88
    %v186 = vpop.f32.mrf.mxu0
    %v187 = vadd.f32 %v65, %v186
    %v188 = vpop.f32.mrf.mxu0
    %v189 = vadd.f32 %v69, %v188
    %190 = vmatprep.mubr.f32.mxu0 0.0
    %191 = vmatmul.mubr.f32.gmra.mxu0 %v91
    %v192 = vpop.f32.mrf.mxu0
    %v193 = vadd.f32 %v65, %v192
    %v194 = vpop.f32.mrf.mxu0
    %v195 = vadd.f32 %v69, %v194
    %196 = vmatprep.mubr.f32.mxu0 0.0
    %197 = vmatmul.mubr.f32.gmra.mxu0 %v94
    %v198 = vpop.f32.mrf.mxu0
    %v199 = vadd.f32 %v65, %v198
    %v200 = vpop.f32.mrf.mxu0
    %v201 = vadd.f32 %v69, %v200
    %202 = vmatprep.mubr.f32.mxu0 0.0
    %203 = vmatmul.mubr.f32.gmra.mxu0 %v97
    %v204 = vpop.f32.mrf.mxu0
    %v205 = vadd.f32 %v65, %v204
    %v206 = vpop.f32.mrf.mxu0
    %v207 = vadd.f32 %v69, %v206
    %208 = vmatprep.mubr.f32.mxu0 0.0
    %209 = vmatmul.mubr.f32.gmra.mxu0 %v100
    %v210 = vpop.f32.mrf.mxu0
    %v211 = vadd.f32 %v65, %v210
    %v212 = vpop.f32.mrf.mxu0
    %v213 = vadd.f32 %v69, %v212
    %214 = vmatprep.mubr.f32.mxu0 0.0
    %215 = vmatmul.mubr.f32.gmra.mxu0 %v103
    %v216 = vpop.f32.mrf.mxu0
    %v217 = vadd.f32 %v65, %v216
    %v218 = vpop.f32.mrf.mxu0
    %v219 = vadd.f32 %v69, %v218
    %220 = vmatprep.mubr.f32.mxu0 0.0
    %221 = vmatmul.mubr.f32.gmra.mxu0 %v106
    %v222 = vpop.f32.mrf.mxu0
    %v223 = vadd.f32 %v65, %v222
    %v224 = vpop.f32.mrf.mxu0
    %v225 = vadd.f32 %v69, %v224
    %226 = vmatprep.mubr.f32.mxu0 0.0
    %227 = vmatmul.mubr.f32.gmra.mxu0 %v109
    %v228 = vpop.f32.mrf.mxu0
    %v229 = vadd.f32 %v65, %v228
    %v230 = vpop.f32.mrf.mxu0
    %v231 = vadd.f32 %v69, %v230
    %232 = vdwg.mxu0
    %233 = vmatprep.subr.mxu0 0.0
    %234 = vmatpush1.msra.mxu0 0.0
    %235 = vmatprep.subr.mxu0 0.0
    %236 = vmatpush1.msra.mxu0 0.0
    %237 = vmatprep.subr.mxu0 0.0
    %238 = vmatpush1.msra.mxu0 0.0
    %239 = vmatprep.subr.mxu0 0.0
    %240 = vmatpush1.msra.mxu0 0.0
    %241 = vmatprep.subr.mxu0 0.0
    %242 = vmatpush1.msra.mxu0 0.0
    %243 = vmatprep.subr.mxu0 0.0
    %244 = vmatpush1.msra.mxu0 0.0
    %245 = vmatprep.subr.mxu0 0.0
    %246 = vmatpush1.msra.mxu0 0.0
    %247 = vmatprep.subr.mxu0 0.0
    %248 = vmatpush1.msra.mxu0 0.0
    %249 = vmatprep.subr.mxu0 0.0
    %250 = vmatpush1.msra.mxu0 0.0
    %251 = vmatprep.subr.mxu0 0.0
    %252 = vmatpush1.msra.mxu0 0.0
    %253 = vmatprep.subr.mxu0 0.0
    %254 = vmatpush1.msra.mxu0 0.0
    %255 = vmatprep.subr.mxu0 0.0
    %256 = vmatpush1.msra.mxu0 0.0
    %257 = vmatprep.subr.mxu0 0.0
    %258 = vmatpush1.msra.mxu0 0.0
    %259 = vmatprep.subr.mxu0 0.0
    %260 = vmatpush1.msra.mxu0 0.0
    %261 = vmatprep.subr.mxu0 0.0
    %262 = vmatpush1.msra.mxu0 0.0
    %263 = vmatprep.subr.mxu0 %v118
    %264 = vmatpush1.msra.mxu0 %v116
    %265 = vmatprep.subr.mxu0 0.0
    %266 = vmatpush2.msra.mxu0 0.0
    %267 = vmatprep.subr.mxu0 0.0
    %268 = vmatpush2.msra.mxu0 0.0
    %269 = vmatprep.subr.mxu0 0.0
    %270 = vmatpush2.msra.mxu0 0.0
    %271 = vmatprep.subr.mxu0 0.0
    %272 = vmatpush2.msra.mxu0 0.0
    %273 = vmatprep.subr.mxu0 0.0
    %274 = vmatpush2.msra.mxu0 0.0
    %275 = vmatprep.subr.mxu0 0.0
    %276 = vmatpush2.msra.mxu0 0.0
    %277 = vmatprep.subr.mxu0 0.0
    %278 = vmatpush2.msra.mxu0 0.0
    %279 = vmatprep.subr.mxu0 0.0
    %280 = vmatpush2.msra.mxu0 0.0
    %281 = vmatprep.subr.mxu0 0.0
    %282 = vmatpush2.msra.mxu0 0.0
    %283 = vmatprep.subr.mxu0 0.0
    %284 = vmatpush2.msra.mxu0 0.0
    %285 = vmatprep.subr.mxu0 0.0
    %286 = vmatpush2.msra.mxu0 0.0
    %287 = vmatprep.subr.mxu0 0.0
    %288 = vmatpush2.msra.mxu0 0.0
    %289 = vmatprep.subr.mxu0 0.0
    %290 = vmatpush2.msra.mxu0 0.0
    %291 = vmatprep.subr.mxu0 0.0
    %292 = vmatpush2.msra.mxu0 0.0
    %293 = vmatprep.subr.mxu0 0.0
    %294 = vmatpush2.msra.mxu0 0.0
    %295 = vmatprep.subr.mxu0 0.0
    %296 = vmatpush2.msra.mxu0 0.0
    %297 = vmatprep.mubr.f32.mxu0 0.0
    %298 = vmatmul.mubr.f32.gmra.mxu0 %v88
    %v299 = vpop.f32.mrf.mxu0
    %v300 = vadd.f32 %v73, %v299
    %v301 = vpop.f32.mrf.mxu0
    %v302 = vadd.f32 %v77, %v301
    %303 = vmatprep.mubr.f32.mxu0 0.0
    %304 = vmatmul.mubr.f32.gmra.mxu0 %v91
    %v305 = vpop.f32.mrf.mxu0
    %v306 = vadd.f32 %v73, %v305
    %v307 = vpop.f32.mrf.mxu0
    %v308 = vadd.f32 %v77, %v307
    %309 = vmatprep.mubr.f32.mxu0 0.0
    %310 = vmatmul.mubr.f32.gmra.mxu0 %v94
    %v311 = vpop.f32.mrf.mxu0
    %v312 = vadd.f32 %v73, %v311
    %v313 = vpop.f32.mrf.mxu0
    %v314 = vadd.f32 %v77, %v313
    %315 = vmatprep.mubr.f32.mxu0 0.0
    %316 = vmatmul.mubr.f32.gmra.mxu0 %v97
    %v317 = vpop.f32.mrf.mxu0
    %v318 = vadd.f32 %v73, %v317
    %v319 = vpop.f32.mrf.mxu0
    %v320 = vadd.f32 %v77, %v319
    %321 = vmatprep.mubr.f32.mxu0 0.0
    %322 = vmatmul.mubr.f32.gmra.mxu0 %v100
    %v323 = vpop.f32.mrf.mxu0
    %v324 = vadd.f32 %v73, %v323
    %v325 = vpop.f32.mrf.mxu0
    %v326 = vadd.f32 %v77, %v325
    %327 = vmatprep.mubr.f32.mxu0 0.0
    %328 = vmatmul.mubr.f32.gmra.mxu0 %v103
    %v329 = vpop.f32.mrf.mxu0
    %v330 = vadd.f32 %v73, %v329
    %v331 = vpop.f32.mrf.mxu0
    %v332 = vadd.f32 %v77, %v331
    %333 = vmatprep.mubr.f32.mxu0 0.0
    %334 = vmatmul.mubr.f32.gmra.mxu0 %v106
    %v335 = vpop.f32.mrf.mxu0
    %v336 = vadd.f32 %v73, %v335
    %v337 = vpop.f32.mrf.mxu0
    %v338 = vadd.f32 %v77, %v337
    %339 = vmatprep.mubr.f32.mxu0 0.0
    %340 = vmatmul.mubr.f32.gmra.mxu0 %v109
    %v341 = vpop.f32.mrf.mxu0
    %v342 = vadd.f32 %v73, %v341
    %v343 = vpop.f32.mrf.mxu0
    %v344 = vadd.f32 %v77, %v343
    %345 = vdwg.mxu0
    %346 = vst [vmem:[#allocation2] sm:$0xff] %v187
    %347 = vst [vmem:[#allocation2 + $0x8] sm:$0xff] %v189
    %348 = vst [vmem:[#allocation2 + $0x10] sm:$0xff] %v300
    %349 = vst [vmem:[#allocation2 + $0x18] sm:$0xff] %v302
    %350 = vst [vmem:[#allocation2 + $0x20] sm:$0xff] %v193
    %351 = vst [vmem:[#allocation2 + $0x28] sm:$0xff] %v195
    %352 = vst [vmem:[#allocation2 + $0x30] sm:$0xff] %v306
    %353 = vst [vmem:[#allocation2 + $0x38] sm:$0xff] %v308
    %354 = vst [vmem:[#allocation2 + $0x40] sm:$0xff] %v199
    %355 = vst [vmem:[#allocation2 + $0x48] sm:$0xff] %v201
    %356 = vst [vmem:[#allocation2 + $0x50] sm:$0xff] %v312
    %357 = vst [vmem:[#allocation2 + $0x58] sm:$0xff] %v314
    %358 = vst [vmem:[#allocation2 + $0x60] sm:$0xff] %v205
    %359 = vst [vmem:[#allocation2 + $0x68] sm:$0xff] %v207
    %360 = vst [vmem:[#allocation2 + $0x70] sm:$0xff] %v318
    %361 = vst [vmem:[#allocation2 + $0x78] sm:$0xff] %v320
    %362 = vst [vmem:[#allocation2 + $0x80] sm:$0xff] %v211
    %363 = vst [vmem:[#allocation2 + $0x88] sm:$0xff] %v213
    %364 = vst [vmem:[#allocation2 + $0x90] sm:$0xff] %v324
    %365 = vst [vmem:[#allocation2 + $0x98] sm:$0xff] %v326
    %366 = vst [vmem:[#allocation2 + $0xa0] sm:$0xff] %v217
    %367 = vst [vmem:[#allocation2 + $0xa8] sm:$0xff] %v219
    %368 = vst [vmem:[#allocation2 + $0xb0] sm:$0xff] %v330
    %369 = vst [vmem:[#allocation2 + $0xb8] sm:$0xff] %v332
    %370 = vst [vmem:[#allocation2 + $0xc0] sm:$0xff] %v223
    %371 = vst [vmem:[#allocation2 + $0xc8] sm:$0xff] %v225
    %372 = vst [vmem:[#allocation2 + $0xd0] sm:$0xff] %v336
    %373 = vst [vmem:[#allocation2 + $0xd8] sm:$0xff] %v338
    %374 = vst [vmem:[#allocation2 + $0xe0] sm:$0xff] %v229
    %375 = vst [vmem:[#allocation2 + $0xe8] sm:$0xff] %v231
    %376 = vst [vmem:[#allocation2 + $0xf0] sm:$0xff] %v342
    %377 = vst [vmem:[#allocation2 + $0xf8] sm:$0xff] %v344
    %v378 = vld [vmem:[#allocation5] sm:$0xff]
    %v379 = vld [vmem:[#allocation5 + $0x8] sm:$0xff]
    %v380 = vld [vmem:[#allocation5 + $0x10] sm:$0xff]
    %v381 = vld [vmem:[#allocation5 + $0x18] sm:$0xff]
    %v382 = vld [vmem:[#allocation5 + $0x20] sm:$0xff]
    %v383 = vld [vmem:[#allocation5 + $0x28] sm:$0xff]
    %v384 = vld [vmem:[#allocation5 + $0x30] sm:$0xff]
    %v385 = vld [vmem:[#allocation5 + $0x38] sm:$0xff]
    %v386 = vld [vmem:[#allocation5 + $0x40] sm:$0xff]
    %v387 = vld [vmem:[#allocation5 + $0x48] sm:$0xff]
    %v388 = vld [vmem:[#allocation5 + $0x50] sm:$0xff]
    %v389 = vld [vmem:[#allocation5 + $0x58] sm:$0xff]
    %v390 = vld [vmem:[#allocation5 + $0x60] sm:$0xff]
    %v391 = vld [vmem:[#allocation5 + $0x68] sm:$0xff]
    %v392 = vld [vmem:[#allocation5 + $0x70] sm:$0xff]
    %v393 = vld [vmem:[#allocation5 + $0x78] sm:$0xff]
    %v394 = vld [vmem:[#allocation5 + $0x80] sm:$0xff]
    %v395 = vld [vmem:[#allocation5 + $0x88] sm:$0xff]
    %v396 = vld [vmem:[#allocation5 + $0x90] sm:$0xff]
    %v397 = vld [vmem:[#allocation5 + $0x98] sm:$0xff]
    %v398 = vld [vmem:[#allocation5 + $0xa0] sm:$0xff]
    %v399 = vld [vmem:[#allocation5 + $0xa8] sm:$0xff]
    %v400 = vld [vmem:[#allocation5 + $0xb0] sm:$0xff]
    %v401 = vld [vmem:[#allocation5 + $0xb8] sm:$0xff]
    %v402 = vld [vmem:[#allocation5 + $0xc0] sm:$0xff]
    %v403 = vld [vmem:[#allocation5 + $0xc8] sm:$0xff]
    %v404 = vld [vmem:[#allocation5 + $0xd0] sm:$0xff]
    %v405 = vld [vmem:[#allocation5 + $0xd8] sm:$0xff]
    %v406 = vld [vmem:[#allocation5 + $0xe0] sm:$0xff]
    %v407 = vld [vmem:[#allocation5 + $0xe8] sm:$0xff]
    %v408 = vld [vmem:[#allocation5 + $0xf0] sm:$0xff]
    %v409 = vld [vmem:[#allocation5 + $0xf8] sm:$0xff]
    %v410 = vld [vmem:[#allocation5 + $0x100] sm:$0xff]
    %v411 = vld [vmem:[#allocation5 + $0x108] sm:$0xff]
    %v412 = vld [vmem:[#allocation5 + $0x110] sm:$0xff]
    %v413 = vld [vmem:[#allocation5 + $0x118] sm:$0xff]
    %v414 = vld [vmem:[#allocation5 + $0x120] sm:$0xff]
    %v415 = vld [vmem:[#allocation5 + $0x128] sm:$0xff]
    %v416 = vld [vmem:[#allocation5 + $0x130] sm:$0xff]
    %v417 = vld [vmem:[#allocation5 + $0x138] sm:$0xff]
    %v418 = vld [vmem:[#allocation5 + $0x140] sm:$0xff]
    %v419 = vld [vmem:[#allocation5 + $0x148] sm:$0xff]
    %v420 = vld [vmem:[#allocation5 + $0x150] sm:$0xff]
    %v421 = vld [vmem:[#allocation5 + $0x158] sm:$0xff]
    %v422 = vld [vmem:[#allocation5 + $0x160] sm:$0xff]
    %v423 = vld [vmem:[#allocation5 + $0x168] sm:$0xff]
    %v424 = vld [vmem:[#allocation5 + $0x170] sm:$0xff]
    %v425 = vld [vmem:[#allocation5 + $0x178] sm:$0xff]
    %v426 = vld [vmem:[#allocation5 + $0x180] sm:$0xff]
    %v427 = vld [vmem:[#allocation5 + $0x188] sm:$0xff]
    %v428 = vld [vmem:[#allocation5 + $0x190] sm:$0xff]
    %v429 = vld [vmem:[#allocation5 + $0x198] sm:$0xff]
    %v430 = vld [vmem:[#allocation5 + $0x1a0] sm:$0xff]
    %v431 = vld [vmem:[#allocation5 + $0x1a8] sm:$0xff]
    %v432 = vld [vmem:[#allocation5 + $0x1b0] sm:$0xff]
    %v433 = vld [vmem:[#allocation5 + $0x1b8] sm:$0xff]
    %v434 = vld [vmem:[#allocation5 + $0x1c0] sm:$0xff]
    %v435 = vld [vmem:[#allocation5 + $0x1c8] sm:$0xff]
    %v436 = vld [vmem:[#allocation5 + $0x1d0] sm:$0xff]
    %v437 = vld [vmem:[#allocation5 + $0x1d8] sm:$0xff]
    %v438 = vld [vmem:[#allocation5 + $0x1e0] sm:$0xff]
    %v439 = vld [vmem:[#allocation5 + $0x1e8] sm:$0xff]
    %v440 = vld [vmem:[#allocation5 + $0x1f0] sm:$0xff]
    %v441 = vld [vmem:[#allocation5 + $0x1f8] sm:$0xff]
    %v442 = vld [vmem:[#allocation3] sm:$0xff]
    %v443 = vld [vmem:[#allocation4] sm:$0xff]
    %v444 = vld [vmem:[#allocation2] sm:$0xff]
    %v445 = vld [vmem:[#allocation2 + $0x8] sm:$0xff]
    %v446 = vld [vmem:[#allocation2 + $0x10] sm:$0xff]
    %v447 = vld [vmem:[#allocation2 + $0x18] sm:$0xff]
    %448 = vmatprep.subr.mxu0 %v439
    %449 = vmatpush1.msra.mxu0 %v438
    %450 = vmatprep.subr.mxu0 %v435
    %451 = vmatpush1.msra.mxu0 %v434
    %452 = vmatprep.subr.mxu0 %v431
    %453 = vmatpush1.msra.mxu0 %v430
    %454 = vmatprep.subr.mxu0 %v427
    %455 = vmatpush1.msra.mxu0 %v426
    %456 = vmatprep.subr.mxu0 %v423
    %457 = vmatpush1.msra.mxu0 %v422
    %458 = vmatprep.subr.mxu0 %v419
    %459 = vmatpush1.msra.mxu0 %v418
    %460 = vmatprep.subr.mxu0 %v415
    %461 = vmatpush1.msra.mxu0 %v414
    %462 = vmatprep.subr.mxu0 %v411
    %463 = vmatpush1.msra.mxu0 %v410
    %464 = vmatprep.subr.mxu0 %v407
    %465 = vmatpush1.msra.mxu0 %v406
    %466 = vmatprep.subr.mxu0 %v403
    %467 = vmatpush1.msra.mxu0 %v402
    %468 = vmatprep.subr.mxu0 %v399
    %469 = vmatpush1.msra.mxu0 %v398
    %470 = vmatprep.subr.mxu0 %v395
    %471 = vmatpush1.msra.mxu0 %v394
    %472 = vmatprep.subr.mxu0 %v391
    %473 = vmatpush1.msra.mxu0 %v390
    %474 = vmatprep.subr.mxu0 %v387
    %475 = vmatpush1.msra.mxu0 %v386
    %476 = vmatprep.subr.mxu0 %v383
    %477 = vmatpush1.msra.mxu0 %v382
    %478 = vmatprep.subr.mxu0 %v379
    %479 = vmatpush1.msra.mxu0 %v378
    %480 = vmatprep.subr.mxu0 0.0
    %481 = vmatpush2.msra.mxu0 0.0
    %482 = vmatprep.subr.mxu0 0.0
    %483 = vmatpush2.msra.mxu0 0.0
    %484 = vmatprep.subr.mxu0 0.0
    %485 = vmatpush2.msra.mxu0 0.0
    %486 = vmatprep.subr.mxu0 0.0
    %487 = vmatpush2.msra.mxu0 0.0
    %488 = vmatprep.subr.mxu0 0.0
    %489 = vmatpush2.msra.mxu0 0.0
    %490 = vmatprep.subr.mxu0 0.0
    %491 = vmatpush2.msra.mxu0 0.0
    %492 = vmatprep.subr.mxu0 0.0
    %493 = vmatpush2.msra.mxu0 0.0
    %494 = vmatprep.subr.mxu0 0.0
    %495 = vmatpush2.msra.mxu0 0.0
    %496 = vmatprep.subr.mxu0 0.0
    %497 = vmatpush2.msra.mxu0 0.0
    %498 = vmatprep.subr.mxu0 0.0
    %499 = vmatpush2.msra.mxu0 0.0
    %500 = vmatprep.subr.mxu0 0.0
    %501 = vmatpush2.msra.mxu0 0.0
    %502 = vmatprep.subr.mxu0 0.0
    %503 = vmatpush2.msra.mxu0 0.0
    %504 = vmatprep.subr.mxu0 0.0
    %505 = vmatpush2.msra.mxu0 0.0
    %506 = vmatprep.subr.mxu0 0.0
    %507 = vmatpush2.msra.mxu0 0.0
    %508 = vmatprep.subr.mxu0 0.0
    %509 = vmatpush2.msra.mxu0 0.0
    %510 = vmatprep.subr.mxu0 0.0
    %511 = vmatpush2.msra.mxu0 0.0
    %512 = vmatprep.mubr.f32.mxu0 0.0
    %513 = vmatmul.mubr.f32.gmra.mxu0 %v442
    %v514 = vpop.f32.mrf.mxu0
    %v515 = vadd.f32 0.0, %v514
    %v516 = vpop.f32.mrf.mxu0
    %v517 = vadd.f32 0.0, %v516
    %518 = vdwg.mxu0
    %519 = vmatprep.subr.mxu0 %v441
    %520 = vmatpush1.msra.mxu0 %v440
    %521 = vmatprep.subr.mxu0 %v437
    %522 = vmatpush1.msra.mxu0 %v436
    %523 = vmatprep.subr.mxu0 %v433
    %524 = vmatpush1.msra.mxu0 %v432
    %525 = vmatprep.subr.mxu0 %v429
    %526 = vmatpush1.msra.mxu0 %v428
    %527 = vmatprep.subr.mxu0 %v425
    %528 = vmatpush1.msra.mxu0 %v424
    %529 = vmatprep.subr.mxu0 %v421
    %530 = vmatpush1.msra.mxu0 %v420
    %531 = vmatprep.subr.mxu0 %v417
    %532 = vmatpush1.msra.mxu0 %v416
    %533 = vmatprep.subr.mxu0 %v413
    %534 = vmatpush1.msra.mxu0 %v412
    %535 = vmatprep.subr.mxu0 %v409
    %536 = vmatpush1.msra.mxu0 %v408
    %537 = vmatprep.subr.mxu0 %v405
    %538 = vmatpush1.msra.mxu0 %v404
    %539 = vmatprep.subr.mxu0 %v401
    %540 = vmatpush1.msra.mxu0 %v400
    %541 = vmatprep.subr.mxu0 %v397
    %542 = vmatpush1.msra.mxu0 %v396
    %543 = vmatprep.subr.mxu0 %v393
    %544 = vmatpush1.msra.mxu0 %v392
    %545 = vmatprep.subr.mxu0 %v389
    %546 = vmatpush1.msra.mxu0 %v388
    %547 = vmatprep.subr.mxu0 %v385
    %548 = vmatpush1.msra.mxu0 %v384
    %549 = vmatprep.subr.mxu0 %v381
    %550 = vmatpush1.msra.mxu0 %v380
    %551 = vmatprep.subr.mxu0 0.0
    %552 = vmatpush2.msra.mxu0 0.0
    %553 = vmatprep.subr.mxu0 0.0
    %554 = vmatpush2.msra.mxu0 0.0
    %555 = vmatprep.subr.mxu0 0.0
    %556 = vmatpush2.msra.mxu0 0.0
    %557 = vmatprep.subr.mxu0 0.0
    %558 = vmatpush2.msra.mxu0 0.0
    %559 = vmatprep.subr.mxu0 0.0
    %560 = vmatpush2.msra.mxu0 0.0
    %561 = vmatprep.subr.mxu0 0.0
    %562 = vmatpush2.msra.mxu0 0.0
    %563 = vmatprep.subr.mxu0 0.0
    %564 = vmatpush2.msra.mxu0 0.0
    %565 = vmatprep.subr.mxu0 0.0
    %566 = vmatpush2.msra.mxu0 0.0
    %567 = vmatprep.subr.mxu0 0.0
    %568 = vmatpush2.msra.mxu0 0.0
    %569 = vmatprep.subr.mxu0 0.0
    %570 = vmatpush2.msra.mxu0 0.0
    %571 = vmatprep.subr.mxu0 0.0
    %572 = vmatpush2.msra.mxu0 0.0
    %573 = vmatprep.subr.mxu0 0.0
    %574 = vmatpush2.msra.mxu0 0.0
    %575 = vmatprep.subr.mxu0 0.0
    %576 = vmatpush2.msra.mxu0 0.0
    %577 = vmatprep.subr.mxu0 0.0
    %578 = vmatpush2.msra.mxu0 0.0
    %579 = vmatprep.subr.mxu0 0.0
    %580 = vmatpush2.msra.mxu0 0.0
    %581 = vmatprep.subr.mxu0 0.0
    %582 = vmatpush2.msra.mxu0 0.0
    %583 = vmatprep.mubr.f32.mxu0 0.0
    %584 = vmatmul.mubr.f32.gmra.mxu0 %v442
    %v585 = vpop.f32.mrf.mxu0
    %v586 = vadd.f32 0.0, %v585
    %v587 = vpop.f32.mrf.mxu0
    %v588 = vadd.f32 0.0, %v587
    %589 = vdwg.mxu0
    %v590 = vadd.f32 %v444, %v515
    %v591 = vadd.f32 %v445, %v517
    %v592 = vadd.f32 %v446, %v586
    %v593 = vadd.f32 %v447, %v588
    %v594 = vxor.u32 %v590, 2147483648
    %v595 = vmul.f32 %v594, 1.442695
    %v596 = vpow.pop %v595
    %v597 = vadd.f32 %v596, 1.0
    %v598 = vrcp.pop %v597
    %v599 = vmul.f32 1.0, %v598
    %v600 = vxor.u32 %v591, 2147483648
    %v601 = vmul.f32 %v600, 1.442695
    %v602 = vpow.pop %v601
    %v603 = vadd.f32 %v602, 1.0
    %v604 = vrcp.pop %v603
    %v605 = vmul.f32 1.0, %v604
    %v606 = vtanh.pop %v592
    %v607 = vxor.u32 %v593, 2147483648
    %v608 = vmul.f32 %v607, 1.442695
    %v609 = vpow.pop %v608
    %v610 = vadd.f32 %v609, 1.0
    %v611 = vrcp.pop %v610
    %v612 = vmul.f32 1.0, %v611
    %v613 = vmul.f32 %v443, %v599
    %v614 = vmul.f32 %v605, %v606
    %v615 = vadd.f32 %v613, %v614
    %v616 = vtanh.pop %v615
    %v617 = vmul.f32 %v612, %v616
    %618 = vst [vmem:[#allocation8] sm:$0xff] %v617
    %s619 = scalar_lea.vmem [#allocation2], 32
    %v620 = vld [vmem:[%s619] sm:$0xff]
    %v621 = vld [vmem:[%s619 + $0x8] sm:$0xff]
    %v622 = vld [vmem:[%s619 + $0x10] sm:$0xff]
    %v623 = vld [vmem:[%s619 + $0x18] sm:$0xff]
    %624 = vmatprep.subr.mxu0 %v439
    %625 = vmatpush1.msra.mxu0 %v438
    %626 = vmatprep.subr.mxu0 %v435
    %627 = vmatpush1.msra.mxu0 %v434
    %628 = vmatprep.subr.mxu0 %v431
    %629 = vmatpush1.msra.mxu0 %v430
    %630 = vmatprep.subr.mxu0 %v427
    %631 = vmatpush1.msra.mxu0 %v426
    %632 = vmatprep.subr.mxu0 %v423
    %633 = vmatpush1.msra.mxu0 %v422
    %634 = vmatprep.subr.mxu0 %v419
    %635 = vmatpush1.msra.mxu0 %v418
    %636 = vmatprep.subr.mxu0 %v415
    %637 = vmatpush1.msra.mxu0 %v414
    %638 = vmatprep.subr.mxu0 %v411
    %639 = vmatpush1.msra.mxu0 %v410
    %640 = vmatprep.subr.mxu0 %v407
    %641 = vmatpush1.msra.mxu0 %v406
    %642 = vmatprep.subr.mxu0 %v403
    %643 = vmatpush1.msra.mxu0 %v402
    %644 = vmatprep.subr.mxu0 %v399
    %645 = vmatpush1.msra.mxu0 %v398
    %646 = vmatprep.subr.mxu0 %v395
    %647 = vmatpush1.msra.mxu0 %v394
    %648 = vmatprep.subr.mxu0 %v391
    %649 = vmatpush1.msra.mxu0 %v390
    %650 = vmatprep.subr.mxu0 %v387
    %651 = vmatpush1.msra.mxu0 %v386
    %652 = vmatprep.subr.mxu0 %v383
    %653 = vmatpush1.msra.mxu0 %v382
    %654 = vmatprep.subr.mxu0 %v379
    %655 = vmatpush1.msra.mxu0 %v378
    %656 = vmatprep.subr.mxu0 0.0
    %657 = vmatpush2.msra.mxu0 0.0
    %658 = vmatprep.subr.mxu0 0.0
    %659 = vmatpush2.msra.mxu0 0.0
    %660 = vmatprep.subr.mxu0 0.0
    %661 = vmatpush2.msra.mxu0 0.0
    %662 = vmatprep.subr.mxu0 0.0
    %663 = vmatpush2.msra.mxu0 0.0
    %664 = vmatprep.subr.mxu0 0.0
    %665 = vmatpush2.msra.mxu0 0.0
    %666 = vmatprep.subr.mxu0 0.0
    %667 = vmatpush2.msra.mxu0 0.0
    %668 = vmatprep.subr.mxu0 0.0
    %669 = vmatpush2.msra.mxu0 0.0
    %670 = vmatprep.subr.mxu0 0.0
    %671 = vmatpush2.msra.mxu0 0.0
    %672 = vmatprep.subr.mxu0 0.0
    %673 = vmatpush2.msra.mxu0 0.0
    %674 = vmatprep.subr.mxu0 0.0
    %675 = vmatpush2.msra.mxu0 0.0
    %676 = vmatprep.subr.mxu0 0.0
    %677 = vmatpush2.msra.mxu0 0.0
    %678 = vmatprep.subr.mxu0 0.0
    %679 = vmatpush2.msra.mxu0 0.0
    %680 = vmatprep.subr.mxu0 0.0
    %681 = vmatpush2.msra.mxu0 0.0
    %682 = vmatprep.subr.mxu0 0.0
    %683 = vmatpush2.msra.mxu0 0.0
    %684 = vmatprep.subr.mxu0 0.0
    %685 = vmatpush2.msra.mxu0 0.0
    %686 = vmatprep.subr.mxu0 0.0
    %687 = vmatpush2.msra.mxu0 0.0
    %688 = vmatprep.mubr.f32.mxu0 0.0
    %689 = vmatmul.mubr.f32.gmra.mxu0 %v617
    %v690 = vpop.f32.mrf.mxu0
    %v691 = vadd.f32 0.0, %v690
    %v692 = vpop.f32.mrf.mxu0
    %v693 = vadd.f32 0.0, %v692
    %694 = vdwg.mxu0
    %695 = vmatprep.subr.mxu0 %v441
    %696 = vmatpush1.msra.mxu0 %v440
    %697 = vmatprep.subr.mxu0 %v437
    %698 = vmatpush1.msra.mxu0 %v436
    %699 = vmatprep.subr.mxu0 %v433
    %700 = vmatpush1.msra.mxu0 %v432
    %701 = vmatprep.subr.mxu0 %v429
    %702 = vmatpush1.msra.mxu0 %v428
    %703 = vmatprep.subr.mxu0 %v425
    %704 = vmatpush1.msra.mxu0 %v424
    %705 = vmatprep.subr.mxu0 %v421
    %706 = vmatpush1.msra.mxu0 %v420
    %707 = vmatprep.subr.mxu0 %v417
    %708 = vmatpush1.msra.mxu0 %v416
    %709 = vmatprep.subr.mxu0 %v413
    %710 = vmatpush1.msra.mxu0 %v412
    %711 = vmatprep.subr.mxu0 %v409
    %712 = vmatpush1.msra.mxu0 %v408
    %713 = vmatprep.subr.mxu0 %v405
    %714 = vmatpush1.msra.mxu0 %v404
    %715 = vmatprep.subr.mxu0 %v401
    %716 = vmatpush1.msra.mxu0 %v400
    %717 = vmatprep.subr.mxu0 %v397
    %718 = vmatpush1.msra.mxu0 %v396
    %719 = vmatprep.subr.mxu0 %v393
    %720 = vmatpush1.msra.mxu0 %v392
    %721 = vmatprep.subr.mxu0 %v389
    %722 = vmatpush1.msra.mxu0 %v388
    %723 = vmatprep.subr.mxu0 %v385
    %724 = vmatpush1.msra.mxu0 %v384
    %725 = vmatprep.subr.mxu0 %v381
    %726 = vmatpush1.msra.mxu0 %v380
    %727 = vmatprep.subr.mxu0 0.0
    %728 = vmatpush2.msra.mxu0 0.0
    %729 = vmatprep.subr.mxu0 0.0
    %730 = vmatpush2.msra.mxu0 0.0
    %731 = vmatprep.subr.mxu0 0.0
    %732 = vmatpush2.msra.mxu0 0.0
    %733 = vmatprep.subr.mxu0 0.0
    %734 = vmatpush2.msra.mxu0 0.0
    %735 = vmatprep.subr.mxu0 0.0
    %736 = vmatpush2.msra.mxu0 0.0
    %737 = vmatprep.subr.mxu0 0.0
    %738 = vmatpush2.msra.mxu0 0.0
    %739 = vmatprep.subr.mxu0 0.0
    %740 = vmatpush2.msra.mxu0 0.0
    %741 = vmatprep.subr.mxu0 0.0
    %742 = vmatpush2.msra.mxu0 0.0
    %743 = vmatprep.subr.mxu0 0.0
    %744 = vmatpush2.msra.mxu0 0.0
    %745 = vmatprep.subr.mxu0 0.0
    %746 = vmatpush2.msra.mxu0 0.0
    %747 = vmatprep.subr.mxu0 0.0
    %748 = vmatpush2.msra.mxu0 0.0
    %749 = vmatprep.subr.mxu0 0.0
    %750 = vmatpush2.msra.mxu0 0.0
    %751 = vmatprep.subr.mxu0 0.0
    %752 = vmatpush2.msra.mxu0 0.0
    %753 = vmatprep.subr.mxu0 0.0
    %754 = vmatpush2.msra.mxu0 0.0
    %755 = vmatprep.subr.mxu0 0.0
    %756 = vmatpush2.msra.mxu0 0.0
    %757 = vmatprep.subr.mxu0 0.0
    %758 = vmatpush2.msra.mxu0 0.0
    %759 = vmatprep.mubr.f32.mxu0 0.0
    %760 = vmatmul.mubr.f32.gmra.mxu0 %v617
    %v761 = vpop.f32.mrf.mxu0
    %v762 = vadd.f32 0.0, %v761
    %v763 = vpop.f32.mrf.mxu0
    %v764 = vadd.f32 0.0, %v763
    %765 = vdwg.mxu0
    %v766 = vadd.f32 %v620, %v691
    %v767 = vadd.f32 %v621, %v693
    %v768 = vadd.f32 %v622, %v762
    %v769 = vadd.f32 %v623, %v764
    %v770 = vxor.u32 %v766, 2147483648
    %v771 = vmul.f32 %v770, 1.442695
    %v772 = vpow.pop %v771
    %v773 = vadd.f32 %v772, 1.0
    %v774 = vrcp.pop %v773
    %v775 = vmul.f32 1.0, %v774
    %v776 = vxor.u32 %v767, 2147483648
    %v777 = vmul.f32 %v776, 1.442695
    %v778 = vpow.pop %v777
    %v779 = vadd.f32 %v778, 1.0
    %v780 = vrcp.pop %v779
    %v781 = vmul.f32 1.0, %v780
    %v782 = vtanh.pop %v768
    %v783 = vxor.u32 %v769, 2147483648
    %v784 = vmul.f32 %v783, 1.442695
    %v785 = vpow.pop %v784
    %v786 = vadd.f32 %v785, 1.0
    %v787 = vrcp.pop %v786
    %v788 = vmul.f32 1.0, %v787
    %v789 = vmul.f32 %v615, %v775
    %v790 = vmul.f32 %v781, %v782
    %v791 = vadd.f32 %v789, %v790
    %v792 = vtanh.pop %v791
    %v793 = vmul.f32 %v788, %v792
    %s794 = scalar_lea.vmem [#allocation8], 8
    %795 = vst [vmem:[%s794] sm:$0xff] %v793
    %s796 = scalar_lea.vmem [#allocation2], 64
    %v797 = vld [vmem:[%s796] sm:$0xff]
    %v798 = vld [vmem:[%s796 + $0x8] sm:$0xff]
    %v799 = vld [vmem:[%s796 + $0x10] sm:$0xff]
    %v800 = vld [vmem:[%s796 + $0x18] sm:$0xff]
    %801 = vmatprep.subr.mxu0 %v439
    %802 = vmatpush1.msra.mxu0 %v438
    %803 = vmatprep.subr.mxu0 %v435
    %804 = vmatpush1.msra.mxu0 %v434
    %805 = vmatprep.subr.mxu0 %v431
    %806 = vmatpush1.msra.mxu0 %v430
    %807 = vmatprep.subr.mxu0 %v427
    %808 = vmatpush1.msra.mxu0 %v426
    %809 = vmatprep.subr.mxu0 %v423
    %810 = vmatpush1.msra.mxu0 %v422
    %811 = vmatprep.subr.mxu0 %v419
    %812 = vmatpush1.msra.mxu0 %v418
    %813 = vmatprep.subr.mxu0 %v415
    %814 = vmatpush1.msra.mxu0 %v414
    %815 = vmatprep.subr.mxu0 %v411
    %816 = vmatpush1.msra.mxu0 %v410
    %817 = vmatprep.subr.mxu0 %v407
    %818 = vmatpush1.msra.mxu0 %v406
    %819 = vmatprep.subr.mxu0 %v403
    %820 = vmatpush1.msra.mxu0 %v402
    %821 = vmatprep.subr.mxu0 %v399
    %822 = vmatpush1.msra.mxu0 %v398
    %823 = vmatprep.subr.mxu0 %v395
    %824 = vmatpush1.msra.mxu0 %v394
    %825 = vmatprep.subr.mxu0 %v391
    %826 = vmatpush1.msra.mxu0 %v390
    %827 = vmatprep.subr.mxu0 %v387
    %828 = vmatpush1.msra.mxu0 %v386
    %829 = vmatprep.subr.mxu0 %v383
    %830 = vmatpush1.msra.mxu0 %v382
    %831 = vmatprep.subr.mxu0 %v379
    %832 = vmatpush1.msra.mxu0 %v378
    %833 = vmatprep.subr.mxu0 0.0
    %834 = vmatpush2.msra.mxu0 0.0
    %835 = vmatprep.subr.mxu0 0.0
    %836 = vmatpush2.msra.mxu0 0.0
    %837 = vmatprep.subr.mxu0 0.0
    %838 = vmatpush2.msra.mxu0 0.0
    %839 = vmatprep.subr.mxu0 0.0
    %840 = vmatpush2.msra.mxu0 0.0
    %841 = vmatprep.subr.mxu0 0.0
    %842 = vmatpush2.msra.mxu0 0.0
    %843 = vmatprep.subr.mxu0 0.0
    %844 = vmatpush2.msra.mxu0 0.0
    %845 = vmatprep.subr.mxu0 0.0
    %846 = vmatpush2.msra.mxu0 0.0
    %847 = vmatprep.subr.mxu0 0.0
    %848 = vmatpush2.msra.mxu0 0.0
    %849 = vmatprep.subr.mxu0 0.0
    %850 = vmatpush2.msra.mxu0 0.0
    %851 = vmatprep.subr.mxu0 0.0
    %852 = vmatpush2.msra.mxu0 0.0
    %853 = vmatprep.subr.mxu0 0.0
    %854 = vmatpush2.msra.mxu0 0.0
    %855 = vmatprep.subr.mxu0 0.0
    %856 = vmatpush2.msra.mxu0 0.0
    %857 = vmatprep.subr.mxu0 0.0
    %858 = vmatpush2.msra.mxu0 0.0
    %859 = vmatprep.subr.mxu0 0.0
    %860 = vmatpush2.msra.mxu0 0.0
    %861 = vmatprep.subr.mxu0 0.0
    %862 = vmatpush2.msra.mxu0 0.0
    %863 = vmatprep.subr.mxu0 0.0
    %864 = vmatpush2.msra.mxu0 0.0
    %865 = vmatprep.mubr.f32.mxu0 0.0
    %866 = vmatmul.mubr.f32.gmra.mxu0 %v793
    %v867 = vpop.f32.mrf.mxu0
    %v868 = vadd.f32 0.0, %v867
    %v869 = vpop.f32.mrf.mxu0
    %v870 = vadd.f32 0.0, %v869
    %871 = vdwg.mxu0
    %872 = vmatprep.subr.mxu0 %v441
    %873 = vmatpush1.msra.mxu0 %v440
    %874 = vmatprep.subr.mxu0 %v437
    %875 = vmatpush1.msra.mxu0 %v436
    %876 = vmatprep.subr.mxu0 %v433
    %877 = vmatpush1.msra.mxu0 %v432
    %878 = vmatprep.subr.mxu0 %v429
    %879 = vmatpush1.msra.mxu0 %v428
    %880 = vmatprep.subr.mxu0 %v425
    %881 = vmatpush1.msra.mxu0 %v424
    %882 = vmatprep.subr.mxu0 %v421
    %883 = vmatpush1.msra.mxu0 %v420
    %884 = vmatprep.subr.mxu0 %v417
    %885 = vmatpush1.msra.mxu0 %v416
    %886 = vmatprep.subr.mxu0 %v413
    %887 = vmatpush1.msra.mxu0 %v412
    %888 = vmatprep.subr.mxu0 %v409
    %889 = vmatpush1.msra.mxu0 %v408
    %890 = vmatprep.subr.mxu0 %v405
    %891 = vmatpush1.msra.mxu0 %v404
    %892 = vmatprep.subr.mxu0 %v401
    %893 = vmatpush1.msra.mxu0 %v400
    %894 = vmatprep.subr.mxu0 %v397
    %895 = vmatpush1.msra.mxu0 %v396
    %896 = vmatprep.subr.mxu0 %v393
    %897 = vmatpush1.msra.mxu0 %v392
    %898 = vmatprep.subr.mxu0 %v389
    %899 = vmatpush1.msra.mxu0 %v388
    %900 = vmatprep.subr.mxu0 %v385
    %901 = vmatpush1.msra.mxu0 %v384
    %902 = vmatprep.subr.mxu0 %v381
    %903 = vmatpush1.msra.mxu0 %v380
    %904 = vmatprep.subr.mxu0 0.0
    %905 = vmatpush2.msra.mxu0 0.0
    %906 = vmatprep.subr.mxu0 0.0
    %907 = vmatpush2.msra.mxu0 0.0
    %908 = vmatprep.subr.mxu0 0.0
    %909 = vmatpush2.msra.mxu0 0.0
    %910 = vmatprep.subr.mxu0 0.0
    %911 = vmatpush2.msra.mxu0 0.0
    %912 = vmatprep.subr.mxu0 0.0
    %913 = vmatpush2.msra.mxu0 0.0
    %914 = vmatprep.subr.mxu0 0.0
    %915 = vmatpush2.msra.mxu0 0.0
    %916 = vmatprep.subr.mxu0 0.0
    %917 = vmatpush2.msra.mxu0 0.0
    %918 = vmatprep.subr.mxu0 0.0
    %919 = vmatpush2.msra.mxu0 0.0
    %920 = vmatprep.subr.mxu0 0.0
    %921 = vmatpush2.msra.mxu0 0.0
    %922 = vmatprep.subr.mxu0 0.0
    %923 = vmatpush2.msra.mxu0 0.0
    %924 = vmatprep.subr.mxu0 0.0
    %925 = vmatpush2.msra.mxu0 0.0
    %926 = vmatprep.subr.mxu0 0.0
    %927 = vmatpush2.msra.mxu0 0.0
    %928 = vmatprep.subr.mxu0 0.0
    %929 = vmatpush2.msra.mxu0 0.0
    %930 = vmatprep.subr.mxu0 0.0
    %931 = vmatpush2.msra.mxu0 0.0
    %932 = vmatprep.subr.mxu0 0.0
    %933 = vmatpush2.msra.mxu0 0.0
    %934 = vmatprep.subr.mxu0 0.0
    %935 = vmatpush2.msra.mxu0 0.0
    %936 = vmatprep.mubr.f32.mxu0 0.0
    %937 = vmatmul.mubr.f32.gmra.mxu0 %v793
    %v938 = vpop.f32.mrf.mxu0
    %v939 = vadd.f32 0.0, %v938
    %v940 = vpop.f32.mrf.mxu0
    %v941 = vadd.f32 0.0, %v940
    %942 = vdwg.mxu0
    %v943 = vadd.f32 %v797, %v868
    %v944 = vadd.f32 %v798, %v870
    %v945 = vadd.f32 %v799, %v939
    %v946 = vadd.f32 %v800, %v941
    %v947 = vxor.u32 %v943, 2147483648
    %v948 = vmul.f32 %v947, 1.442695
    %v949 = vpow.pop %v948
    %v950 = vadd.f32 %v949, 1.0
    %v951 = vrcp.pop %v950
    %v952 = vmul.f32 1.0, %v951
    %v953 = vxor.u32 %v944, 2147483648
    %v954 = vmul.f32 %v953, 1.442695
    %v955 = vpow.pop %v954
    %v956 = vadd.f32 %v955, 1.0
    %v957 = vrcp.pop %v956
    %v958 = vmul.f32 1.0, %v957
    %v959 = vtanh.pop %v945
    %v960 = vxor.u32 %v946, 2147483648
    %v961 = vmul.f32 %v960, 1.442695
    %v962 = vpow.pop %v961
    %v963 = vadd.f32 %v962, 1.0
    %v964 = vrcp.pop %v963
    %v965 = vmul.f32 1.0, %v964
    %v966 = vmul.f32 %v791, %v952
    %v967 = vmul.f32 %v958, %v959
    %v968 = vadd.f32 %v966, %v967
    %v969 = vtanh.pop %v968
    %v970 = vmul.f32 %v965, %v969
    %s971 = scalar_lea.vmem [#allocation8], 16
    %972 = vst [vmem:[%s971] sm:$0xff] %v970
    %s973 = scalar_lea.vmem [#allocation2], 96
    %v974 = vld [vmem:[%s973] sm:$0xff]
    %v975 = vld [vmem:[%s973 + $0x8] sm:$0xff]
    %v976 = vld [vmem:[%s973 + $0x10] sm:$0xff]
    %v977 = vld [vmem:[%s973 + $0x18] sm:$0xff]
    %978 = vmatprep.subr.mxu0 %v439
    %979 = vmatpush1.msra.mxu0 %v438
    %980 = vmatprep.subr.mxu0 %v435
    %981 = vmatpush1.msra.mxu0 %v434
    %982 = vmatprep.subr.mxu0 %v431
    %983 = vmatpush1.msra.mxu0 %v430
    %984 = vmatprep.subr.mxu0 %v427
    %985 = vmatpush1.msra.mxu0 %v426
    %986 = vmatprep.subr.mxu0 %v423
    %987 = vmatpush1.msra.mxu0 %v422
    %988 = vmatprep.subr.mxu0 %v419
    %989 = vmatpush1.msra.mxu0 %v418
    %990 = vmatprep.subr.mxu0 %v415
    %991 = vmatpush1.msra.mxu0 %v414
    %992 = vmatprep.subr.mxu0 %v411
    %993 = vmatpush1.msra.mxu0 %v410
    %994 = vmatprep.subr.mxu0 %v407
    %995 = vmatpush1.msra.mxu0 %v406
    %996 = vmatprep.subr.mxu0 %v403
    %997 = vmatpush1.msra.mxu0 %v402
    %998 = vmatprep.subr.mxu0 %v399
    %999 = vmatpush1.msra.mxu0 %v398
    %1000 = vmatprep.subr.mxu0 %v395
    %1001 = vmatpush1.msra.mxu0 %v394
    %1002 = vmatprep.subr.mxu0 %v391
    %1003 = vmatpush1.msra.mxu0 %v390
    %1004 = vmatprep.subr.mxu0 %v387
    %1005 = vmatpush1.msra.mxu0 %v386
    %1006 = vmatprep.subr.mxu0 %v383
    %1007 = vmatpush1.msra.mxu0 %v382
    %1008 = vmatprep.subr.mxu0 %v379
    %1009 = vmatpush1.msra.mxu0 %v378
    %1010 = vmatprep.subr.mxu0 0.0
    %1011 = vmatpush2.msra.mxu0 0.0
    %1012 = vmatprep.subr.mxu0 0.0
    %1013 = vmatpush2.msra.mxu0 0.0
    %1014 = vmatprep.subr.mxu0 0.0
    %1015 = vmatpush2.msra.mxu0 0.0
    %1016 = vmatprep.subr.mxu0 0.0
    %1017 = vmatpush2.msra.mxu0 0.0
    %1018 = vmatprep.subr.mxu0 0.0
    %1019 = vmatpush2.msra.mxu0 0.0
    %1020 = vmatprep.subr.mxu0 0.0
    %1021 = vmatpush2.msra.mxu0 0.0
    %1022 = vmatprep.subr.mxu0 0.0
    %1023 = vmatpush2.msra.mxu0 0.0
    %1024 = vmatprep.subr.mxu0 0.0
    %1025 = vmatpush2.msra.mxu0 0.0
    %1026 = vmatprep.subr.mxu0 0.0
    %1027 = vmatpush2.msra.mxu0 0.0
    %1028 = vmatprep.subr.mxu0 0.0
    %1029 = vmatpush2.msra.mxu0 0.0
    %1030 = vmatprep.subr.mxu0 0.0
    %1031 = vmatpush2.msra.mxu0 0.0
    %1032 = vmatprep.subr.mxu0 0.0
    %1033 = vmatpush2.msra.mxu0 0.0
    %1034 = vmatprep.subr.mxu0 0.0
    %1035 = vmatpush2.msra.mxu0 0.0
    %1036 = vmatprep.subr.mxu0 0.0
    %1037 = vmatpush2.msra.mxu0 0.0
    %1038 = vmatprep.subr.mxu0 0.0
    %1039 = vmatpush2.msra.mxu0 0.0
    %1040 = vmatprep.subr.mxu0 0.0
    %1041 = vmatpush2.msra.mxu0 0.0
    %1042 = vmatprep.mubr.f32.mxu0 0.0
    %1043 = vmatmul.mubr.f32.gmra.mxu0 %v970
    %v1044 = vpop.f32.mrf.mxu0
    %v1045 = vadd.f32 0.0, %v1044
    %v1046 = vpop.f32.mrf.mxu0
    %v1047 = vadd.f32 0.0, %v1046
    %1048 = vdwg.mxu0
    %1049 = vmatprep.subr.mxu0 %v441
    %1050 = vmatpush1.msra.mxu0 %v440
    %1051 = vmatprep.subr.mxu0 %v437
    %1052 = vmatpush1.msra.mxu0 %v436
    %1053 = vmatprep.subr.mxu0 %v433
    %1054 = vmatpush1.msra.mxu0 %v432
    %1055 = vmatprep.subr.mxu0 %v429
    %1056 = vmatpush1.msra.mxu0 %v428
    %1057 = vmatprep.subr.mxu0 %v425
    %1058 = vmatpush1.msra.mxu0 %v424
    %1059 = vmatprep.subr.mxu0 %v421
    %1060 = vmatpush1.msra.mxu0 %v420
    %1061 = vmatprep.subr.mxu0 %v417
    %1062 = vmatpush1.msra.mxu0 %v416
    %1063 = vmatprep.subr.mxu0 %v413
    %1064 = vmatpush1.msra.mxu0 %v412
    %1065 = vmatprep.subr.mxu0 %v409
    %1066 = vmatpush1.msra.mxu0 %v408
    %1067 = vmatprep.subr.mxu0 %v405
    %1068 = vmatpush1.msra.mxu0 %v404
    %1069 = vmatprep.subr.mxu0 %v401
    %1070 = vmatpush1.msra.mxu0 %v400
    %1071 = vmatprep.subr.mxu0 %v397
    %1072 = vmatpush1.msra.mxu0 %v396
    %1073 = vmatprep.subr.mxu0 %v393
    %1074 = vmatpush1.msra.mxu0 %v392
    %1075 = vmatprep.subr.mxu0 %v389
    %1076 = vmatpush1.msra.mxu0 %v388
    %1077 = vmatprep.subr.mxu0 %v385
    %1078 = vmatpush1.msra.mxu0 %v384
    %1079 = vmatprep.subr.mxu0 %v381
    %1080 = vmatpush1.msra.mxu0 %v380
    %1081 = vmatprep.subr.mxu0 0.0
    %1082 = vmatpush2.msra.mxu0 0.0
    %1083 = vmatprep.subr.mxu0 0.0
    %1084 = vmatpush2.msra.mxu0 0.0
    %1085 = vmatprep.subr.mxu0 0.0
    %1086 = vmatpush2.msra.mxu0 0.0
    %1087 = vmatprep.subr.mxu0 0.0
    %1088 = vmatpush2.msra.mxu0 0.0
    %1089 = vmatprep.subr.mxu0 0.0
    %1090 = vmatpush2.msra.mxu0 0.0
    %1091 = vmatprep.subr.mxu0 0.0
    %1092 = vmatpush2.msra.mxu0 0.0
    %1093 = vmatprep.subr.mxu0 0.0
    %1094 = vmatpush2.msra.mxu0 0.0
    %1095 = vmatprep.subr.mxu0 0.0
    %1096 = vmatpush2.msra.mxu0 0.0
    %1097 = vmatprep.subr.mxu0 0.0
    %1098 = vmatpush2.msra.mxu0 0.0
    %1099 = vmatprep.subr.mxu0 0.0
    %1100 = vmatpush2.msra.mxu0 0.0
    %1101 = vmatprep.subr.mxu0 0.0
    %1102 = vmatpush2.msra.mxu0 0.0
    %1103 = vmatprep.subr.mxu0 0.0
    %1104 = vmatpush2.msra.mxu0 0.0
    %1105 = vmatprep.subr.mxu0 0.0
    %1106 = vmatpush2.msra.mxu0 0.0
    %1107 = vmatprep.subr.mxu0 0.0
    %1108 = vmatpush2.msra.mxu0 0.0
    %1109 = vmatprep.subr.mxu0 0.0
    %1110 = vmatpush2.msra.mxu0 0.0
    %1111 = vmatprep.subr.mxu0 0.0
    %1112 = vmatpush2.msra.mxu0 0.0
    %1113 = vmatprep.mubr.f32.mxu0 0.0
    %1114 = vmatmul.mubr.f32.gmra.mxu0 %v970
    %v1115 = vpop.f32.mrf.mxu0
    %v1116 = vadd.f32 0.0, %v1115
    %v1117 = vpop.f32.mrf.mxu0
    %v1118 = vadd.f32 0.0, %v1117
    %1119 = vdwg.mxu0
    %v1120 = vadd.f32 %v974, %v1045
    %v1121 = vadd.f32 %v975, %v1047
    %v1122 = vadd.f32 %v976, %v1116
    %v1123 = vadd.f32 %v977, %v1118
    %v1124 = vxor.u32 %v1120, 2147483648
    %v1125 = vmul.f32 %v1124, 1.442695
    %v1126 = vpow.pop %v1125
    %v1127 = vadd.f32 %v1126, 1.0
    %v1128 = vrcp.pop %v1127
    %v1129 = vmul.f32 1.0, %v1128
    %v1130 = vxor.u32 %v1121, 2147483648
    %v1131 = vmul.f32 %v1130, 1.442695
    %v1132 = vpow.pop %v1131
    %v1133 = vadd.f32 %v1132, 1.0
    %v1134 = vrcp.pop %v1133
    %v1135 = vmul.f32 1.0, %v1134
    %v1136 = vtanh.pop %v1122
    %v1137 = vxor.u32 %v1123, 2147483648
    %v1138 = vmul.f32 %v1137, 1.442695
    %v1139 = vpow.pop %v1138
    %v1140 = vadd.f32 %v1139, 1.0
    %v1141 = vrcp.pop %v1140
    %v1142 = vmul.f32 1.0, %v1141
    %v1143 = vmul.f32 %v968, %v1129
    %v1144 = vmul.f32 %v1135, %v1136
    %v1145 = vadd.f32 %v1143, %v1144
    %v1146 = vtanh.pop %v1145
    %v1147 = vmul.f32 %v1142, %v1146
    %s1148 = scalar_lea.vmem [#allocation8], 24
    %1149 = vst [vmem:[%s1148] sm:$0xff] %v1147
    %s1150 = scalar_lea.vmem [#allocation2], 128
    %v1151 = vld [vmem:[%s1150] sm:$0xff]
    %v1152 = vld [vmem:[%s1150 + $0x8] sm:$0xff]
    %v1153 = vld [vmem:[%s1150 + $0x10] sm:$0xff]
    %v1154 = vld [vmem:[%s1150 + $0x18] sm:$0xff]
    %1155 = vmatprep.subr.mxu0 %v439
    %1156 = vmatpush1.msra.mxu0 %v438
    %1157 = vmatprep.subr.mxu0 %v435
    %1158 = vmatpush1.msra.mxu0 %v434
    %1159 = vmatprep.subr.mxu0 %v431
    %1160 = vmatpush1.msra.mxu0 %v430
    %1161 = vmatprep.subr.mxu0 %v427
    %1162 = vmatpush1.msra.mxu0 %v426
    %1163 = vmatprep.subr.mxu0 %v423
    %1164 = vmatpush1.msra.mxu0 %v422
    %1165 = vmatprep.subr.mxu0 %v419
    %1166 = vmatpush1.msra.mxu0 %v418
    %1167 = vmatprep.subr.mxu0 %v415
    %1168 = vmatpush1.msra.mxu0 %v414
    %1169 = vmatprep.subr.mxu0 %v411
    %1170 = vmatpush1.msra.mxu0 %v410
    %1171 = vmatprep.subr.mxu0 %v407
    %1172 = vmatpush1.msra.mxu0 %v406
    %1173 = vmatprep.subr.mxu0 %v403
    %1174 = vmatpush1.msra.mxu0 %v402
    %1175 = vmatprep.subr.mxu0 %v399
    %1176 = vmatpush1.msra.mxu0 %v398
    %1177 = vmatprep.subr.mxu0 %v395
    %1178 = vmatpush1.msra.mxu0 %v394
    %1179 = vmatprep.subr.mxu0 %v391
    %1180 = vmatpush1.msra.mxu0 %v390
    %1181 = vmatprep.subr.mxu0 %v387
    %1182 = vmatpush1.msra.mxu0 %v386
    %1183 = vmatprep.subr.mxu0 %v383
    %1184 = vmatpush1.msra.mxu0 %v382
    %1185 = vmatprep.subr.mxu0 %v379
    %1186 = vmatpush1.msra.mxu0 %v378
    %1187 = vmatprep.subr.mxu0 0.0
    %1188 = vmatpush2.msra.mxu0 0.0
    %1189 = vmatprep.subr.mxu0 0.0
    %1190 = vmatpush2.msra.mxu0 0.0
    %1191 = vmatprep.subr.mxu0 0.0
    %1192 = vmatpush2.msra.mxu0 0.0
    %1193 = vmatprep.subr.mxu0 0.0
    %1194 = vmatpush2.msra.mxu0 0.0
    %1195 = vmatprep.subr.mxu0 0.0
    %1196 = vmatpush2.msra.mxu0 0.0
    %1197 = vmatprep.subr.mxu0 0.0
    %1198 = vmatpush2.msra.mxu0 0.0
    %1199 = vmatprep.subr.mxu0 0.0
    %1200 = vmatpush2.msra.mxu0 0.0
    %1201 = vmatprep.subr.mxu0 0.0
    %1202 = vmatpush2.msra.mxu0 0.0
    %1203 = vmatprep.subr.mxu0 0.0
    %1204 = vmatpush2.msra.mxu0 0.0
    %1205 = vmatprep.subr.mxu0 0.0
    %1206 = vmatpush2.msra.mxu0 0.0
    %1207 = vmatprep.subr.mxu0 0.0
    %1208 = vmatpush2.msra.mxu0 0.0
    %1209 = vmatprep.subr.mxu0 0.0
    %1210 = vmatpush2.msra.mxu0 0.0
    %1211 = vmatprep.subr.mxu0 0.0
    %1212 = vmatpush2.msra.mxu0 0.0
    %1213 = vmatprep.subr.mxu0 0.0
    %1214 = vmatpush2.msra.mxu0 0.0
    %1215 = vmatprep.subr.mxu0 0.0
    %1216 = vmatpush2.msra.mxu0 0.0
    %1217 = vmatprep.subr.mxu0 0.0
    %1218 = vmatpush2.msra.mxu0 0.0
    %1219 = vmatprep.mubr.f32.mxu0 0.0
    %1220 = vmatmul.mubr.f32.gmra.mxu0 %v1147
    %v1221 = vpop.f32.mrf.mxu0
    %v1222 = vadd.f32 0.0, %v1221
    %v1223 = vpop.f32.mrf.mxu0
    %v1224 = vadd.f32 0.0, %v1223
    %1225 = vdwg.mxu0
    %1226 = vmatprep.subr.mxu0 %v441
    %1227 = vmatpush1.msra.mxu0 %v440
    %1228 = vmatprep.subr.mxu0 %v437
    %1229 = vmatpush1.msra.mxu0 %v436
    %1230 = vmatprep.subr.mxu0 %v433
    %1231 = vmatpush1.msra.mxu0 %v432
    %1232 = vmatprep.subr.mxu0 %v429
    %1233 = vmatpush1.msra.mxu0 %v428
    %1234 = vmatprep.subr.mxu0 %v425
    %1235 = vmatpush1.msra.mxu0 %v424
    %1236 = vmatprep.subr.mxu0 %v421
    %1237 = vmatpush1.msra.mxu0 %v420
    %1238 = vmatprep.subr.mxu0 %v417
    %1239 = vmatpush1.msra.mxu0 %v416
    %1240 = vmatprep.subr.mxu0 %v413
    %1241 = vmatpush1.msra.mxu0 %v412
    %1242 = vmatprep.subr.mxu0 %v409
    %1243 = vmatpush1.msra.mxu0 %v408
    %1244 = vmatprep.subr.mxu0 %v405
    %1245 = vmatpush1.msra.mxu0 %v404
    %1246 = vmatprep.subr.mxu0 %v401
    %1247 = vmatpush1.msra.mxu0 %v400
    %1248 = vmatprep.subr.mxu0 %v397
    %1249 = vmatpush1.msra.mxu0 %v396
    %1250 = vmatprep.subr.mxu0 %v393
    %1251 = vmatpush1.msra.mxu0 %v392
    %1252 = vmatprep.subr.mxu0 %v389
    %1253 = vmatpush1.msra.mxu0 %v388
    %1254 = vmatprep.subr.mxu0 %v385
    %1255 = vmatpush1.msra.mxu0 %v384
    %1256 = vmatprep.subr.mxu0 %v381
    %1257 = vmatpush1.msra.mxu0 %v380
    %1258 = vmatprep.subr.mxu0 0.0
    %1259 = vmatpush2.msra.mxu0 0.0
    %1260 = vmatprep.subr.mxu0 0.0
    %1261 = vmatpush2.msra.mxu0 0.0
    %1262 = vmatprep.subr.mxu0 0.0
    %1263 = vmatpush2.msra.mxu0 0.0
    %1264 = vmatprep.subr.mxu0 0.0
    %1265 = vmatpush2.msra.mxu0 0.0
    %1266 = vmatprep.subr.mxu0 0.0
    %1267 = vmatpush2.msra.mxu0 0.0
    %1268 = vmatprep.subr.mxu0 0.0
    %1269 = vmatpush2.msra.mxu0 0.0
    %1270 = vmatprep.subr.mxu0 0.0
    %1271 = vmatpush2.msra.mxu0 0.0
    %1272 = vmatprep.subr.mxu0 0.0
    %1273 = vmatpush2.msra.mxu0 0.0
    %1274 = vmatprep.subr.mxu0 0.0
    %1275 = vmatpush2.msra.mxu0 0.0
    %1276 = vmatprep.subr.mxu0 0.0
    %1277 = vmatpush2.msra.mxu0 0.0
    %1278 = vmatprep.subr.mxu0 0.0
    %1279 = vmatpush2.msra.mxu0 0.0
    %1280 = vmatprep.subr.mxu0 0.0
    %1281 = vmatpush2.msra.mxu0 0.0
    %1282 = vmatprep.subr.mxu0 0.0
    %1283 = vmatpush2.msra.mxu0 0.0
    %1284 = vmatprep.subr.mxu0 0.0
    %1285 = vmatpush2.msra.mxu0 0.0
    %1286 = vmatprep.subr.mxu0 0.0
    %1287 = vmatpush2.msra.mxu0 0.0
    %1288 = vmatprep.subr.mxu0 0.0
    %1289 = vmatpush2.msra.mxu0 0.0
    %1290 = vmatprep.mubr.f32.mxu0 0.0
    %1291 = vmatmul.mubr.f32.gmra.mxu0 %v1147
    %v1292 = vpop.f32.mrf.mxu0
    %v1293 = vadd.f32 0.0, %v1292
    %v1294 = vpop.f32.mrf.mxu0
    %v1295 = vadd.f32 0.0, %v1294
    %1296 = vdwg.mxu0
    %v1297 = vadd.f32 %v1151, %v1222
    %v1298 = vadd.f32 %v1152, %v1224
    %v1299 = vadd.f32 %v1153, %v1293
    %v1300 = vadd.f32 %v1154, %v1295
    %v1301 = vxor.u32 %v1297, 2147483648
    %v1302 = vmul.f32 %v1301, 1.442695
    %v1303 = vpow.pop %v1302
    %v1304 = vadd.f32 %v1303, 1.0
    %v1305 = vrcp.pop %v1304
    %v1306 = vmul.f32 1.0, %v1305
    %v1307 = vxor.u32 %v1298, 2147483648
    %v1308 = vmul.f32 %v1307, 1.442695
    %v1309 = vpow.pop %v1308
    %v1310 = vadd.f32 %v1309, 1.0
    %v1311 = vrcp.pop %v1310
    %v1312 = vmul.f32 1.0, %v1311
    %v1313 = vtanh.pop %v1299
    %v1314 = vxor.u32 %v1300, 2147483648
    %v1315 = vmul.f32 %v1314, 1.442695
    %v1316 = vpow.pop %v1315
    %v1317 = vadd.f32 %v1316, 1.0
    %v1318 = vrcp.pop %v1317
    %v1319 = vmul.f32 1.0, %v1318
    %v1320 = vmul.f32 %v1145, %v1306
    %v1321 = vmul.f32 %v1312, %v1313
    %v1322 = vadd.f32 %v1320, %v1321
    %v1323 = vtanh.pop %v1322
    %v1324 = vmul.f32 %v1319, %v1323
    %s1325 = scalar_lea.vmem [#allocation8], 32
    %1326 = vst [vmem:[%s1325] sm:$0xff] %v1324
    %s1327 = scalar_lea.vmem [#allocation2], 160
    %v1328 = vld [vmem:[%s1327] sm:$0xff]
    %v1329 = vld [vmem:[%s1327 + $0x8] sm:$0xff]
    %v1330 = vld [vmem:[%s1327 + $0x10] sm:$0xff]
    %v1331 = vld [vmem:[%s1327 + $0x18] sm:$0xff]
    %1332 = vmatprep.subr.mxu0 %v439
    %1333 = vmatpush1.msra.mxu0 %v438
    %1334 = vmatprep.subr.mxu0 %v435
    %1335 = vmatpush1.msra.mxu0 %v434
    %1336 = vmatprep.subr.mxu0 %v431
    %1337 = vmatpush1.msra.mxu0 %v430
    %1338 = vmatprep.subr.mxu0 %v427
    %1339 = vmatpush1.msra.mxu0 %v426
    %1340 = vmatprep.subr.mxu0 %v423
    %1341 = vmatpush1.msra.mxu0 %v422
    %1342 = vmatprep.subr.mxu0 %v419
    %1343 = vmatpush1.msra.mxu0 %v418
    %1344 = vmatprep.subr.mxu0 %v415
    %1345 = vmatpush1.msra.mxu0 %v414
    %1346 = vmatprep.subr.mxu0 %v411
    %1347 = vmatpush1.msra.mxu0 %v410
    %1348 = vmatprep.subr.mxu0 %v407
    %1349 = vmatpush1.msra.mxu0 %v406
    %1350 = vmatprep.subr.mxu0 %v403
    %1351 = vmatpush1.msra.mxu0 %v402
    %1352 = vmatprep.subr.mxu0 %v399
    %1353 = vmatpush1.msra.mxu0 %v398
    %1354 = vmatprep.subr.mxu0 %v395
    %1355 = vmatpush1.msra.mxu0 %v394
    %1356 = vmatprep.subr.mxu0 %v391
    %1357 = vmatpush1.msra.mxu0 %v390
    %1358 = vmatprep.subr.mxu0 %v387
    %1359 = vmatpush1.msra.mxu0 %v386
    %1360 = vmatprep.subr.mxu0 %v383
    %1361 = vmatpush1.msra.mxu0 %v382
    %1362 = vmatprep.subr.mxu0 %v379
    %1363 = vmatpush1.msra.mxu0 %v378
    %1364 = vmatprep.subr.mxu0 0.0
    %1365 = vmatpush2.msra.mxu0 0.0
    %1366 = vmatprep.subr.mxu0 0.0
    %1367 = vmatpush2.msra.mxu0 0.0
    %1368 = vmatprep.subr.mxu0 0.0
    %1369 = vmatpush2.msra.mxu0 0.0
    %1370 = vmatprep.subr.mxu0 0.0
    %1371 = vmatpush2.msra.mxu0 0.0
    %1372 = vmatprep.subr.mxu0 0.0
    %1373 = vmatpush2.msra.mxu0 0.0
    %1374 = vmatprep.subr.mxu0 0.0
    %1375 = vmatpush2.msra.mxu0 0.0
    %1376 = vmatprep.subr.mxu0 0.0
    %1377 = vmatpush2.msra.mxu0 0.0
    %1378 = vmatprep.subr.mxu0 0.0
    %1379 = vmatpush2.msra.mxu0 0.0
    %1380 = vmatprep.subr.mxu0 0.0
    %1381 = vmatpush2.msra.mxu0 0.0
    %1382 = vmatprep.subr.mxu0 0.0
    %1383 = vmatpush2.msra.mxu0 0.0
    %1384 = vmatprep.subr.mxu0 0.0
    %1385 = vmatpush2.msra.mxu0 0.0
    %1386 = vmatprep.subr.mxu0 0.0
    %1387 = vmatpush2.msra.mxu0 0.0
    %1388 = vmatprep.subr.mxu0 0.0
    %1389 = vmatpush2.msra.mxu0 0.0
    %1390 = vmatprep.subr.mxu0 0.0
    %1391 = vmatpush2.msra.mxu0 0.0
    %1392 = vmatprep.subr.mxu0 0.0
    %1393 = vmatpush2.msra.mxu0 0.0
    %1394 = vmatprep.subr.mxu0 0.0
    %1395 = vmatpush2.msra.mxu0 0.0
    %1396 = vmatprep.mubr.f32.mxu0 0.0
    %1397 = vmatmul.mubr.f32.gmra.mxu0 %v1324
    %v1398 = vpop.f32.mrf.mxu0
    %v1399 = vadd.f32 0.0, %v1398
    %v1400 = vpop.f32.mrf.mxu0
    %v1401 = vadd.f32 0.0, %v1400
    %1402 = vdwg.mxu0
    %1403 = vmatprep.subr.mxu0 %v441
    %1404 = vmatpush1.msra.mxu0 %v440
    %1405 = vmatprep.subr.mxu0 %v437
    %1406 = vmatpush1.msra.mxu0 %v436
    %1407 = vmatprep.subr.mxu0 %v433
    %1408 = vmatpush1.msra.mxu0 %v432
    %1409 = vmatprep.subr.mxu0 %v429
    %1410 = vmatpush1.msra.mxu0 %v428
    %1411 = vmatprep.subr.mxu0 %v425
    %1412 = vmatpush1.msra.mxu0 %v424
    %1413 = vmatprep.subr.mxu0 %v421
    %1414 = vmatpush1.msra.mxu0 %v420
    %1415 = vmatprep.subr.mxu0 %v417
    %1416 = vmatpush1.msra.mxu0 %v416
    %1417 = vmatprep.subr.mxu0 %v413
    %1418 = vmatpush1.msra.mxu0 %v412
    %1419 = vmatprep.subr.mxu0 %v409
    %1420 = vmatpush1.msra.mxu0 %v408
    %1421 = vmatprep.subr.mxu0 %v405
    %1422 = vmatpush1.msra.mxu0 %v404
    %1423 = vmatprep.subr.mxu0 %v401
    %1424 = vmatpush1.msra.mxu0 %v400
    %1425 = vmatprep.subr.mxu0 %v397
    %1426 = vmatpush1.msra.mxu0 %v396
    %1427 = vmatprep.subr.mxu0 %v393
    %1428 = vmatpush1.msra.mxu0 %v392
    %1429 = vmatprep.subr.mxu0 %v389
    %1430 = vmatpush1.msra.mxu0 %v388
    %1431 = vmatprep.subr.mxu0 %v385
    %1432 = vmatpush1.msra.mxu0 %v384
    %1433 = vmatprep.subr.mxu0 %v381
    %1434 = vmatpush1.msra.mxu0 %v380
    %1435 = vmatprep.subr.mxu0 0.0
    %1436 = vmatpush2.msra.mxu0 0.0
    %1437 = vmatprep.subr.mxu0 0.0
    %1438 = vmatpush2.msra.mxu0 0.0
    %1439 = vmatprep.subr.mxu0 0.0
    %1440 = vmatpush2.msra.mxu0 0.0
    %1441 = vmatprep.subr.mxu0 0.0
    %1442 = vmatpush2.msra.mxu0 0.0
    %1443 = vmatprep.subr.mxu0 0.0
    %1444 = vmatpush2.msra.mxu0 0.0
    %1445 = vmatprep.subr.mxu0 0.0
    %1446 = vmatpush2.msra.mxu0 0.0
    %1447 = vmatprep.subr.mxu0 0.0
    %1448 = vmatpush2.msra.mxu0 0.0
    %1449 = vmatprep.subr.mxu0 0.0
    %1450 = vmatpush2.msra.mxu0 0.0
    %1451 = vmatprep.subr.mxu0 0.0
    %1452 = vmatpush2.msra.mxu0 0.0
    %1453 = vmatprep.subr.mxu0 0.0
    %1454 = vmatpush2.msra.mxu0 0.0
    %1455 = vmatprep.subr.mxu0 0.0
    %1456 = vmatpush2.msra.mxu0 0.0
    %1457 = vmatprep.subr.mxu0 0.0
    %1458 = vmatpush2.msra.mxu0 0.0
    %1459 = vmatprep.subr.mxu0 0.0
    %1460 = vmatpush2.msra.mxu0 0.0
    %1461 = vmatprep.subr.mxu0 0.0
    %1462 = vmatpush2.msra.mxu0 0.0
    %1463 = vmatprep.subr.mxu0 0.0
    %1464 = vmatpush2.msra.mxu0 0.0
    %1465 = vmatprep.subr.mxu0 0.0
    %1466 = vmatpush2.msra.mxu0 0.0
    %1467 = vmatprep.mubr.f32.mxu0 0.0
    %1468 = vmatmul.mubr.f32.gmra.mxu0 %v1324
    %v1469 = vpop.f32.mrf.mxu0
    %v1470 = vadd.f32 0.0, %v1469
    %v1471 = vpop.f32.mrf.mxu0
    %v1472 = vadd.f32 0.0, %v1471
    %1473 = vdwg.mxu0
    %v1474 = vadd.f32 %v1328, %v1399
    %v1475 = vadd.f32 %v1329, %v1401
    %v1476 = vadd.f32 %v1330, %v1470
    %v1477 = vadd.f32 %v1331, %v1472
    %v1478 = vxor.u32 %v1474, 2147483648
    %v1479 = vmul.f32 %v1478, 1.442695
    %v1480 = vpow.pop %v1479
    %v1481 = vadd.f32 %v1480, 1.0
    %v1482 = vrcp.pop %v1481
    %v1483 = vmul.f32 1.0, %v1482
    %v1484 = vxor.u32 %v1475, 2147483648
    %v1485 = vmul.f32 %v1484, 1.442695
    %v1486 = vpow.pop %v1485
    %v1487 = vadd.f32 %v1486, 1.0
    %v1488 = vrcp.pop %v1487
    %v1489 = vmul.f32 1.0, %v1488
    %v1490 = vtanh.pop %v1476
    %v1491 = vxor.u32 %v1477, 2147483648
    %v1492 = vmul.f32 %v1491, 1.442695
    %v1493 = vpow.pop %v1492
    %v1494 = vadd.f32 %v1493, 1.0
    %v1495 = vrcp.pop %v1494
    %v1496 = vmul.f32 1.0, %v1495
    %v1497 = vmul.f32 %v1322, %v1483
    %v1498 = vmul.f32 %v1489, %v1490
    %v1499 = vadd.f32 %v1497, %v1498
    %v1500 = vtanh.pop %v1499
    %v1501 = vmul.f32 %v1496, %v1500
    %s1502 = scalar_lea.vmem [#allocation8], 40
    %1503 = vst [vmem:[%s1502] sm:$0xff] %v1501
    %s1504 = scalar_lea.vmem [#allocation2], 192
    %v1505 = vld [vmem:[%s1504] sm:$0xff]
    %v1506 = vld [vmem:[%s1504 + $0x8] sm:$0xff]
    %v1507 = vld [vmem:[%s1504 + $0x10] sm:$0xff]
    %v1508 = vld [vmem:[%s1504 + $0x18] sm:$0xff]
    %1509 = vmatprep.subr.mxu0 %v439
    %1510 = vmatpush1.msra.mxu0 %v438
    %1511 = vmatprep.subr.mxu0 %v435
    %1512 = vmatpush1.msra.mxu0 %v434
    %1513 = vmatprep.subr.mxu0 %v431
    %1514 = vmatpush1.msra.mxu0 %v430
    %1515 = vmatprep.subr.mxu0 %v427
    %1516 = vmatpush1.msra.mxu0 %v426
    %1517 = vmatprep.subr.mxu0 %v423
    %1518 = vmatpush1.msra.mxu0 %v422
    %1519 = vmatprep.subr.mxu0 %v419
    %1520 = vmatpush1.msra.mxu0 %v418
    %1521 = vmatprep.subr.mxu0 %v415
    %1522 = vmatpush1.msra.mxu0 %v414
    %1523 = vmatprep.subr.mxu0 %v411
    %1524 = vmatpush1.msra.mxu0 %v410
    %1525 = vmatprep.subr.mxu0 %v407
    %1526 = vmatpush1.msra.mxu0 %v406
    %1527 = vmatprep.subr.mxu0 %v403
    %1528 = vmatpush1.msra.mxu0 %v402
    %1529 = vmatprep.subr.mxu0 %v399
    %1530 = vmatpush1.msra.mxu0 %v398
    %1531 = vmatprep.subr.mxu0 %v395
    %1532 = vmatpush1.msra.mxu0 %v394
    %1533 = vmatprep.subr.mxu0 %v391
    %1534 = vmatpush1.msra.mxu0 %v390
    %1535 = vmatprep.subr.mxu0 %v387
    %1536 = vmatpush1.msra.mxu0 %v386
    %1537 = vmatprep.subr.mxu0 %v383
    %1538 = vmatpush1.msra.mxu0 %v382
    %1539 = vmatprep.subr.mxu0 %v379
    %1540 = vmatpush1.msra.mxu0 %v378
    %1541 = vmatprep.subr.mxu0 0.0
    %1542 = vmatpush2.msra.mxu0 0.0
    %1543 = vmatprep.subr.mxu0 0.0
    %1544 = vmatpush2.msra.mxu0 0.0
    %1545 = vmatprep.subr.mxu0 0.0
    %1546 = vmatpush2.msra.mxu0 0.0
    %1547 = vmatprep.subr.mxu0 0.0
    %1548 = vmatpush2.msra.mxu0 0.0
    %1549 = vmatprep.subr.mxu0 0.0
    %1550 = vmatpush2.msra.mxu0 0.0
    %1551 = vmatprep.subr.mxu0 0.0
    %1552 = vmatpush2.msra.mxu0 0.0
    %1553 = vmatprep.subr.mxu0 0.0
    %1554 = vmatpush2.msra.mxu0 0.0
    %1555 = vmatprep.subr.mxu0 0.0
    %1556 = vmatpush2.msra.mxu0 0.0
    %1557 = vmatprep.subr.mxu0 0.0
    %1558 = vmatpush2.msra.mxu0 0.0
    %1559 = vmatprep.subr.mxu0 0.0
    %1560 = vmatpush2.msra.mxu0 0.0
    %1561 = vmatprep.subr.mxu0 0.0
    %1562 = vmatpush2.msra.mxu0 0.0
    %1563 = vmatprep.subr.mxu0 0.0
    %1564 = vmatpush2.msra.mxu0 0.0
    %1565 = vmatprep.subr.mxu0 0.0
    %1566 = vmatpush2.msra.mxu0 0.0
    %1567 = vmatprep.subr.mxu0 0.0
    %1568 = vmatpush2.msra.mxu0 0.0
    %1569 = vmatprep.subr.mxu0 0.0
    %1570 = vmatpush2.msra.mxu0 0.0
    %1571 = vmatprep.subr.mxu0 0.0
    %1572 = vmatpush2.msra.mxu0 0.0
    %1573 = vmatprep.mubr.f32.mxu0 0.0
    %1574 = vmatmul.mubr.f32.gmra.mxu0 %v1501
    %v1575 = vpop.f32.mrf.mxu0
    %v1576 = vadd.f32 0.0, %v1575
    %v1577 = vpop.f32.mrf.mxu0
    %v1578 = vadd.f32 0.0, %v1577
    %1579 = vdwg.mxu0
    %1580 = vmatprep.subr.mxu0 %v441
    %1581 = vmatpush1.msra.mxu0 %v440
    %1582 = vmatprep.subr.mxu0 %v437
    %1583 = vmatpush1.msra.mxu0 %v436
    %1584 = vmatprep.subr.mxu0 %v433
    %1585 = vmatpush1.msra.mxu0 %v432
    %1586 = vmatprep.subr.mxu0 %v429
    %1587 = vmatpush1.msra.mxu0 %v428
    %1588 = vmatprep.subr.mxu0 %v425
    %1589 = vmatpush1.msra.mxu0 %v424
    %1590 = vmatprep.subr.mxu0 %v421
    %1591 = vmatpush1.msra.mxu0 %v420
    %1592 = vmatprep.subr.mxu0 %v417
    %1593 = vmatpush1.msra.mxu0 %v416
    %1594 = vmatprep.subr.mxu0 %v413
    %1595 = vmatpush1.msra.mxu0 %v412
    %1596 = vmatprep.subr.mxu0 %v409
    %1597 = vmatpush1.msra.mxu0 %v408
    %1598 = vmatprep.subr.mxu0 %v405
    %1599 = vmatpush1.msra.mxu0 %v404
    %1600 = vmatprep.subr.mxu0 %v401
    %1601 = vmatpush1.msra.mxu0 %v400
    %1602 = vmatprep.subr.mxu0 %v397
    %1603 = vmatpush1.msra.mxu0 %v396
    %1604 = vmatprep.subr.mxu0 %v393
    %1605 = vmatpush1.msra.mxu0 %v392
    %1606 = vmatprep.subr.mxu0 %v389
    %1607 = vmatpush1.msra.mxu0 %v388
    %1608 = vmatprep.subr.mxu0 %v385
    %1609 = vmatpush1.msra.mxu0 %v384
    %1610 = vmatprep.subr.mxu0 %v381
    %1611 = vmatpush1.msra.mxu0 %v380
    %1612 = vmatprep.subr.mxu0 0.0
    %1613 = vmatpush2.msra.mxu0 0.0
    %1614 = vmatprep.subr.mxu0 0.0
    %1615 = vmatpush2.msra.mxu0 0.0
    %1616 = vmatprep.subr.mxu0 0.0
    %1617 = vmatpush2.msra.mxu0 0.0
    %1618 = vmatprep.subr.mxu0 0.0
    %1619 = vmatpush2.msra.mxu0 0.0
    %1620 = vmatprep.subr.mxu0 0.0
    %1621 = vmatpush2.msra.mxu0 0.0
    %1622 = vmatprep.subr.mxu0 0.0
    %1623 = vmatpush2.msra.mxu0 0.0
    %1624 = vmatprep.subr.mxu0 0.0
    %1625 = vmatpush2.msra.mxu0 0.0
    %1626 = vmatprep.subr.mxu0 0.0
    %1627 = vmatpush2.msra.mxu0 0.0
    %1628 = vmatprep.subr.mxu0 0.0
    %1629 = vmatpush2.msra.mxu0 0.0
    %1630 = vmatprep.subr.mxu0 0.0
    %1631 = vmatpush2.msra.mxu0 0.0
    %1632 = vmatprep.subr.mxu0 0.0
    %1633 = vmatpush2.msra.mxu0 0.0
    %1634 = vmatprep.subr.mxu0 0.0
    %1635 = vmatpush2.msra.mxu0 0.0
    %1636 = vmatprep.subr.mxu0 0.0
    %1637 = vmatpush2.msra.mxu0 0.0
    %1638 = vmatprep.subr.mxu0 0.0
    %1639 = vmatpush2.msra.mxu0 0.0
    %1640 = vmatprep.subr.mxu0 0.0
    %1641 = vmatpush2.msra.mxu0 0.0
    %1642 = vmatprep.subr.mxu0 0.0
    %1643 = vmatpush2.msra.mxu0 0.0
    %1644 = vmatprep.mubr.f32.mxu0 0.0
    %1645 = vmatmul.mubr.f32.gmra.mxu0 %v1501
    %v1646 = vpop.f32.mrf.mxu0
    %v1647 = vadd.f32 0.0, %v1646
    %v1648 = vpop.f32.mrf.mxu0
    %v1649 = vadd.f32 0.0, %v1648
    %1650 = vdwg.mxu0
    %v1651 = vadd.f32 %v1505, %v1576
    %v1652 = vadd.f32 %v1506, %v1578
    %v1653 = vadd.f32 %v1507, %v1647
    %v1654 = vadd.f32 %v1508, %v1649
    %v1655 = vxor.u32 %v1651, 2147483648
    %v1656 = vmul.f32 %v1655, 1.442695
    %v1657 = vpow.pop %v1656
    %v1658 = vadd.f32 %v1657, 1.0
    %v1659 = vrcp.pop %v1658
    %v1660 = vmul.f32 1.0, %v1659
    %v1661 = vxor.u32 %v1652, 2147483648
    %v1662 = vmul.f32 %v1661, 1.442695
    %v1663 = vpow.pop %v1662
    %v1664 = vadd.f32 %v1663, 1.0
    %v1665 = vrcp.pop %v1664
    %v1666 = vmul.f32 1.0, %v1665
    %v1667 = vtanh.pop %v1653
    %v1668 = vxor.u32 %v1654, 2147483648
    %v1669 = vmul.f32 %v1668, 1.442695
    %v1670 = vpow.pop %v1669
    %v1671 = vadd.f32 %v1670, 1.0
    %v1672 = vrcp.pop %v1671
    %v1673 = vmul.f32 1.0, %v1672
    %v1674 = vmul.f32 %v1499, %v1660
    %v1675 = vmul.f32 %v1666, %v1667
    %v1676 = vadd.f32 %v1674, %v1675
    %v1677 = vtanh.pop %v1676
    %v1678 = vmul.f32 %v1673, %v1677
    %s1679 = scalar_lea.vmem [#allocation8], 48
    %1680 = vst [vmem:[%s1679] sm:$0xff] %v1678
    %s1681 = scalar_lea.vmem [#allocation2], 224
    %v1682 = vld [vmem:[%s1681] sm:$0xff]
    %v1683 = vld [vmem:[%s1681 + $0x8] sm:$0xff]
    %v1684 = vld [vmem:[%s1681 + $0x10] sm:$0xff]
    %v1685 = vld [vmem:[%s1681 + $0x18] sm:$0xff]
    %1686 = vmatprep.subr.mxu0 %v439
    %1687 = vmatpush1.msra.mxu0 %v438
    %1688 = vmatprep.subr.mxu0 %v435
    %1689 = vmatpush1.msra.mxu0 %v434
    %1690 = vmatprep.subr.mxu0 %v431
    %1691 = vmatpush1.msra.mxu0 %v430
    %1692 = vmatprep.subr.mxu0 %v427
    %1693 = vmatpush1.msra.mxu0 %v426
    %1694 = vmatprep.subr.mxu0 %v423
    %1695 = vmatpush1.msra.mxu0 %v422
    %1696 = vmatprep.subr.mxu0 %v419
    %1697 = vmatpush1.msra.mxu0 %v418
    %1698 = vmatprep.subr.mxu0 %v415
    %1699 = vmatpush1.msra.mxu0 %v414
    %1700 = vmatprep.subr.mxu0 %v411
    %1701 = vmatpush1.msra.mxu0 %v410
    %1702 = vmatprep.subr.mxu0 %v407
    %1703 = vmatpush1.msra.mxu0 %v406
    %1704 = vmatprep.subr.mxu0 %v403
    %1705 = vmatpush1.msra.mxu0 %v402
    %1706 = vmatprep.subr.mxu0 %v399
    %1707 = vmatpush1.msra.mxu0 %v398
    %1708 = vmatprep.subr.mxu0 %v395
    %1709 = vmatpush1.msra.mxu0 %v394
    %1710 = vmatprep.subr.mxu0 %v391
    %1711 = vmatpush1.msra.mxu0 %v390
    %1712 = vmatprep.subr.mxu0 %v387
    %1713 = vmatpush1.msra.mxu0 %v386
    %1714 = vmatprep.subr.mxu0 %v383
    %1715 = vmatpush1.msra.mxu0 %v382
    %1716 = vmatprep.subr.mxu0 %v379
    %1717 = vmatpush1.msra.mxu0 %v378
    %1718 = vmatprep.subr.mxu0 0.0
    %1719 = vmatpush2.msra.mxu0 0.0
    %1720 = vmatprep.subr.mxu0 0.0
    %1721 = vmatpush2.msra.mxu0 0.0
    %1722 = vmatprep.subr.mxu0 0.0
    %1723 = vmatpush2.msra.mxu0 0.0
    %1724 = vmatprep.subr.mxu0 0.0
    %1725 = vmatpush2.msra.mxu0 0.0
    %1726 = vmatprep.subr.mxu0 0.0
    %1727 = vmatpush2.msra.mxu0 0.0
    %1728 = vmatprep.subr.mxu0 0.0
    %1729 = vmatpush2.msra.mxu0 0.0
    %1730 = vmatprep.subr.mxu0 0.0
    %1731 = vmatpush2.msra.mxu0 0.0
    %1732 = vmatprep.subr.mxu0 0.0
    %1733 = vmatpush2.msra.mxu0 0.0
    %1734 = vmatprep.subr.mxu0 0.0
    %1735 = vmatpush2.msra.mxu0 0.0
    %1736 = vmatprep.subr.mxu0 0.0
    %1737 = vmatpush2.msra.mxu0 0.0
    %1738 = vmatprep.subr.mxu0 0.0
    %1739 = vmatpush2.msra.mxu0 0.0
    %1740 = vmatprep.subr.mxu0 0.0
    %1741 = vmatpush2.msra.mxu0 0.0
    %1742 = vmatprep.subr.mxu0 0.0
    %1743 = vmatpush2.msra.mxu0 0.0
    %1744 = vmatprep.subr.mxu0 0.0
    %1745 = vmatpush2.msra.mxu0 0.0
    %1746 = vmatprep.subr.mxu0 0.0
    %1747 = vmatpush2.msra.mxu0 0.0
    %1748 = vmatprep.subr.mxu0 0.0
    %1749 = vmatpush2.msra.mxu0 0.0
    %1750 = vmatprep.mubr.f32.mxu0 0.0
    %1751 = vmatmul.mubr.f32.gmra.mxu0 %v1678
    %v1752 = vpop.f32.mrf.mxu0
    %v1753 = vadd.f32 0.0, %v1752
    %v1754 = vpop.f32.mrf.mxu0
    %v1755 = vadd.f32 0.0, %v1754
    %1756 = vdwg.mxu0
    %1757 = vmatprep.subr.mxu0 %v441
    %1758 = vmatpush1.msra.mxu0 %v440
    %1759 = vmatprep.subr.mxu0 %v437
    %1760 = vmatpush1.msra.mxu0 %v436
    %1761 = vmatprep.subr.mxu0 %v433
    %1762 = vmatpush1.msra.mxu0 %v432
    %1763 = vmatprep.subr.mxu0 %v429
    %1764 = vmatpush1.msra.mxu0 %v428
    %1765 = vmatprep.subr.mxu0 %v425
    %1766 = vmatpush1.msra.mxu0 %v424
    %1767 = vmatprep.subr.mxu0 %v421
    %1768 = vmatpush1.msra.mxu0 %v420
    %1769 = vmatprep.subr.mxu0 %v417
    %1770 = vmatpush1.msra.mxu0 %v416
    %1771 = vmatprep.subr.mxu0 %v413
    %1772 = vmatpush1.msra.mxu0 %v412
    %1773 = vmatprep.subr.mxu0 %v409
    %1774 = vmatpush1.msra.mxu0 %v408
    %1775 = vmatprep.subr.mxu0 %v405
    %1776 = vmatpush1.msra.mxu0 %v404
    %1777 = vmatprep.subr.mxu0 %v401
    %1778 = vmatpush1.msra.mxu0 %v400
    %1779 = vmatprep.subr.mxu0 %v397
    %1780 = vmatpush1.msra.mxu0 %v396
    %1781 = vmatprep.subr.mxu0 %v393
    %1782 = vmatpush1.msra.mxu0 %v392
    %1783 = vmatprep.subr.mxu0 %v389
    %1784 = vmatpush1.msra.mxu0 %v388
    %1785 = vmatprep.subr.mxu0 %v385
    %1786 = vmatpush1.msra.mxu0 %v384
    %1787 = vmatprep.subr.mxu0 %v381
    %1788 = vmatpush1.msra.mxu0 %v380
    %1789 = vmatprep.subr.mxu0 0.0
    %1790 = vmatpush2.msra.mxu0 0.0
    %1791 = vmatprep.subr.mxu0 0.0
    %1792 = vmatpush2.msra.mxu0 0.0
    %1793 = vmatprep.subr.mxu0 0.0
    %1794 = vmatpush2.msra.mxu0 0.0
    %1795 = vmatprep.subr.mxu0 0.0
    %1796 = vmatpush2.msra.mxu0 0.0
    %1797 = vmatprep.subr.mxu0 0.0
    %1798 = vmatpush2.msra.mxu0 0.0
    %1799 = vmatprep.subr.mxu0 0.0
    %1800 = vmatpush2.msra.mxu0 0.0
    %1801 = vmatprep.subr.mxu0 0.0
    %1802 = vmatpush2.msra.mxu0 0.0
    %1803 = vmatprep.subr.mxu0 0.0
    %1804 = vmatpush2.msra.mxu0 0.0
    %1805 = vmatprep.subr.mxu0 0.0
    %1806 = vmatpush2.msra.mxu0 0.0
    %1807 = vmatprep.subr.mxu0 0.0
    %1808 = vmatpush2.msra.mxu0 0.0
    %1809 = vmatprep.subr.mxu0 0.0
    %1810 = vmatpush2.msra.mxu0 0.0
    %1811 = vmatprep.subr.mxu0 0.0
    %1812 = vmatpush2.msra.mxu0 0.0
    %1813 = vmatprep.subr.mxu0 0.0
    %1814 = vmatpush2.msra.mxu0 0.0
    %1815 = vmatprep.subr.mxu0 0.0
    %1816 = vmatpush2.msra.mxu0 0.0
    %1817 = vmatprep.subr.mxu0 0.0
    %1818 = vmatpush2.msra.mxu0 0.0
    %1819 = vmatprep.subr.mxu0 0.0
    %1820 = vmatpush2.msra.mxu0 0.0
    %1821 = vmatprep.mubr.f32.mxu0 0.0
    %1822 = vmatmul.mubr.f32.gmra.mxu0 %v1678
    %v1823 = vpop.f32.mrf.mxu0
    %v1824 = vadd.f32 0.0, %v1823
    %v1825 = vpop.f32.mrf.mxu0
    %v1826 = vadd.f32 0.0, %v1825
    %1827 = vdwg.mxu0
    %v1828 = vadd.f32 %v1682, %v1753
    %v1829 = vadd.f32 %v1683, %v1755
    %v1830 = vadd.f32 %v1684, %v1824
    %v1831 = vadd.f32 %v1685, %v1826
    %v1832 = vxor.u32 %v1828, 2147483648
    %v1833 = vmul.f32 %v1832, 1.442695
    %v1834 = vpow.pop %v1833
    %v1835 = vadd.f32 %v1834, 1.0
    %v1836 = vrcp.pop %v1835
    %v1837 = vmul.f32 1.0, %v1836
    %v1838 = vxor.u32 %v1829, 2147483648
    %v1839 = vmul.f32 %v1838, 1.442695
    %v1840 = vpow.pop %v1839
    %v1841 = vadd.f32 %v1840, 1.0
    %v1842 = vrcp.pop %v1841
    %v1843 = vmul.f32 1.0, %v1842
    %v1844 = vtanh.pop %v1830
    %v1845 = vxor.u32 %v1831, 2147483648
    %v1846 = vmul.f32 %v1845, 1.442695
    %v1847 = vpow.pop %v1846
    %v1848 = vadd.f32 %v1847, 1.0
    %v1849 = vrcp.pop %v1848
    %v1850 = vmul.f32 1.0, %v1849
    %v1851 = vmul.f32 %v1676, %v1837
    %v1852 = vmul.f32 %v1843, %v1844
    %v1853 = vadd.f32 %v1851, %v1852
    %v1854 = vtanh.pop %v1853
    %v1855 = vmul.f32 %v1850, %v1854
    %s1856 = scalar_lea.vmem [#allocation8], 56
    %1857 = vst [vmem:[%s1856] sm:$0xff] %v1855
    %1858 = vst [vmem:[#allocation3] sm:$0xff] %v1855
    %1859 = vst [vmem:[#allocation4] sm:$0xff] %v1853
    // Predicated region
    $region34: #{tpu_custom_call.1} parent=1 // pred_check
      %p1860 = pneg %p42
    $region35: #{tpu_custom_call.1} parent=1 // pred_check_branch
      %1862 = sbr.rel (%p1860) target = $region37
    $region36: #{tpu_custom_call.1} parent=1 // pred_region
      %1863 = vst [vmem:[#allocation9] sm:$0xff] %v1855
      %1864 = vst [vmem:[#allocation11] sm:$0xff] %v1853
    $region37: #{tpu_custom_call.1} parent=1 // pred_fallthru
      _
    // Predicated region
    $region38: #{tpu_custom_call.1} parent=1 // pred_check
      _
    $region39: #{tpu_custom_call.1} parent=1 // pred_check_branch
      %1866 = sbr.rel (0) target = $region41
    $region40: #{tpu_custom_call.1} parent=1 // pred_region
      %s1868 = ssub.s32 1024, 1024
      %1869 = vsyncadd [#allocation7], %s1868
      %s1870 = sshll.u32 [#allocation8], 4
      %s1871 = int_to_ptr.vmem [resolvable:$true] %s1870
      %1876 = dma.vmem_to_hbm [thread:$0]  %s1871, 1024, %s6, [#allocation7], 128, 128, 8
    $region41: #{tpu_custom_call.1} parent=1 // pred_fallthru
      _
    // Predicated region
    $region42: #{tpu_custom_call.1} parent=1 // pred_check
      _
    $region43: #{tpu_custom_call.1} parent=1 // pred_check_branch
      %1878 = sbr.rel (0) target = $region45
    $region44: #{tpu_custom_call.1} parent=1 // pred_region
      %s1880 = ssub.s32 128, 128
      %1881 = vsyncadd [#allocation10], %s1880
      %s1883 = sshll.u32 [#allocation9], 4
      %s1884 = int_to_ptr.vmem [resolvable:$true] %s1883
      %1886 = dma.vmem_to_hbm [thread:$0]  %s1884, 128, %s7, [#allocation10]
    $region45: #{tpu_custom_call.1} parent=1 // pred_fallthru
      _
    // Predicated region
    $region46: #{tpu_custom_call.1} parent=1 // pred_check
      _
    $region47: #{tpu_custom_call.1} parent=1 // pred_check_branch
      %1888 = sbr.rel (0) target = $region49
    $region48: #{tpu_custom_call.1} parent=1 // pred_region
      %s1890 = ssub.s32 128, 128
      %1891 = vsyncadd [#allocation10], %s1890
      %s1893 = sshll.u32 [#allocation11], 4
      %s1894 = int_to_ptr.vmem [resolvable:$true] %s1893
      %1896 = dma.vmem_to_hbm [thread:$0]  %s1894, 128, %s8, [#allocation10]
    $region49: #{tpu_custom_call.1} parent=1 // pred_fallthru
      _
    // Predicated region
    $region50: #{tpu_custom_call.1} parent=1 // pred_check
      _
    $region51: #{tpu_custom_call.1} parent=1 // pred_check_branch
      %1898 = sbr.rel (0) target = $region53
    $region52: #{tpu_custom_call.1} parent=1 // pred_region
      %1899 = dma.done [#allocation7], 1024
    $region53: #{tpu_custom_call.1} parent=1 // pred_fallthru
      _
    // Predicated region
    $region54: #{tpu_custom_call.1} parent=1 // pred_check
      _
    $region55: #{tpu_custom_call.1} parent=1 // pred_check_branch
      %1901 = sbr.rel (0) target = $region57
    $region56: #{tpu_custom_call.1} parent=1 // pred_region
      %1902 = dma.done [#allocation10], 128
    $region57: #{tpu_custom_call.1} parent=1 // pred_fallthru
      _
    // Predicated region
    $region58: #{tpu_custom_call.1} parent=1 // pred_check
      _
    $region59: #{tpu_custom_call.1} parent=1 // pred_check_branch
      %1904 = sbr.rel (0) target = $region61
    $region60: #{tpu_custom_call.1} parent=1 // pred_region
      %1905 = dma.done [#allocation10], 128
    $region61: #{tpu_custom_call.1} parent=1 // pred_fallthru
      _
    %1906 = vsyncpa [#allocation6], 1
    %1907 = vsyncpa [#allocation7], 1
    %1908 = vsyncpa [#allocation10], 1

</llo_original>
